<compile_context>
chip_gen: v7x
topology: tpu7x:2x2x1
jax: 0.10.0
libtpu: 0.0.40
codegen_flags: <defaults>
</compile_context>

<pallas_src>
import math
import numpy as np
import jax
import jax.numpy as jnp
from jax import lax
from jax.experimental import pallas as pl
from jax.experimental.pallas import tpu as pltpu


# ---------------------------------------------------------------------------
# Static model configuration (synthetic stand-in, mirrors module __init__)
# ---------------------------------------------------------------------------
NC = 4                      # number of classes
NO = NC + 5
ANCHORS = np.array([[12, 16, 19, 36, 40, 28],
                    [36, 75, 76, 55, 72, 146],
                    [142, 110, 192, 243, 459, 401]], np.float32).reshape(3, 3, 2)
NA = ANCHORS.shape[1]
STRIDES = [8.0, 16.0, 32.0]
BACKBONE_CH = [(3, 8), (8, 16), (16, 16), (16, 32), (32, 32)]   # five k3/s2 Conv blocks
DETECT_FEATS = [2, 3, 4]    # backbone layer indices feeding Detect (P3, P4, P5)


# ---------------------------------------------------------------------------
# Parameter construction (dense synthetic weights, deterministic)
# ---------------------------------------------------------------------------
def init_params(key):
    params = {"backbone": [], "det_w": [], "det_b": []}
    for (c1, c2) in BACKBONE_CH:
        key, kw, ks, kb = jax.random.split(key, 4)
        w = jax.random.normal(kw, (3, 3, c1, c2), jnp.float32) * (1.0 / math.sqrt(9 * c1))
        scale = 1.0 + 0.1 * jax.random.normal(ks, (c2,), jnp.float32)   # folded BN gamma/sqrt(var)
        bias = 0.05 * jax.random.normal(kb, (c2,), jnp.float32)         # folded BN beta - mean*scale
        params["backbone"].append({"w": w, "scale": scale, "bias": bias})

    for i, f in enumerate(DETECT_FEATS):
        ci = BACKBONE_CH[f][1]
        key, kw, kb = jax.random.split(key, 3)
        w = jax.random.normal(kw, (ci, NA * NO), jnp.float32) * (1.0 / math.sqrt(ci))
        b = (0.01 * np.asarray(jax.random.normal(kb, (NA * NO,), jnp.float32))).astype(np.float32)
        # Model._initialize_biases
        b2 = b.reshape(NA, NO)
        b2[:, 4] += math.log(8.0 / (640.0 / STRIDES[i]) ** 2)
        b2[:, 5:] += math.log(0.6 / (NC - 0.99))
        params["det_w"].append(w)
        params["det_b"].append(jnp.asarray(b2.reshape(-1)))
    return params


# ---------------------------------------------------------------------------
# Host-side constant folding
# ---------------------------------------------------------------------------
def _conv_consts(Wt, scale, bias, Hin, Win):
    """3x3 stride-2 pad-1 conv on a per-image flattened NHWC slab [Hin, Win*Cin].

    out = sum_ky R_ky @ (f @ Band_ky); Band_cat = hstack(Band_0, Band_1, Band_2) so the
    kernel issues ONE wide bf16 matmul plus three tiny 0/1 row selections.
    """
    Wt = np.asarray(Wt, np.float32)                # [3, 3, Cin, Cout]
    Cin, Cout = Wt.shape[2], Wt.shape[3]
    Hout, Wout = Hin // 2, Win // 2
    N = Wout * Cout

    R = np.zeros((3, Hout, Hin), np.float32)       # per-image row selectors (0/1)
    for ky in range(3):
        for yo in range(Hout):
            yi = 2 * yo + ky - 1
            if 0 <= yi < Hin:
                R[ky, yo, yi] = 1.0

    Band_cat = np.zeros((Win * Cin, 3 * N), np.float32)
    for ky in range(3):
        for xo in range(Wout):
            for kx in range(3):
                xi = 2 * xo + kx - 1
                if 0 <= xi < Win:
                    Band_cat[xi * Cin:(xi + 1) * Cin,
                             ky * N + xo * Cout: ky * N + (xo + 1) * Cout] = Wt[ky, kx]

    srow = np.tile(np.asarray(scale, np.float32), Wout)[None, :]
    brow = np.tile(np.asarray(bias, np.float32), Wout)[None, :]
    return R, Band_cat, srow, brow, Hout, Wout, Cout


def _detect_consts(Wd, bd, anchors_lvl, nx):
    """1x1 detect conv as block-diagonal matmul, column-padded to a multiple of 128."""
    Wd = np.asarray(Wd, np.float32)                # [Cin, NA*NO]
    bd = np.asarray(bd, np.float32)
    Cin = Wd.shape[0]
    blk = NA * NO
    ncols = nx * blk
    cols_pad = ((ncols + 127) // 128) * 128        # lane-dense output width

    D = np.zeros((nx * Cin, cols_pad), np.float32)
    brow = np.zeros((1, cols_pad), np.float32)
    for x in range(nx):
        D[x * Cin:(x + 1) * Cin, x * blk:(x + 1) * blk] = Wd
        brow[0, x * blk:(x + 1) * blk] = bd

    col = np.arange(cols_pad)
    valid = col < ncols
    j = col % blk
    o = (j % NO).astype(np.float32)                # position within one anchor block
    a = j // NO                                    # anchor index
    gx = (col // blk).astype(np.float32)
    anc = np.ones(cols_pad, np.float32)
    sel_w = valid & (o == 2.0)
    sel_h = valid & (o == 3.0)
    anc[sel_w] = anchors_lvl[a[sel_w], 0]
    anc[sel_h] = anchors_lvl[a[sel_h], 1]
    # padding columns: route through the plain-sigmoid branch with neutral tables
    o = np.where(valid, o, 5.0).astype(np.float32)
    gx = np.where(valid, gx, 0.0).astype(np.float32)
    return D, brow, gx[None, :], o[None, :], anc[None, :], ncols, cols_pad


def prepare(params, B, H, W):
    """Precompute all kernel constants (done once, outside the forward)."""
    assert H % 32 == 0 and W % 32 == 0, "5 stride-2 layers need H, W divisible by 32"
    consts, det_cfg, out_shapes = [], [], []
    feat_dims = {}
    h, w = H, W
    for li, layer in enumerate(params["backbone"]):
        R, Band_cat, srow, brow, h, w, c = _conv_consts(
            layer["w"], layer["scale"], layer["bias"], h, w)
        consts += [jnp.asarray(R, jnp.float32),          # tiny exact 0/1 selectors
                   jnp.asarray(Band_cat, jnp.bfloat16),  # folded conv weights (bf16 DMA/VMEM)
                   jnp.asarray(srow, jnp.float32),
                   jnp.asarray(brow, jnp.float32)]
        if li in DETECT_FEATS:
            feat_dims[li] = (h, w, c)

    for i, fidx in enumerate(DETECT_FEATS):
        ny, nx, _ = feat_dims[fidx]
        D, dbrow, gx, orow, anc, ncols, cols_pad = _detect_consts(
            params["det_w"][i], params["det_b"][i], ANCHORS[i], nx)
        consts += [jnp.asarray(D, jnp.bfloat16), jnp.asarray(dbrow, jnp.float32),
                   jnp.asarray(gx, jnp.float32), jnp.asarray(orow, jnp.float32),
                   jnp.asarray(anc, jnp.float32)]
        det_cfg.append({"ny": ny, "nx": nx, "ncols": ncols, "cols_pad": cols_pad,
                        "stride": float(STRIDES[i])})
        out_shapes += [jax.ShapeDtypeStruct((B, ny, cols_pad), jnp.float32)] * 2

    kernel = _make_fused_kernel(len(params["backbone"]), det_cfg, set(DETECT_FEATS))
    return {"consts": consts, "det_cfg": det_cfg, "out_shapes": tuple(out_shapes),
            "kernel": kernel}


# ---------------------------------------------------------------------------
# The single fused Pallas kernel (backbone + detect, everything VMEM-resident)
# ---------------------------------------------------------------------------
def _make_fused_kernel(n_layers, det_cfg, detect_from):
    n_det = len(det_cfg)

    def kernel(*refs):
        idx = 0
        x_ref = refs[idx]; idx += 1
        layer_refs = []
        for _ in range(n_layers):
            layer_refs.append(refs[idx:idx + 4]); idx += 4
        det_refs = []
        for _ in range(n_det):
            det_refs.append(refs[idx:idx + 5]); idx += 5
        out_refs = refs[idx:]                       # raw0, dec0, raw1, dec1, raw2, dec2

        f = x_ref[0]                                # this image's slab [Hin, Win*Cin] f32
        feats = []
        for li, (r_ref, band_ref, s_ref, b_ref) in enumerate(layer_refs):
            n_out = band_ref.shape[1] // 3          # Wout*Cout
            # ONE wide lane-dense bf16 matmul (f32 accumulate)
            u = jnp.dot(f.astype(jnp.bfloat16), band_ref[...],
                        preferred_element_type=jnp.float32)          # [Hin, 3*n_out]
            # three tiny exact 0/1 row selections (f32), summed in f32
            acc = jnp.dot(r_ref[0], u[:, :n_out],
                          preferred_element_type=jnp.float32)
            acc = acc + jnp.dot(r_ref[1], u[:, n_out:2 * n_out],
                                preferred_element_type=jnp.float32)
            acc = acc + jnp.dot(r_ref[2], u[:, 2 * n_out:],
                                preferred_element_type=jnp.float32)
            y = acc * s_ref[...] + b_ref[...]       # folded BN affine (f32)
            f = y * jax.nn.sigmoid(y)               # SiLU (f32 epilogue)
            if li in detect_from:
                feats.append(f)

        for di, ((d_ref, db_ref, gx_ref, o_ref, anc_ref), feat) in enumerate(
                zip(det_refs, feats)):
            stride = det_cfg[di]["stride"]
            # 1x1 conv (column-padded block-diagonal bf16 matmul) + bias
            p = jnp.dot(feat.astype(jnp.bfloat16), d_ref[...],
                        preferred_element_type=jnp.float32) + db_ref[...]
            out_refs[2 * di][0] = p                 # raw map (pre-sigmoid)

            s = jax.nn.sigmoid(p)
            gy = lax.broadcasted_iota(jnp.int32, p.shape, 0).astype(jnp.float32)
            o = jnp.broadcast_to(o_ref[...], p.shape)
            gx = jnp.broadcast_to(gx_ref[...], p.shape)
            anc = jnp.broadcast_to(anc_ref[...], p.shape)
            g = jnp.where(o == 0.0, gx, gy)
            xy = (s * 2.0 - 0.5 + g) * stride
            wh = (s * 2.0) ** 2 * anc
            out_refs[2 * di + 1][0] = jnp.where(o < 2.0, xy,
                                                jnp.where(o < 4.0, wh, s))
    return kernel


def _const_spec(shape):
    nd = len(shape)
    return pl.BlockSpec(shape, lambda b, _nd=nd: (0,) * _nd)


def _batch_spec(shape):
    tail = tuple(shape[1:])
    return pl.BlockSpec((1,) + tail, lambda b, _n=len(tail): (b,) + (0,) * _n)


# ---------------------------------------------------------------------------
# Full forward (Model.forward_once -> Detect eval branch): ONE pallas_call
# ---------------------------------------------------------------------------
def yolov7_forward(x_nchw, prep):
    B, C, H, W = x_nchw.shape
    # NCHW -> per-image flattened NHWC [B, H, W*C]  (layout plumbing only)
    # TODO(synk): accept NHWC directly (or fold this permute into layer 0) to avoid a
    #             standalone image-sized XLA transpose at real resolutions.
    x_flat = jnp.transpose(x_nchw.astype(jnp.float32), (0, 2, 3, 1)).reshape(B, H, W * C)

    inputs = [x_flat] + list(prep["consts"])
    in_specs = [_batch_spec(x_flat.shape)] + [_const_spec(a.shape) for a in prep["consts"]]
    out_specs = tuple(_batch_spec(s.shape) for s in prep["out_shapes"])

    outs = pl.pallas_call(
        prep["kernel"],
        out_shape=prep["out_shapes"],
        grid=(B,),                                  # batch axis: parallel (v7x: 2 TCs)
        in_specs=in_specs,
        out_specs=out_specs,
        compiler_params=pltpu.CompilerParams(dimension_semantics=("parallel",)),
    )(*inputs)

    # back to PyTorch conventions (strip column padding)
    z_list, praw_list = [], []
    for di, dc in enumerate(prep["det_cfg"]):
        ny, nx, ncols = dc["ny"], dc["nx"], dc["ncols"]
        praw = outs[2 * di][:, :, :ncols].reshape(B, ny, nx, NA, NO).transpose(0, 3, 1, 2, 4)
        dec = outs[2 * di + 1][:, :, :ncols].reshape(B, ny, nx, NA, NO).transpose(0, 3, 1, 2, 4)
        praw_list.append(praw)                      # [B, na, ny, nx, no]
        z_list.append(dec.reshape(B, NA * ny * nx, NO))
    # Detect eval return: (torch.cat(z, 1), x)
    return jnp.concatenate(z_list, axis=1), praw_list


# ---------------------------------------------------------------------------
# Pure-NumPy reference with the same bf16 weight/activation quantization points
# ---------------------------------------------------------------------------
def _q_bf16(x):
    return np.asarray(jnp.asarray(np.asarray(x, np.float32), jnp.bfloat16).astype(jnp.float32))


def _np_sigmoid(x):
    return 1.0 / (1.0 + np.exp(-x))


def reference_forward(x_nchw, params):
    x = np.transpose(np.asarray(x_nchw, np.float32), (0, 2, 3, 1))
    feats = []
    for li, layer in enumerate(params["backbone"]):
        Wt = _q_bf16(layer["w"])                    # same quantization as Band_cat (bf16)
        scale = np.asarray(layer["scale"], np.float32)
        bias = np.asarray(layer["bias"], np.float32)
        B, H, W_, C = x.shape
        xq = _q_bf16(x)                             # kernel quantizes layer input once
        xp = np.pad(xq, ((0, 0), (1, 1), (1, 1), (0, 0)))
        Ho, Wo = H // 2, W_ // 2
        acc = np.zeros((B, Ho, Wo, Wt.shape[3]), np.float32)
        for ky in range(3):
            for kx in range(3):
                patch = xp[:, ky:ky + 2 * Ho:2, kx:kx + 2 * Wo:2, :]
                acc += (patch.reshape(-1, C) @ Wt[ky, kx]).reshape(B, Ho, Wo, -1)
        y = acc * scale + bias
        x = y * _np_sigmoid(y)
        if li in DETECT_FEATS:
            feats.append(x)

    z_list, praw_list = [], []
    for i, f in enumerate(feats):
        B, ny, nx, C = f.shape
        Wd = _q_bf16(params["det_w"][i])
        bd = np.asarray(params["det_b"][i], np.float32)
        fq = _q_bf16(f)
        p = (fq.reshape(-1, C) @ Wd + bd).reshape(B, ny, nx, NA, NO).transpose(0, 3, 1, 2, 4)
        praw_list.append(p)
        s = _np_sigmoid(p)
        yv, xv = np.meshgrid(np.arange(ny, dtype=np.float32),
                             np.arange(nx, dtype=np.float32), indexing="ij")
        grid = np.stack((xv, yv), axis=-1)[None, None]          # [1,1,ny,nx,2]
        xy = (s[..., 0:2] * 2.0 - 0.5 + grid) * STRIDES[i]
        wh = (s[..., 2:4] * 2.0) ** 2 * ANCHORS[i].reshape(1, NA, 1, 1, 2)
        yfull = np.concatenate([xy, wh, s[..., 4:]], axis=-1)
        z_list.append(yfull.reshape(B, -1, NO))
    return np.concatenate(z_list, axis=1), praw_list


if __name__ == "__main__":
    key = jax.random.PRNGKey(0)
    kp, kx = jax.random.split(key)
    params = init_params(kp)

    B, C, H, W = 2, 3, 64, 64
    x = jax.random.normal(kx, (B, C, H, W), jnp.float32)

    prep = prepare(params, B, H, W)
    fwd = jax.jit(lambda inp: yolov7_forward(inp, prep))

    preds, raw = fwd(x)
    preds = jax.block_until_ready(preds)
    raw = [jax.block_until_ready(r) for r in raw]

    expected_rows = NA * sum((H // int(s)) * (W // int(s)) for s in STRIDES)
    assert preds.shape == (B, expected_rows, NO), preds.shape
    assert raw[0].shape == (B, NA, H // 8, W // 8, NO), raw[0].shape
    assert bool(jnp.all(jnp.isfinite(preds)))

    # numerical cross-check against a plain NumPy implementation (same bf16 quantization)
    ref_preds, ref_raw = reference_forward(np.asarray(x), params)
    assert np.allclose(np.asarray(preds), ref_preds, rtol=1e-2, atol=1e-2), \
        float(np.max(np.abs(np.asarray(preds) - ref_preds)))
    for r, rr in zip(raw, ref_raw):
        assert np.allclose(np.asarray(r), rr, rtol=1e-2, atol=1e-2)

    print("KERNEL_OK")
</pallas_src>

<mosaic_0001>
module attributes {stable_mosaic.version = 11 : i64} {
  func.func @kernel(%arg0: i32, %arg1: memref<1x64x192xf32, #tpu.memory_space<vmem>>, %arg2: memref<3x32x64xf32, #tpu.memory_space<vmem>>, %arg3: memref<192x768xbf16, #tpu.memory_space<vmem>>, %arg4: memref<1x256xf32, #tpu.memory_space<vmem>>, %arg5: memref<1x256xf32, #tpu.memory_space<vmem>>, %arg6: memref<3x16x32xf32, #tpu.memory_space<vmem>>, %arg7: memref<256x768xbf16, #tpu.memory_space<vmem>>, %arg8: memref<1x256xf32, #tpu.memory_space<vmem>>, %arg9: memref<1x256xf32, #tpu.memory_space<vmem>>, %arg10: memref<3x8x16xf32, #tpu.memory_space<vmem>>, %arg11: memref<256x384xbf16, #tpu.memory_space<vmem>>, %arg12: memref<1x128xf32, #tpu.memory_space<vmem>>, %arg13: memref<1x128xf32, #tpu.memory_space<vmem>>, %arg14: memref<3x4x8xf32, #tpu.memory_space<vmem>>, %arg15: memref<128x384xbf16, #tpu.memory_space<vmem>>, %arg16: memref<1x128xf32, #tpu.memory_space<vmem>>, %arg17: memref<1x128xf32, #tpu.memory_space<vmem>>, %arg18: memref<3x2x4xf32, #tpu.memory_space<vmem>>, %arg19: memref<128x192xbf16, #tpu.memory_space<vmem>>, %arg20: memref<1x64xf32, #tpu.memory_space<vmem>>, %arg21: memref<1x64xf32, #tpu.memory_space<vmem>>, %arg22: memref<128x256xbf16, #tpu.memory_space<vmem>>, %arg23: memref<1x256xf32, #tpu.memory_space<vmem>>, %arg24: memref<1x256xf32, #tpu.memory_space<vmem>>, %arg25: memref<1x256xf32, #tpu.memory_space<vmem>>, %arg26: memref<1x256xf32, #tpu.memory_space<vmem>>, %arg27: memref<128x128xbf16, #tpu.memory_space<vmem>>, %arg28: memref<1x128xf32, #tpu.memory_space<vmem>>, %arg29: memref<1x128xf32, #tpu.memory_space<vmem>>, %arg30: memref<1x128xf32, #tpu.memory_space<vmem>>, %arg31: memref<1x128xf32, #tpu.memory_space<vmem>>, %arg32: memref<64x128xbf16, #tpu.memory_space<vmem>>, %arg33: memref<1x128xf32, #tpu.memory_space<vmem>>, %arg34: memref<1x128xf32, #tpu.memory_space<vmem>>, %arg35: memref<1x128xf32, #tpu.memory_space<vmem>>, %arg36: memref<1x128xf32, #tpu.memory_space<vmem>>, %arg37: memref<1x8x256xf32, #tpu.memory_space<vmem>>, %arg38: memref<1x8x256xf32, #tpu.memory_space<vmem>>, %arg39: memref<1x4x128xf32, #tpu.memory_space<vmem>>, %arg40: memref<1x4x128xf32, #tpu.memory_space<vmem>>, %arg41: memref<1x2x128xf32, #tpu.memory_space<vmem>>, %arg42: memref<1x2x128xf32, #tpu.memory_space<vmem>>) attributes {dimension_semantics = [#tpu.dimension_semantics<parallel>], iteration_bounds = array<i64: 2>, scalar_prefetch = 0 : i64, scratch_operands = 0 : i64, tpu.core_type = #tpu.core_type<tc>, window_params = [{transform_indices = @transform_0, window_bounds = array<i64: 1, 64, 192>}, {pipeline_mode = #tpu.pipeline_mode<synchronous>, transform_indices = @transform_1, window_bounds = array<i64: 3, 32, 64>}, {pipeline_mode = #tpu.pipeline_mode<synchronous>, transform_indices = @transform_2, window_bounds = array<i64: 192, 768>}, {pipeline_mode = #tpu.pipeline_mode<synchronous>, transform_indices = @transform_3, window_bounds = array<i64: 1, 256>}, {pipeline_mode = #tpu.pipeline_mode<synchronous>, transform_indices = @transform_4, window_bounds = array<i64: 1, 256>}, {pipeline_mode = #tpu.pipeline_mode<synchronous>, transform_indices = @transform_5, window_bounds = array<i64: 3, 16, 32>}, {pipeline_mode = #tpu.pipeline_mode<synchronous>, transform_indices = @transform_6, window_bounds = array<i64: 256, 768>}, {pipeline_mode = #tpu.pipeline_mode<synchronous>, transform_indices = @transform_7, window_bounds = array<i64: 1, 256>}, {pipeline_mode = #tpu.pipeline_mode<synchronous>, transform_indices = @transform_8, window_bounds = array<i64: 1, 256>}, {pipeline_mode = #tpu.pipeline_mode<synchronous>, transform_indices = @transform_9, window_bounds = array<i64: 3, 8, 16>}, {pipeline_mode = #tpu.pipeline_mode<synchronous>, transform_indices = @transform_10, window_bounds = array<i64: 256, 384>}, {pipeline_mode = #tpu.pipeline_mode<synchronous>, transform_indices = @transform_11, window_bounds = array<i64: 1, 128>}, {pipeline_mode = #tpu.pipeline_mode<synchronous>, transform_indices = @transform_12, window_bounds = array<i64: 1, 128>}, {pipeline_mode = #tpu.pipeline_mode<synchronous>, transform_indices = @transform_13, window_bounds = array<i64: 3, 4, 8>}, {pipeline_mode = #tpu.pipeline_mode<synchronous>, transform_indices = @transform_14, window_bounds = array<i64: 128, 384>}, {pipeline_mode = #tpu.pipeline_mode<synchronous>, transform_indices = @transform_15, window_bounds = array<i64: 1, 128>}, {pipeline_mode = #tpu.pipeline_mode<synchronous>, transform_indices = @transform_16, window_bounds = array<i64: 1, 128>}, {pipeline_mode = #tpu.pipeline_mode<synchronous>, transform_indices = @transform_17, window_bounds = array<i64: 3, 2, 4>}, {pipeline_mode = #tpu.pipeline_mode<synchronous>, transform_indices = @transform_18, window_bounds = array<i64: 128, 192>}, {pipeline_mode = #tpu.pipeline_mode<synchronous>, transform_indices = @transform_19, window_bounds = array<i64: 1, 64>}, {pipeline_mode = #tpu.pipeline_mode<synchronous>, transform_indices = @transform_20, window_bounds = array<i64: 1, 64>}, {pipeline_mode = #tpu.pipeline_mode<synchronous>, transform_indices = @transform_21, window_bounds = array<i64: 128, 256>}, {pipeline_mode = #tpu.pipeline_mode<synchronous>, transform_indices = @transform_22, window_bounds = array<i64: 1, 256>}, {pipeline_mode = #tpu.pipeline_mode<synchronous>, transform_indices = @transform_23, window_bounds = array<i64: 1, 256>}, {pipeline_mode = #tpu.pipeline_mode<synchronous>, transform_indices = @transform_24, window_bounds = array<i64: 1, 256>}, {pipeline_mode = #tpu.pipeline_mode<synchronous>, transform_indices = @transform_25, window_bounds = array<i64: 1, 256>}, {pipeline_mode = #tpu.pipeline_mode<synchronous>, transform_indices = @transform_26, window_bounds = array<i64: 128, 128>}, {pipeline_mode = #tpu.pipeline_mode<synchronous>, transform_indices = @transform_27, window_bounds = array<i64: 1, 128>}, {pipeline_mode = #tpu.pipeline_mode<synchronous>, transform_indices = @transform_28, window_bounds = array<i64: 1, 128>}, {pipeline_mode = #tpu.pipeline_mode<synchronous>, transform_indices = @transform_29, window_bounds = array<i64: 1, 128>}, {pipeline_mode = #tpu.pipeline_mode<synchronous>, transform_indices = @transform_30, window_bounds = array<i64: 1, 128>}, {pipeline_mode = #tpu.pipeline_mode<synchronous>, transform_indices = @transform_31, window_bounds = array<i64: 64, 128>}, {pipeline_mode = #tpu.pipeline_mode<synchronous>, transform_indices = @transform_32, window_bounds = array<i64: 1, 128>}, {pipeline_mode = #tpu.pipeline_mode<synchronous>, transform_indices = @transform_33, window_bounds = array<i64: 1, 128>}, {pipeline_mode = #tpu.pipeline_mode<synchronous>, transform_indices = @transform_34, window_bounds = array<i64: 1, 128>}, {pipeline_mode = #tpu.pipeline_mode<synchronous>, transform_indices = @transform_35, window_bounds = array<i64: 1, 128>}, {transform_indices = @transform_36, window_bounds = array<i64: 1, 8, 256>}, {transform_indices = @transform_37, window_bounds = array<i64: 1, 8, 256>}, {transform_indices = @transform_38, window_bounds = array<i64: 1, 4, 128>}, {transform_indices = @transform_39, window_bounds = array<i64: 1, 4, 128>}, {transform_indices = @transform_40, window_bounds = array<i64: 1, 2, 128>}, {transform_indices = @transform_41, window_bounds = array<i64: 1, 2, 128>}]} {
    %c0 = arith.constant 0 : index
    %c0_0 = arith.constant 0 : index
    %c0_1 = arith.constant 0 : index
    %0 = vector.load %arg1[%c0, %c0_0, %c0_1] : memref<1x64x192xf32, #tpu.memory_space<vmem>>, vector<1x64x192xf32>
    %1 = vector.shape_cast %0 : vector<1x64x192xf32> to vector<64x192xf32>
    %2 = arith.truncf %1 : vector<64x192xf32> to vector<64x192xbf16>
    %c0_2 = arith.constant 0 : index
    %c0_3 = arith.constant 0 : index
    %3 = vector.load %arg3[%c0_2, %c0_3] : memref<192x768xbf16, #tpu.memory_space<vmem>>, vector<192x768xbf16>
    %cst = arith.constant dense<0.000000e+00> : vector<64x768xf32>
    %4 = tpu.matmul %2, %3, %cst {dimension_numbers = #tpu.dot_dimension_numbers<[1], [0], [0], [1], [0, 0, 1, 1], [], []>} : vector<64x192xbf16>, vector<192x768xbf16>, vector<64x768xf32> -> vector<64x768xf32>
    %c0_4 = arith.constant 0 : index
    %c0_5 = arith.constant 0 : index
    %c0_6 = arith.constant 0 : index
    %5 = vector.load %arg2[%c0_4, %c0_5, %c0_6] : memref<3x32x64xf32, #tpu.memory_space<vmem>>, vector<1x32x64xf32>
    %6 = vector.shape_cast %5 : vector<1x32x64xf32> to vector<32x64xf32>
    %7 = vector.extract_strided_slice %4 {offsets = [0, 0], sizes = [64, 256], strides = [1, 1]} : vector<64x768xf32> to vector<64x256xf32>
    %cst_7 = arith.constant dense<0.000000e+00> : vector<32x256xf32>
    %8 = tpu.matmul %6, %7, %cst_7 {dimension_numbers = #tpu.dot_dimension_numbers<[1], [0], [0], [1], [0, 0, 1, 1], [], []>} : vector<32x64xf32>, vector<64x256xf32>, vector<32x256xf32> -> vector<32x256xf32>
    %c1 = arith.constant 1 : index
    %c0_8 = arith.constant 0 : index
    %c0_9 = arith.constant 0 : index
    %9 = vector.load %arg2[%c1, %c0_8, %c0_9] : memref<3x32x64xf32, #tpu.memory_space<vmem>>, vector<1x32x64xf32>
    %10 = vector.shape_cast %9 : vector<1x32x64xf32> to vector<32x64xf32>
    %11 = vector.extract_strided_slice %4 {offsets = [0, 256], sizes = [64, 256], strides = [1, 1]} : vector<64x768xf32> to vector<64x256xf32>
    %cst_10 = arith.constant dense<0.000000e+00> : vector<32x256xf32>
    %12 = tpu.matmul %10, %11, %cst_10 {dimension_numbers = #tpu.dot_dimension_numbers<[1], [0], [0], [1], [0, 0, 1, 1], [], []>} : vector<32x64xf32>, vector<64x256xf32>, vector<32x256xf32> -> vector<32x256xf32>
    %13 = arith.addf %8, %12 : vector<32x256xf32>
    %c2 = arith.constant 2 : index
    %c0_11 = arith.constant 0 : index
    %c0_12 = arith.constant 0 : index
    %14 = vector.load %arg2[%c2, %c0_11, %c0_12] : memref<3x32x64xf32, #tpu.memory_space<vmem>>, vector<1x32x64xf32>
    %15 = vector.shape_cast %14 : vector<1x32x64xf32> to vector<32x64xf32>
    %16 = vector.extract_strided_slice %4 {offsets = [0, 512], sizes = [64, 256], strides = [1, 1]} : vector<64x768xf32> to vector<64x256xf32>
    %cst_13 = arith.constant dense<0.000000e+00> : vector<32x256xf32>
    %17 = tpu.matmul %15, %16, %cst_13 {dimension_numbers = #tpu.dot_dimension_numbers<[1], [0], [0], [1], [0, 0, 1, 1], [], []>} : vector<32x64xf32>, vector<64x256xf32>, vector<32x256xf32> -> vector<32x256xf32>
    %18 = arith.addf %13, %17 : vector<32x256xf32>
    %c0_14 = arith.constant 0 : index
    %c0_15 = arith.constant 0 : index
    %19 = vector.load %arg4[%c0_14, %c0_15] : memref<1x256xf32, #tpu.memory_space<vmem>>, vector<1x256xf32>
    %20 = vector.broadcast %19 : vector<1x256xf32> to vector<32x256xf32>
    %21 = arith.mulf %18, %20 : vector<32x256xf32>
    %c0_16 = arith.constant 0 : index
    %c0_17 = arith.constant 0 : index
    %22 = vector.load %arg5[%c0_16, %c0_17] : memref<1x256xf32, #tpu.memory_space<vmem>>, vector<1x256xf32>
    %23 = vector.broadcast %22 : vector<1x256xf32> to vector<32x256xf32>
    %24 = arith.addf %21, %23 : vector<32x256xf32>
    %25 = arith.negf %24 : vector<32x256xf32>
    %26 = math.exp %25 : vector<32x256xf32>
    %cst_18 = arith.constant 1.000000e+00 : f32
    %27 = vector.broadcast %cst_18 : f32 to vector<32x256xf32>
    %28 = arith.addf %27, %26 : vector<32x256xf32>
    %29 = arith.divf %27, %28 : vector<32x256xf32>
    %30 = arith.mulf %24, %29 : vector<32x256xf32>
    %31 = arith.truncf %30 : vector<32x256xf32> to vector<32x256xbf16>
    %c0_19 = arith.constant 0 : index
    %c0_20 = arith.constant 0 : index
    %32 = vector.load %arg7[%c0_19, %c0_20] : memref<256x768xbf16, #tpu.memory_space<vmem>>, vector<256x768xbf16>
    %cst_21 = arith.constant dense<0.000000e+00> : vector<32x768xf32>
    %33 = tpu.matmul %31, %32, %cst_21 {dimension_numbers = #tpu.dot_dimension_numbers<[1], [0], [0], [1], [0, 0, 1, 1], [], []>} : vector<32x256xbf16>, vector<256x768xbf16>, vector<32x768xf32> -> vector<32x768xf32>
    %c0_22 = arith.constant 0 : index
    %c0_23 = arith.constant 0 : index
    %c0_24 = arith.constant 0 : index
    %34 = vector.load %arg6[%c0_22, %c0_23, %c0_24] : memref<3x16x32xf32, #tpu.memory_space<vmem>>, vector<1x16x32xf32>
    %35 = vector.shape_cast %34 : vector<1x16x32xf32> to vector<16x32xf32>
    %36 = vector.extract_strided_slice %33 {offsets = [0, 0], sizes = [32, 256], strides = [1, 1]} : vector<32x768xf32> to vector<32x256xf32>
    %cst_25 = arith.constant dense<0.000000e+00> : vector<16x256xf32>
    %37 = tpu.matmul %35, %36, %cst_25 {dimension_numbers = #tpu.dot_dimension_numbers<[1], [0], [0], [1], [0, 0, 1, 1], [], []>} : vector<16x32xf32>, vector<32x256xf32>, vector<16x256xf32> -> vector<16x256xf32>
    %c1_26 = arith.constant 1 : index
    %c0_27 = arith.constant 0 : index
    %c0_28 = arith.constant 0 : index
    %38 = vector.load %arg6[%c1_26, %c0_27, %c0_28] : memref<3x16x32xf32, #tpu.memory_space<vmem>>, vector<1x16x32xf32>
    %39 = vector.shape_cast %38 : vector<1x16x32xf32> to vector<16x32xf32>
    %40 = vector.extract_strided_slice %33 {offsets = [0, 256], sizes = [32, 256], strides = [1, 1]} : vector<32x768xf32> to vector<32x256xf32>
    %cst_29 = arith.constant dense<0.000000e+00> : vector<16x256xf32>
    %41 = tpu.matmul %39, %40, %cst_29 {dimension_numbers = #tpu.dot_dimension_numbers<[1], [0], [0], [1], [0, 0, 1, 1], [], []>} : vector<16x32xf32>, vector<32x256xf32>, vector<16x256xf32> -> vector<16x256xf32>
    %42 = arith.addf %37, %41 : vector<16x256xf32>
    %c2_30 = arith.constant 2 : index
    %c0_31 = arith.constant 0 : index
    %c0_32 = arith.constant 0 : index
    %43 = vector.load %arg6[%c2_30, %c0_31, %c0_32] : memref<3x16x32xf32, #tpu.memory_space<vmem>>, vector<1x16x32xf32>
    %44 = vector.shape_cast %43 : vector<1x16x32xf32> to vector<16x32xf32>
    %45 = vector.extract_strided_slice %33 {offsets = [0, 512], sizes = [32, 256], strides = [1, 1]} : vector<32x768xf32> to vector<32x256xf32>
    %cst_33 = arith.constant dense<0.000000e+00> : vector<16x256xf32>
    %46 = tpu.matmul %44, %45, %cst_33 {dimension_numbers = #tpu.dot_dimension_numbers<[1], [0], [0], [1], [0, 0, 1, 1], [], []>} : vector<16x32xf32>, vector<32x256xf32>, vector<16x256xf32> -> vector<16x256xf32>
    %47 = arith.addf %42, %46 : vector<16x256xf32>
    %c0_34 = arith.constant 0 : index
    %c0_35 = arith.constant 0 : index
    %48 = vector.load %arg8[%c0_34, %c0_35] : memref<1x256xf32, #tpu.memory_space<vmem>>, vector<1x256xf32>
    %49 = vector.broadcast %48 : vector<1x256xf32> to vector<16x256xf32>
    %50 = arith.mulf %47, %49 : vector<16x256xf32>
    %c0_36 = arith.constant 0 : index
    %c0_37 = arith.constant 0 : index
    %51 = vector.load %arg9[%c0_36, %c0_37] : memref<1x256xf32, #tpu.memory_space<vmem>>, vector<1x256xf32>
    %52 = vector.broadcast %51 : vector<1x256xf32> to vector<16x256xf32>
    %53 = arith.addf %50, %52 : vector<16x256xf32>
    %54 = arith.negf %53 : vector<16x256xf32>
    %55 = math.exp %54 : vector<16x256xf32>
    %cst_38 = arith.constant 1.000000e+00 : f32
    %56 = vector.broadcast %cst_38 : f32 to vector<16x256xf32>
    %57 = arith.addf %56, %55 : vector<16x256xf32>
    %58 = arith.divf %56, %57 : vector<16x256xf32>
    %59 = arith.mulf %53, %58 : vector<16x256xf32>
    %60 = arith.truncf %59 : vector<16x256xf32> to vector<16x256xbf16>
    %c0_39 = arith.constant 0 : index
    %c0_40 = arith.constant 0 : index
    %61 = vector.load %arg11[%c0_39, %c0_40] : memref<256x384xbf16, #tpu.memory_space<vmem>>, vector<256x384xbf16>
    %cst_41 = arith.constant dense<0.000000e+00> : vector<16x384xf32>
    %62 = tpu.matmul %60, %61, %cst_41 {dimension_numbers = #tpu.dot_dimension_numbers<[1], [0], [0], [1], [0, 0, 1, 1], [], []>} : vector<16x256xbf16>, vector<256x384xbf16>, vector<16x384xf32> -> vector<16x384xf32>
    %c0_42 = arith.constant 0 : index
    %c0_43 = arith.constant 0 : index
    %c0_44 = arith.constant 0 : index
    %63 = vector.load %arg10[%c0_42, %c0_43, %c0_44] : memref<3x8x16xf32, #tpu.memory_space<vmem>>, vector<1x8x16xf32>
    %64 = vector.shape_cast %63 : vector<1x8x16xf32> to vector<8x16xf32>
    %65 = vector.extract_strided_slice %62 {offsets = [0, 0], sizes = [16, 128], strides = [1, 1]} : vector<16x384xf32> to vector<16x128xf32>
    %cst_45 = arith.constant dense<0.000000e+00> : vector<8x128xf32>
    %66 = tpu.matmul %64, %65, %cst_45 {dimension_numbers = #tpu.dot_dimension_numbers<[1], [0], [0], [1], [0, 0, 1, 1], [], []>} : vector<8x16xf32>, vector<16x128xf32>, vector<8x128xf32> -> vector<8x128xf32>
    %c1_46 = arith.constant 1 : index
    %c0_47 = arith.constant 0 : index
    %c0_48 = arith.constant 0 : index
    %67 = vector.load %arg10[%c1_46, %c0_47, %c0_48] : memref<3x8x16xf32, #tpu.memory_space<vmem>>, vector<1x8x16xf32>
    %68 = vector.shape_cast %67 : vector<1x8x16xf32> to vector<8x16xf32>
    %69 = vector.extract_strided_slice %62 {offsets = [0, 128], sizes = [16, 128], strides = [1, 1]} : vector<16x384xf32> to vector<16x128xf32>
    %cst_49 = arith.constant dense<0.000000e+00> : vector<8x128xf32>
    %70 = tpu.matmul %68, %69, %cst_49 {dimension_numbers = #tpu.dot_dimension_numbers<[1], [0], [0], [1], [0, 0, 1, 1], [], []>} : vector<8x16xf32>, vector<16x128xf32>, vector<8x128xf32> -> vector<8x128xf32>
    %71 = arith.addf %66, %70 : vector<8x128xf32>
    %c2_50 = arith.constant 2 : index
    %c0_51 = arith.constant 0 : index
    %c0_52 = arith.constant 0 : index
    %72 = vector.load %arg10[%c2_50, %c0_51, %c0_52] : memref<3x8x16xf32, #tpu.memory_space<vmem>>, vector<1x8x16xf32>
    %73 = vector.shape_cast %72 : vector<1x8x16xf32> to vector<8x16xf32>
    %74 = vector.extract_strided_slice %62 {offsets = [0, 256], sizes = [16, 128], strides = [1, 1]} : vector<16x384xf32> to vector<16x128xf32>
    %cst_53 = arith.constant dense<0.000000e+00> : vector<8x128xf32>
    %75 = tpu.matmul %73, %74, %cst_53 {dimension_numbers = #tpu.dot_dimension_numbers<[1], [0], [0], [1], [0, 0, 1, 1], [], []>} : vector<8x16xf32>, vector<16x128xf32>, vector<8x128xf32> -> vector<8x128xf32>
    %76 = arith.addf %71, %75 : vector<8x128xf32>
    %c0_54 = arith.constant 0 : index
    %c0_55 = arith.constant 0 : index
    %77 = vector.load %arg12[%c0_54, %c0_55] : memref<1x128xf32, #tpu.memory_space<vmem>>, vector<1x128xf32>
    %78 = vector.broadcast %77 : vector<1x128xf32> to vector<8x128xf32>
    %79 = arith.mulf %76, %78 : vector<8x128xf32>
    %c0_56 = arith.constant 0 : index
    %c0_57 = arith.constant 0 : index
    %80 = vector.load %arg13[%c0_56, %c0_57] : memref<1x128xf32, #tpu.memory_space<vmem>>, vector<1x128xf32>
    %81 = vector.broadcast %80 : vector<1x128xf32> to vector<8x128xf32>
    %82 = arith.addf %79, %81 : vector<8x128xf32>
    %83 = arith.negf %82 : vector<8x128xf32>
    %84 = math.exp %83 : vector<8x128xf32>
    %cst_58 = arith.constant 1.000000e+00 : f32
    %85 = vector.broadcast %cst_58 : f32 to vector<8x128xf32>
    %86 = arith.addf %85, %84 : vector<8x128xf32>
    %87 = arith.divf %85, %86 : vector<8x128xf32>
    %88 = arith.mulf %82, %87 : vector<8x128xf32>
    %89 = arith.truncf %88 : vector<8x128xf32> to vector<8x128xbf16>
    %c0_59 = arith.constant 0 : index
    %c0_60 = arith.constant 0 : index
    %90 = vector.load %arg15[%c0_59, %c0_60] : memref<128x384xbf16, #tpu.memory_space<vmem>>, vector<128x384xbf16>
    %cst_61 = arith.constant dense<0.000000e+00> : vector<8x384xf32>
    %91 = tpu.matmul %89, %90, %cst_61 {dimension_numbers = #tpu.dot_dimension_numbers<[1], [0], [0], [1], [0, 0, 1, 1], [], []>} : vector<8x128xbf16>, vector<128x384xbf16>, vector<8x384xf32> -> vector<8x384xf32>
    %c0_62 = arith.constant 0 : index
    %c0_63 = arith.constant 0 : index
    %c0_64 = arith.constant 0 : index
    %92 = vector.load %arg14[%c0_62, %c0_63, %c0_64] : memref<3x4x8xf32, #tpu.memory_space<vmem>>, vector<1x4x8xf32>
    %93 = vector.shape_cast %92 : vector<1x4x8xf32> to vector<4x8xf32>
    %94 = vector.extract_strided_slice %91 {offsets = [0, 0], sizes = [8, 128], strides = [1, 1]} : vector<8x384xf32> to vector<8x128xf32>
    %cst_65 = arith.constant dense<0.000000e+00> : vector<4x128xf32>
    %95 = tpu.matmul %93, %94, %cst_65 {dimension_numbers = #tpu.dot_dimension_numbers<[1], [0], [0], [1], [0, 0, 1, 1], [], []>} : vector<4x8xf32>, vector<8x128xf32>, vector<4x128xf32> -> vector<4x128xf32>
    %c1_66 = arith.constant 1 : index
    %c0_67 = arith.constant 0 : index
    %c0_68 = arith.constant 0 : index
    %96 = vector.load %arg14[%c1_66, %c0_67, %c0_68] : memref<3x4x8xf32, #tpu.memory_space<vmem>>, vector<1x4x8xf32>
    %97 = vector.shape_cast %96 : vector<1x4x8xf32> to vector<4x8xf32>
    %98 = vector.extract_strided_slice %91 {offsets = [0, 128], sizes = [8, 128], strides = [1, 1]} : vector<8x384xf32> to vector<8x128xf32>
    %cst_69 = arith.constant dense<0.000000e+00> : vector<4x128xf32>
    %99 = tpu.matmul %97, %98, %cst_69 {dimension_numbers = #tpu.dot_dimension_numbers<[1], [0], [0], [1], [0, 0, 1, 1], [], []>} : vector<4x8xf32>, vector<8x128xf32>, vector<4x128xf32> -> vector<4x128xf32>
    %100 = arith.addf %95, %99 : vector<4x128xf32>
    %c2_70 = arith.constant 2 : index
    %c0_71 = arith.constant 0 : index
    %c0_72 = arith.constant 0 : index
    %101 = vector.load %arg14[%c2_70, %c0_71, %c0_72] : memref<3x4x8xf32, #tpu.memory_space<vmem>>, vector<1x4x8xf32>
    %102 = vector.shape_cast %101 : vector<1x4x8xf32> to vector<4x8xf32>
    %103 = vector.extract_strided_slice %91 {offsets = [0, 256], sizes = [8, 128], strides = [1, 1]} : vector<8x384xf32> to vector<8x128xf32>
    %cst_73 = arith.constant dense<0.000000e+00> : vector<4x128xf32>
    %104 = tpu.matmul %102, %103, %cst_73 {dimension_numbers = #tpu.dot_dimension_numbers<[1], [0], [0], [1], [0, 0, 1, 1], [], []>} : vector<4x8xf32>, vector<8x128xf32>, vector<4x128xf32> -> vector<4x128xf32>
    %105 = arith.addf %100, %104 : vector<4x128xf32>
    %c0_74 = arith.constant 0 : index
    %c0_75 = arith.constant 0 : index
    %106 = vector.load %arg16[%c0_74, %c0_75] : memref<1x128xf32, #tpu.memory_space<vmem>>, vector<1x128xf32>
    %107 = vector.broadcast %106 : vector<1x128xf32> to vector<4x128xf32>
    %108 = arith.mulf %105, %107 : vector<4x128xf32>
    %c0_76 = arith.constant 0 : index
    %c0_77 = arith.constant 0 : index
    %109 = vector.load %arg17[%c0_76, %c0_77] : memref<1x128xf32, #tpu.memory_space<vmem>>, vector<1x128xf32>
    %110 = vector.broadcast %109 : vector<1x128xf32> to vector<4x128xf32>
    %111 = arith.addf %108, %110 : vector<4x128xf32>
    %112 = arith.negf %111 : vector<4x128xf32>
    %113 = math.exp %112 : vector<4x128xf32>
    %cst_78 = arith.constant 1.000000e+00 : f32
    %114 = vector.broadcast %cst_78 : f32 to vector<4x128xf32>
    %115 = arith.addf %114, %113 : vector<4x128xf32>
    %116 = arith.divf %114, %115 : vector<4x128xf32>
    %117 = arith.mulf %111, %116 : vector<4x128xf32>
    %118 = arith.truncf %117 : vector<4x128xf32> to vector<4x128xbf16>
    %c0_79 = arith.constant 0 : index
    %c0_80 = arith.constant 0 : index
    %119 = vector.load %arg19[%c0_79, %c0_80] : memref<128x192xbf16, #tpu.memory_space<vmem>>, vector<128x192xbf16>
    %cst_81 = arith.constant dense<0.000000e+00> : vector<4x192xf32>
    %120 = tpu.matmul %118, %119, %cst_81 {dimension_numbers = #tpu.dot_dimension_numbers<[1], [0], [0], [1], [0, 0, 1, 1], [], []>} : vector<4x128xbf16>, vector<128x192xbf16>, vector<4x192xf32> -> vector<4x192xf32>
    %c0_82 = arith.constant 0 : index
    %c0_83 = arith.constant 0 : index
    %c0_84 = arith.constant 0 : index
    %121 = vector.load %arg18[%c0_82, %c0_83, %c0_84] : memref<3x2x4xf32, #tpu.memory_space<vmem>>, vector<1x2x4xf32>
    %122 = vector.shape_cast %121 : vector<1x2x4xf32> to vector<2x4xf32>
    %123 = vector.extract_strided_slice %120 {offsets = [0, 0], sizes = [4, 64], strides = [1, 1]} : vector<4x192xf32> to vector<4x64xf32>
    %cst_85 = arith.constant dense<0.000000e+00> : vector<2x64xf32>
    %124 = tpu.matmul %122, %123, %cst_85 {dimension_numbers = #tpu.dot_dimension_numbers<[1], [0], [0], [1], [0, 0, 1, 1], [], []>} : vector<2x4xf32>, vector<4x64xf32>, vector<2x64xf32> -> vector<2x64xf32>
    %c1_86 = arith.constant 1 : index
    %c0_87 = arith.constant 0 : index
    %c0_88 = arith.constant 0 : index
    %125 = vector.load %arg18[%c1_86, %c0_87, %c0_88] : memref<3x2x4xf32, #tpu.memory_space<vmem>>, vector<1x2x4xf32>
    %126 = vector.shape_cast %125 : vector<1x2x4xf32> to vector<2x4xf32>
    %127 = vector.extract_strided_slice %120 {offsets = [0, 64], sizes = [4, 64], strides = [1, 1]} : vector<4x192xf32> to vector<4x64xf32>
    %cst_89 = arith.constant dense<0.000000e+00> : vector<2x64xf32>
    %128 = tpu.matmul %126, %127, %cst_89 {dimension_numbers = #tpu.dot_dimension_numbers<[1], [0], [0], [1], [0, 0, 1, 1], [], []>} : vector<2x4xf32>, vector<4x64xf32>, vector<2x64xf32> -> vector<2x64xf32>
    %129 = arith.addf %124, %128 : vector<2x64xf32>
    %c2_90 = arith.constant 2 : index
    %c0_91 = arith.constant 0 : index
    %c0_92 = arith.constant 0 : index
    %130 = vector.load %arg18[%c2_90, %c0_91, %c0_92] : memref<3x2x4xf32, #tpu.memory_space<vmem>>, vector<1x2x4xf32>
    %131 = vector.shape_cast %130 : vector<1x2x4xf32> to vector<2x4xf32>
    %132 = vector.extract_strided_slice %120 {offsets = [0, 128], sizes = [4, 64], strides = [1, 1]} : vector<4x192xf32> to vector<4x64xf32>
    %cst_93 = arith.constant dense<0.000000e+00> : vector<2x64xf32>
    %133 = tpu.matmul %131, %132, %cst_93 {dimension_numbers = #tpu.dot_dimension_numbers<[1], [0], [0], [1], [0, 0, 1, 1], [], []>} : vector<2x4xf32>, vector<4x64xf32>, vector<2x64xf32> -> vector<2x64xf32>
    %134 = arith.addf %129, %133 : vector<2x64xf32>
    %c0_94 = arith.constant 0 : index
    %c0_95 = arith.constant 0 : index
    %135 = vector.load %arg20[%c0_94, %c0_95] : memref<1x64xf32, #tpu.memory_space<vmem>>, vector<1x64xf32>
    %136 = vector.broadcast %135 : vector<1x64xf32> to vector<2x64xf32>
    %137 = arith.mulf %134, %136 : vector<2x64xf32>
    %c0_96 = arith.constant 0 : index
    %c0_97 = arith.constant 0 : index
    %138 = vector.load %arg21[%c0_96, %c0_97] : memref<1x64xf32, #tpu.memory_space<vmem>>, vector<1x64xf32>
    %139 = vector.broadcast %138 : vector<1x64xf32> to vector<2x64xf32>
    %140 = arith.addf %137, %139 : vector<2x64xf32>
    %141 = arith.negf %140 : vector<2x64xf32>
    %142 = math.exp %141 : vector<2x64xf32>
    %cst_98 = arith.constant 1.000000e+00 : f32
    %143 = vector.broadcast %cst_98 : f32 to vector<2x64xf32>
    %144 = arith.addf %143, %142 : vector<2x64xf32>
    %145 = arith.divf %143, %144 : vector<2x64xf32>
    %146 = arith.mulf %140, %145 : vector<2x64xf32>
    %147 = arith.truncf %88 : vector<8x128xf32> to vector<8x128xbf16>
    %c0_99 = arith.constant 0 : index
    %c0_100 = arith.constant 0 : index
    %148 = vector.load %arg22[%c0_99, %c0_100] : memref<128x256xbf16, #tpu.memory_space<vmem>>, vector<128x256xbf16>
    %cst_101 = arith.constant dense<0.000000e+00> : vector<8x256xf32>
    %149 = tpu.matmul %147, %148, %cst_101 {dimension_numbers = #tpu.dot_dimension_numbers<[1], [0], [0], [1], [0, 0, 1, 1], [], []>} : vector<8x128xbf16>, vector<128x256xbf16>, vector<8x256xf32> -> vector<8x256xf32>
    %c0_102 = arith.constant 0 : index
    %c0_103 = arith.constant 0 : index
    %150 = vector.load %arg23[%c0_102, %c0_103] : memref<1x256xf32, #tpu.memory_space<vmem>>, vector<1x256xf32>
    %151 = vector.broadcast %150 : vector<1x256xf32> to vector<8x256xf32>
    %152 = arith.addf %149, %151 : vector<8x256xf32>
    %c0_104 = arith.constant 0 : index
    %c0_105 = arith.constant 0 : index
    %c0_106 = arith.constant 0 : index
    %153 = vector.load %arg37[%c0_104, %c0_105, %c0_106] : memref<1x8x256xf32, #tpu.memory_space<vmem>>, vector<1x8x256xf32>
    %154 = vector.shape_cast %153 : vector<1x8x256xf32> to vector<8x256xf32>
    %155 = vector.shape_cast %152 : vector<8x256xf32> to vector<1x8x256xf32>
    tpu.vector_store %arg37[%c0_104, %c0_105, %c0_106], %155 {strides = array<i32>} : memref<1x8x256xf32, #tpu.memory_space<vmem>>, vector<1x8x256xf32>,
    %156 = arith.negf %152 : vector<8x256xf32>
    %157 = math.exp %156 : vector<8x256xf32>
    %cst_107 = arith.constant 1.000000e+00 : f32
    %158 = vector.broadcast %cst_107 : f32 to vector<8x256xf32>
    %159 = arith.addf %158, %157 : vector<8x256xf32>
    %160 = arith.divf %158, %159 : vector<8x256xf32>
    %161 = tpu.iota {dimensions = array<i32: 0>} : vector<8x256xi32>
    %162 = arith.sitofp %161 : vector<8x256xi32> to vector<8x256xf32>
    %c0_108 = arith.constant 0 : index
    %c0_109 = arith.constant 0 : index
    %163 = vector.load %arg25[%c0_108, %c0_109] : memref<1x256xf32, #tpu.memory_space<vmem>>, vector<1x256xf32>
    %164 = vector.shape_cast %163 : vector<1x256xf32> to vector<1x256xf32>
    %165 = vector.broadcast %164 : vector<1x256xf32> to vector<8x256xf32>
    %c0_110 = arith.constant 0 : index
    %c0_111 = arith.constant 0 : index
    %166 = vector.load %arg24[%c0_110, %c0_111] : memref<1x256xf32, #tpu.memory_space<vmem>>, vector<1x256xf32>
    %167 = vector.shape_cast %166 : vector<1x256xf32> to vector<1x256xf32>
    %168 = vector.broadcast %167 : vector<1x256xf32> to vector<8x256xf32>
    %c0_112 = arith.constant 0 : index
    %c0_113 = arith.constant 0 : index
    %169 = vector.load %arg26[%c0_112, %c0_113] : memref<1x256xf32, #tpu.memory_space<vmem>>, vector<1x256xf32>
    %170 = vector.shape_cast %169 : vector<1x256xf32> to vector<1x256xf32>
    %171 = vector.broadcast %170 : vector<1x256xf32> to vector<8x256xf32>
    %cst_114 = arith.constant 0.000000e+00 : f32
    %172 = vector.broadcast %cst_114 : f32 to vector<8x256xf32>
    %173 = arith.cmpf oeq, %165, %172 : vector<8x256xf32>
    %174 = arith.select %173, %168, %162 : vector<8x256xi1>, vector<8x256xf32>
    %cst_115 = arith.constant 2.000000e+00 : f32
    %175 = vector.broadcast %cst_115 : f32 to vector<8x256xf32>
    %176 = arith.mulf %160, %175 : vector<8x256xf32>
    %cst_116 = arith.constant 5.000000e-01 : f32
    %177 = vector.broadcast %cst_116 : f32 to vector<8x256xf32>
    %178 = arith.subf %176, %177 : vector<8x256xf32>
    %179 = arith.addf %178, %174 : vector<8x256xf32>
    %cst_117 = arith.constant 8.000000e+00 : f32
    %180 = vector.broadcast %cst_117 : f32 to vector<8x256xf32>
    %181 = arith.mulf %179, %180 : vector<8x256xf32>
    %cst_118 = arith.constant 2.000000e+00 : f32
    %182 = vector.broadcast %cst_118 : f32 to vector<8x256xf32>
    %183 = arith.mulf %160, %182 : vector<8x256xf32>
    %184 = arith.mulf %183, %183 : vector<8x256xf32>
    %185 = arith.mulf %184, %171 : vector<8x256xf32>
    %cst_119 = arith.constant 2.000000e+00 : f32
    %186 = vector.broadcast %cst_119 : f32 to vector<8x256xf32>
    %187 = arith.cmpf olt, %165, %186 : vector<8x256xf32>
    %cst_120 = arith.constant 4.000000e+00 : f32
    %188 = vector.broadcast %cst_120 : f32 to vector<8x256xf32>
    %189 = arith.cmpf olt, %165, %188 : vector<8x256xf32>
    %190 = arith.select %189, %185, %160 : vector<8x256xi1>, vector<8x256xf32>
    %191 = arith.select %187, %181, %190 : vector<8x256xi1>, vector<8x256xf32>
    %c0_121 = arith.constant 0 : index
    %c0_122 = arith.constant 0 : index
    %c0_123 = arith.constant 0 : index
    %192 = vector.load %arg38[%c0_121, %c0_122, %c0_123] : memref<1x8x256xf32, #tpu.memory_space<vmem>>, vector<1x8x256xf32>
    %193 = vector.shape_cast %192 : vector<1x8x256xf32> to vector<8x256xf32>
    %194 = vector.shape_cast %191 : vector<8x256xf32> to vector<1x8x256xf32>
    tpu.vector_store %arg38[%c0_121, %c0_122, %c0_123], %194 {strides = array<i32>} : memref<1x8x256xf32, #tpu.memory_space<vmem>>, vector<1x8x256xf32>,
    %195 = arith.truncf %117 : vector<4x128xf32> to vector<4x128xbf16>
    %c0_124 = arith.constant 0 : index
    %c0_125 = arith.constant 0 : index
    %196 = vector.load %arg27[%c0_124, %c0_125] : memref<128x128xbf16, #tpu.memory_space<vmem>>, vector<128x128xbf16>
    %cst_126 = arith.constant dense<0.000000e+00> : vector<4x128xf32>
    %197 = tpu.matmul %195, %196, %cst_126 {dimension_numbers = #tpu.dot_dimension_numbers<[1], [0], [0], [1], [0, 0, 1, 1], [], []>} : vector<4x128xbf16>, vector<128x128xbf16>, vector<4x128xf32> -> vector<4x128xf32>
    %c0_127 = arith.constant 0 : index
    %c0_128 = arith.constant 0 : index
    %198 = vector.load %arg28[%c0_127, %c0_128] : memref<1x128xf32, #tpu.memory_space<vmem>>, vector<1x128xf32>
    %199 = vector.broadcast %198 : vector<1x128xf32> to vector<4x128xf32>
    %200 = arith.addf %197, %199 : vector<4x128xf32>
    %c0_129 = arith.constant 0 : index
    %c0_130 = arith.constant 0 : index
    %c0_131 = arith.constant 0 : index
    %201 = vector.load %arg39[%c0_129, %c0_130, %c0_131] : memref<1x4x128xf32, #tpu.memory_space<vmem>>, vector<1x4x128xf32>
    %202 = vector.shape_cast %201 : vector<1x4x128xf32> to vector<4x128xf32>
    %203 = vector.shape_cast %200 : vector<4x128xf32> to vector<1x4x128xf32>
    tpu.vector_store %arg39[%c0_129, %c0_130, %c0_131], %203 {strides = array<i32>} : memref<1x4x128xf32, #tpu.memory_space<vmem>>, vector<1x4x128xf32>,
    %204 = arith.negf %200 : vector<4x128xf32>
    %205 = math.exp %204 : vector<4x128xf32>
    %cst_132 = arith.constant 1.000000e+00 : f32
    %206 = vector.broadcast %cst_132 : f32 to vector<4x128xf32>
    %207 = arith.addf %206, %205 : vector<4x128xf32>
    %208 = arith.divf %206, %207 : vector<4x128xf32>
    %209 = tpu.iota {dimensions = array<i32: 0>} : vector<4x128xi32>
    %210 = arith.sitofp %209 : vector<4x128xi32> to vector<4x128xf32>
    %c0_133 = arith.constant 0 : index
    %c0_134 = arith.constant 0 : index
    %211 = vector.load %arg30[%c0_133, %c0_134] : memref<1x128xf32, #tpu.memory_space<vmem>>, vector<1x128xf32>
    %212 = vector.shape_cast %211 : vector<1x128xf32> to vector<1x128xf32>
    %213 = vector.broadcast %212 : vector<1x128xf32> to vector<4x128xf32>
    %c0_135 = arith.constant 0 : index
    %c0_136 = arith.constant 0 : index
    %214 = vector.load %arg29[%c0_135, %c0_136] : memref<1x128xf32, #tpu.memory_space<vmem>>, vector<1x128xf32>
    %215 = vector.shape_cast %214 : vector<1x128xf32> to vector<1x128xf32>
    %216 = vector.broadcast %215 : vector<1x128xf32> to vector<4x128xf32>
    %c0_137 = arith.constant 0 : index
    %c0_138 = arith.constant 0 : index
    %217 = vector.load %arg31[%c0_137, %c0_138] : memref<1x128xf32, #tpu.memory_space<vmem>>, vector<1x128xf32>
    %218 = vector.shape_cast %217 : vector<1x128xf32> to vector<1x128xf32>
    %219 = vector.broadcast %218 : vector<1x128xf32> to vector<4x128xf32>
    %cst_139 = arith.constant 0.000000e+00 : f32
    %220 = vector.broadcast %cst_139 : f32 to vector<4x128xf32>
    %221 = arith.cmpf oeq, %213, %220 : vector<4x128xf32>
    %222 = arith.select %221, %216, %210 : vector<4x128xi1>, vector<4x128xf32>
    %cst_140 = arith.constant 2.000000e+00 : f32
    %223 = vector.broadcast %cst_140 : f32 to vector<4x128xf32>
    %224 = arith.mulf %208, %223 : vector<4x128xf32>
    %cst_141 = arith.constant 5.000000e-01 : f32
    %225 = vector.broadcast %cst_141 : f32 to vector<4x128xf32>
    %226 = arith.subf %224, %225 : vector<4x128xf32>
    %227 = arith.addf %226, %222 : vector<4x128xf32>
    %cst_142 = arith.constant 1.600000e+01 : f32
    %228 = vector.broadcast %cst_142 : f32 to vector<4x128xf32>
    %229 = arith.mulf %227, %228 : vector<4x128xf32>
    %cst_143 = arith.constant 2.000000e+00 : f32
    %230 = vector.broadcast %cst_143 : f32 to vector<4x128xf32>
    %231 = arith.mulf %208, %230 : vector<4x128xf32>
    %232 = arith.mulf %231, %231 : vector<4x128xf32>
    %233 = arith.mulf %232, %219 : vector<4x128xf32>
    %cst_144 = arith.constant 2.000000e+00 : f32
    %234 = vector.broadcast %cst_144 : f32 to vector<4x128xf32>
    %235 = arith.cmpf olt, %213, %234 : vector<4x128xf32>
    %cst_145 = arith.constant 4.000000e+00 : f32
    %236 = vector.broadcast %cst_145 : f32 to vector<4x128xf32>
    %237 = arith.cmpf olt, %213, %236 : vector<4x128xf32>
    %238 = arith.select %237, %233, %208 : vector<4x128xi1>, vector<4x128xf32>
    %239 = arith.select %235, %229, %238 : vector<4x128xi1>, vector<4x128xf32>
    %c0_146 = arith.constant 0 : index
    %c0_147 = arith.constant 0 : index
    %c0_148 = arith.constant 0 : index
    %240 = vector.load %arg40[%c0_146, %c0_147, %c0_148] : memref<1x4x128xf32, #tpu.memory_space<vmem>>, vector<1x4x128xf32>
    %241 = vector.shape_cast %240 : vector<1x4x128xf32> to vector<4x128xf32>
    %242 = vector.shape_cast %239 : vector<4x128xf32> to vector<1x4x128xf32>
    tpu.vector_store %arg40[%c0_146, %c0_147, %c0_148], %242 {strides = array<i32>} : memref<1x4x128xf32, #tpu.memory_space<vmem>>, vector<1x4x128xf32>,
    %243 = arith.truncf %146 : vector<2x64xf32> to vector<2x64xbf16>
    %c0_149 = arith.constant 0 : index
    %c0_150 = arith.constant 0 : index
    %244 = vector.load %arg32[%c0_149, %c0_150] : memref<64x128xbf16, #tpu.memory_space<vmem>>, vector<64x128xbf16>
    %cst_151 = arith.constant dense<0.000000e+00> : vector<2x128xf32>
    %245 = tpu.matmul %243, %244, %cst_151 {dimension_numbers = #tpu.dot_dimension_numbers<[1], [0], [0], [1], [0, 0, 1, 1], [], []>} : vector<2x64xbf16>, vector<64x128xbf16>, vector<2x128xf32> -> vector<2x128xf32>
    %c0_152 = arith.constant 0 : index
    %c0_153 = arith.constant 0 : index
    %246 = vector.load %arg33[%c0_152, %c0_153] : memref<1x128xf32, #tpu.memory_space<vmem>>, vector<1x128xf32>
    %247 = vector.broadcast %246 : vector<1x128xf32> to vector<2x128xf32>
    %248 = arith.addf %245, %247 : vector<2x128xf32>
    %c0_154 = arith.constant 0 : index
    %c0_155 = arith.constant 0 : index
    %c0_156 = arith.constant 0 : index
    %249 = vector.load %arg41[%c0_154, %c0_155, %c0_156] : memref<1x2x128xf32, #tpu.memory_space<vmem>>, vector<1x2x128xf32>
    %250 = vector.shape_cast %249 : vector<1x2x128xf32> to vector<2x128xf32>
    %251 = vector.shape_cast %248 : vector<2x128xf32> to vector<1x2x128xf32>
    tpu.vector_store %arg41[%c0_154, %c0_155, %c0_156], %251 {strides = array<i32>} : memref<1x2x128xf32, #tpu.memory_space<vmem>>, vector<1x2x128xf32>,
    %252 = arith.negf %248 : vector<2x128xf32>
    %253 = math.exp %252 : vector<2x128xf32>
    %cst_157 = arith.constant 1.000000e+00 : f32
    %254 = vector.broadcast %cst_157 : f32 to vector<2x128xf32>
    %255 = arith.addf %254, %253 : vector<2x128xf32>
    %256 = arith.divf %254, %255 : vector<2x128xf32>
    %257 = tpu.iota {dimensions = array<i32: 0>} : vector<2x128xi32>
    %258 = arith.sitofp %257 : vector<2x128xi32> to vector<2x128xf32>
    %c0_158 = arith.constant 0 : index
    %c0_159 = arith.constant 0 : index
    %259 = vector.load %arg35[%c0_158, %c0_159] : memref<1x128xf32, #tpu.memory_space<vmem>>, vector<1x128xf32>
    %260 = vector.shape_cast %259 : vector<1x128xf32> to vector<1x128xf32>
    %261 = vector.broadcast %260 : vector<1x128xf32> to vector<2x128xf32>
    %c0_160 = arith.constant 0 : index
    %c0_161 = arith.constant 0 : index
    %262 = vector.load %arg34[%c0_160, %c0_161] : memref<1x128xf32, #tpu.memory_space<vmem>>, vector<1x128xf32>
    %263 = vector.shape_cast %262 : vector<1x128xf32> to vector<1x128xf32>
    %264 = vector.broadcast %263 : vector<1x128xf32> to vector<2x128xf32>
    %c0_162 = arith.constant 0 : index
    %c0_163 = arith.constant 0 : index
    %265 = vector.load %arg36[%c0_162, %c0_163] : memref<1x128xf32, #tpu.memory_space<vmem>>, vector<1x128xf32>
    %266 = vector.shape_cast %265 : vector<1x128xf32> to vector<1x128xf32>
    %267 = vector.broadcast %266 : vector<1x128xf32> to vector<2x128xf32>
    %cst_164 = arith.constant 0.000000e+00 : f32
    %268 = vector.broadcast %cst_164 : f32 to vector<2x128xf32>
    %269 = arith.cmpf oeq, %261, %268 : vector<2x128xf32>
    %270 = arith.select %269, %264, %258 : vector<2x128xi1>, vector<2x128xf32>
    %cst_165 = arith.constant 2.000000e+00 : f32
    %271 = vector.broadcast %cst_165 : f32 to vector<2x128xf32>
    %272 = arith.mulf %256, %271 : vector<2x128xf32>
    %cst_166 = arith.constant 5.000000e-01 : f32
    %273 = vector.broadcast %cst_166 : f32 to vector<2x128xf32>
    %274 = arith.subf %272, %273 : vector<2x128xf32>
    %275 = arith.addf %274, %270 : vector<2x128xf32>
    %cst_167 = arith.constant 3.200000e+01 : f32
    %276 = vector.broadcast %cst_167 : f32 to vector<2x128xf32>
    %277 = arith.mulf %275, %276 : vector<2x128xf32>
    %cst_168 = arith.constant 2.000000e+00 : f32
    %278 = vector.broadcast %cst_168 : f32 to vector<2x128xf32>
    %279 = arith.mulf %256, %278 : vector<2x128xf32>
    %280 = arith.mulf %279, %279 : vector<2x128xf32>
    %281 = arith.mulf %280, %267 : vector<2x128xf32>
    %cst_169 = arith.constant 2.000000e+00 : f32
    %282 = vector.broadcast %cst_169 : f32 to vector<2x128xf32>
    %283 = arith.cmpf olt, %261, %282 : vector<2x128xf32>
    %cst_170 = arith.constant 4.000000e+00 : f32
    %284 = vector.broadcast %cst_170 : f32 to vector<2x128xf32>
    %285 = arith.cmpf olt, %261, %284 : vector<2x128xf32>
    %286 = arith.select %285, %281, %256 : vector<2x128xi1>, vector<2x128xf32>
    %287 = arith.select %283, %277, %286 : vector<2x128xi1>, vector<2x128xf32>
    %c0_171 = arith.constant 0 : index
    %c0_172 = arith.constant 0 : index
    %c0_173 = arith.constant 0 : index
    %288 = vector.load %arg42[%c0_171, %c0_172, %c0_173] : memref<1x2x128xf32, #tpu.memory_space<vmem>>, vector<1x2x128xf32>
    %289 = vector.shape_cast %288 : vector<1x2x128xf32> to vector<2x128xf32>
    %290 = vector.shape_cast %287 : vector<2x128xf32> to vector<1x2x128xf32>
    tpu.vector_store %arg42[%c0_171, %c0_172, %c0_173], %290 {strides = array<i32>} : memref<1x2x128xf32, #tpu.memory_space<vmem>>, vector<1x2x128xf32>,
    return
  }
  func.func @transform_0(%arg0: i32) -> (i32, i32, i32) {
    %c0_i32 = arith.constant 0 : i32
    %c0_i32_0 = arith.constant 0 : i32
    %c0_i32_1 = arith.constant 0 : i32
    return %arg0, %c0_i32, %c0_i32_0 : i32, i32, i32
  }
  func.func @transform_1(%arg0: i32) -> (i32, i32, i32) {
    %c0_i32 = arith.constant 0 : i32
    %c0_i32_0 = arith.constant 0 : i32
    %c0_i32_1 = arith.constant 0 : i32
    %c0_i32_2 = arith.constant 0 : i32
    return %c0_i32, %c0_i32_0, %c0_i32_1 : i32, i32, i32
  }
  func.func @transform_2(%arg0: i32) -> (i32, i32) {
    %c0_i32 = arith.constant 0 : i32
    %c0_i32_0 = arith.constant 0 : i32
    %c0_i32_1 = arith.constant 0 : i32
    return %c0_i32, %c0_i32_0 : i32, i32
  }
  func.func @transform_3(%arg0: i32) -> (i32, i32) {
    %c0_i32 = arith.constant 0 : i32
    %c0_i32_0 = arith.constant 0 : i32
    %c0_i32_1 = arith.constant 0 : i32
    return %c0_i32, %c0_i32_0 : i32, i32
  }
  func.func @transform_4(%arg0: i32) -> (i32, i32) {
    %c0_i32 = arith.constant 0 : i32
    %c0_i32_0 = arith.constant 0 : i32
    %c0_i32_1 = arith.constant 0 : i32
    return %c0_i32, %c0_i32_0 : i32, i32
  }
  func.func @transform_5(%arg0: i32) -> (i32, i32, i32) {
    %c0_i32 = arith.constant 0 : i32
    %c0_i32_0 = arith.constant 0 : i32
    %c0_i32_1 = arith.constant 0 : i32
    %c0_i32_2 = arith.constant 0 : i32
    return %c0_i32, %c0_i32_0, %c0_i32_1 : i32, i32, i32
  }
  func.func @transform_6(%arg0: i32) -> (i32, i32) {
    %c0_i32 = arith.constant 0 : i32
    %c0_i32_0 = arith.constant 0 : i32
    %c0_i32_1 = arith.constant 0 : i32
    return %c0_i32, %c0_i32_0 : i32, i32
  }
  func.func @transform_7(%arg0: i32) -> (i32, i32) {
    %c0_i32 = arith.constant 0 : i32
    %c0_i32_0 = arith.constant 0 : i32
    %c0_i32_1 = arith.constant 0 : i32
    return %c0_i32, %c0_i32_0 : i32, i32
  }
  func.func @transform_8(%arg0: i32) -> (i32, i32) {
    %c0_i32 = arith.constant 0 : i32
    %c0_i32_0 = arith.constant 0 : i32
    %c0_i32_1 = arith.constant 0 : i32
    return %c0_i32, %c0_i32_0 : i32, i32
  }
  func.func @transform_9(%arg0: i32) -> (i32, i32, i32) {
    %c0_i32 = arith.constant 0 : i32
    %c0_i32_0 = arith.constant 0 : i32
    %c0_i32_1 = arith.constant 0 : i32
    %c0_i32_2 = arith.constant 0 : i32
    return %c0_i32, %c0_i32_0, %c0_i32_1 : i32, i32, i32
  }
  func.func @transform_10(%arg0: i32) -> (i32, i32) {
    %c0_i32 = arith.constant 0 : i32
    %c0_i32_0 = arith.constant 0 : i32
    %c0_i32_1 = arith.constant 0 : i32
    return %c0_i32, %c0_i32_0 : i32, i32
  }
  func.func @transform_11(%arg0: i32) -> (i32, i32) {
    %c0_i32 = arith.constant 0 : i32
    %c0_i32_0 = arith.constant 0 : i32
    %c0_i32_1 = arith.constant 0 : i32
    return %c0_i32, %c0_i32_0 : i32, i32
  }
  func.func @transform_12(%arg0: i32) -> (i32, i32) {
    %c0_i32 = arith.constant 0 : i32
    %c0_i32_0 = arith.constant 0 : i32
    %c0_i32_1 = arith.constant 0 : i32
    return %c0_i32, %c0_i32_0 : i32, i32
  }
  func.func @transform_13(%arg0: i32) -> (i32, i32, i32) {
    %c0_i32 = arith.constant 0 : i32
    %c0_i32_0 = arith.constant 0 : i32
    %c0_i32_1 = arith.constant 0 : i32
    %c0_i32_2 = arith.constant 0 : i32
    return %c0_i32, %c0_i32_0, %c0_i32_1 : i32, i32, i32
  }
  func.func @transform_14(%arg0: i32) -> (i32, i32) {
    %c0_i32 = arith.constant 0 : i32
    %c0_i32_0 = arith.constant 0 : i32
    %c0_i32_1 = arith.constant 0 : i32
    return %c0_i32, %c0_i32_0 : i32, i32
  }
  func.func @transform_15(%arg0: i32) -> (i32, i32) {
    %c0_i32 = arith.constant 0 : i32
    %c0_i32_0 = arith.constant 0 : i32
    %c0_i32_1 = arith.constant 0 : i32
    return %c0_i32, %c0_i32_0 : i32, i32
  }
  func.func @transform_16(%arg0: i32) -> (i32, i32) {
    %c0_i32 = arith.constant 0 : i32
    %c0_i32_0 = arith.constant 0 : i32
    %c0_i32_1 = arith.constant 0 : i32
    return %c0_i32, %c0_i32_0 : i32, i32
  }
  func.func @transform_17(%arg0: i32) -> (i32, i32, i32) {
    %c0_i32 = arith.constant 0 : i32
    %c0_i32_0 = arith.constant 0 : i32
    %c0_i32_1 = arith.constant 0 : i32
    %c0_i32_2 = arith.constant 0 : i32
    return %c0_i32, %c0_i32_0, %c0_i32_1 : i32, i32, i32
  }
  func.func @transform_18(%arg0: i32) -> (i32, i32) {
    %c0_i32 = arith.constant 0 : i32
    %c0_i32_0 = arith.constant 0 : i32
    %c0_i32_1 = arith.constant 0 : i32
    return %c0_i32, %c0_i32_0 : i32, i32
  }
  func.func @transform_19(%arg0: i32) -> (i32, i32) {
    %c0_i32 = arith.constant 0 : i32
    %c0_i32_0 = arith.constant 0 : i32
    %c0_i32_1 = arith.constant 0 : i32
    return %c0_i32, %c0_i32_0 : i32, i32
  }
  func.func @transform_20(%arg0: i32) -> (i32, i32) {
    %c0_i32 = arith.constant 0 : i32
    %c0_i32_0 = arith.constant 0 : i32
    %c0_i32_1 = arith.constant 0 : i32
    return %c0_i32, %c0_i32_0 : i32, i32
  }
  func.func @transform_21(%arg0: i32) -> (i32, i32) {
    %c0_i32 = arith.constant 0 : i32
    %c0_i32_0 = arith.constant 0 : i32
    %c0_i32_1 = arith.constant 0 : i32
    return %c0_i32, %c0_i32_0 : i32, i32
  }
  func.func @transform_22(%arg0: i32) -> (i32, i32) {
    %c0_i32 = arith.constant 0 : i32
    %c0_i32_0 = arith.constant 0 : i32
    %c0_i32_1 = arith.constant 0 : i32
    return %c0_i32, %c0_i32_0 : i32, i32
  }
  func.func @transform_23(%arg0: i32) -> (i32, i32) {
    %c0_i32 = arith.constant 0 : i32
    %c0_i32_0 = arith.constant 0 : i32
    %c0_i32_1 = arith.constant 0 : i32
    return %c0_i32, %c0_i32_0 : i32, i32
  }
  func.func @transform_24(%arg0: i32) -> (i32, i32) {
    %c0_i32 = arith.constant 0 : i32
    %c0_i32_0 = arith.constant 0 : i32
    %c0_i32_1 = arith.constant 0 : i32
    return %c0_i32, %c0_i32_0 : i32, i32
  }
  func.func @transform_25(%arg0: i32) -> (i32, i32) {
    %c0_i32 = arith.constant 0 : i32
    %c0_i32_0 = arith.constant 0 : i32
    %c0_i32_1 = arith.constant 0 : i32
    return %c0_i32, %c0_i32_0 : i32, i32
  }
  func.func @transform_26(%arg0: i32) -> (i32, i32) {
    %c0_i32 = arith.constant 0 : i32
    %c0_i32_0 = arith.constant 0 : i32
    %c0_i32_1 = arith.constant 0 : i32
    return %c0_i32, %c0_i32_0 : i32, i32
  }
  func.func @transform_27(%arg0: i32) -> (i32, i32) {
    %c0_i32 = arith.constant 0 : i32
    %c0_i32_0 = arith.constant 0 : i32
    %c0_i32_1 = arith.constant 0 : i32
    return %c0_i32, %c0_i32_0 : i32, i32
  }
  func.func @transform_28(%arg0: i32) -> (i32, i32) {
    %c0_i32 = arith.constant 0 : i32
    %c0_i32_0 = arith.constant 0 : i32
    %c0_i32_1 = arith.constant 0 : i32
    return %c0_i32, %c0_i32_0 : i32, i32
  }
  func.func @transform_29(%arg0: i32) -> (i32, i32) {
    %c0_i32 = arith.constant 0 : i32
    %c0_i32_0 = arith.constant 0 : i32
    %c0_i32_1 = arith.constant 0 : i32
    return %c0_i32, %c0_i32_0 : i32, i32
  }
  func.func @transform_30(%arg0: i32) -> (i32, i32) {
    %c0_i32 = arith.constant 0 : i32
    %c0_i32_0 = arith.constant 0 : i32
    %c0_i32_1 = arith.constant 0 : i32
    return %c0_i32, %c0_i32_0 : i32, i32
  }
  func.func @transform_31(%arg0: i32) -> (i32, i32) {
    %c0_i32 = arith.constant 0 : i32
    %c0_i32_0 = arith.constant 0 : i32
    %c0_i32_1 = arith.constant 0 : i32
    return %c0_i32, %c0_i32_0 : i32, i32
  }
  func.func @transform_32(%arg0: i32) -> (i32, i32) {
    %c0_i32 = arith.constant 0 : i32
    %c0_i32_0 = arith.constant 0 : i32
    %c0_i32_1 = arith.constant 0 : i32
    return %c0_i32, %c0_i32_0 : i32, i32
  }
  func.func @transform_33(%arg0: i32) -> (i32, i32) {
    %c0_i32 = arith.constant 0 : i32
    %c0_i32_0 = arith.constant 0 : i32
    %c0_i32_1 = arith.constant 0 : i32
    return %c0_i32, %c0_i32_0 : i32, i32
  }
  func.func @transform_34(%arg0: i32) -> (i32, i32) {
    %c0_i32 = arith.constant 0 : i32
    %c0_i32_0 = arith.constant 0 : i32
    %c0_i32_1 = arith.constant 0 : i32
    return %c0_i32, %c0_i32_0 : i32, i32
  }
  func.func @transform_35(%arg0: i32) -> (i32, i32) {
    %c0_i32 = arith.constant 0 : i32
    %c0_i32_0 = arith.constant 0 : i32
    %c0_i32_1 = arith.constant 0 : i32
    return %c0_i32, %c0_i32_0 : i32, i32
  }
  func.func @transform_36(%arg0: i32) -> (i32, i32, i32) {
    %c0_i32 = arith.constant 0 : i32
    %c0_i32_0 = arith.constant 0 : i32
    %c0_i32_1 = arith.constant 0 : i32
    return %arg0, %c0_i32, %c0_i32_0 : i32, i32, i32
  }
  func.func @transform_37(%arg0: i32) -> (i32, i32, i32) {
    %c0_i32 = arith.constant 0 : i32
    %c0_i32_0 = arith.constant 0 : i32
    %c0_i32_1 = arith.constant 0 : i32
    return %arg0, %c0_i32, %c0_i32_0 : i32, i32, i32
  }
  func.func @transform_38(%arg0: i32) -> (i32, i32, i32) {
    %c0_i32 = arith.constant 0 : i32
    %c0_i32_0 = arith.constant 0 : i32
    %c0_i32_1 = arith.constant 0 : i32
    return %arg0, %c0_i32, %c0_i32_0 : i32, i32, i32
  }
  func.func @transform_39(%arg0: i32) -> (i32, i32, i32) {
    %c0_i32 = arith.constant 0 : i32
    %c0_i32_0 = arith.constant 0 : i32
    %c0_i32_1 = arith.constant 0 : i32
    return %arg0, %c0_i32, %c0_i32_0 : i32, i32, i32
  }
  func.func @transform_40(%arg0: i32) -> (i32, i32, i32) {
    %c0_i32 = arith.constant 0 : i32
    %c0_i32_0 = arith.constant 0 : i32
    %c0_i32_1 = arith.constant 0 : i32
    return %arg0, %c0_i32, %c0_i32_0 : i32, i32, i32
  }
  func.func @transform_41(%arg0: i32) -> (i32, i32, i32) {
    %c0_i32 = arith.constant 0 : i32
    %c0_i32_0 = arith.constant 0 : i32
    %c0_i32_1 = arith.constant 0 : i32
    return %arg0, %c0_i32, %c0_i32_0 : i32, i32, i32
  }
}

</mosaic_0001>

<llo_original>
// kernel: _lambda_.1
$region0: #{_lambda_.1}
  #allocation0 [shape = 'u32[]', space=smem, size = 0x4, offset = 0x4, fixed_abs, tag = 'smem constant byte address 0x4 - core index']
  #allocation1 [shape = 'u32[144,128]{1,0:T(1,128)}', space=vmem, size = 0x12000, scoped, tag = 'internal scratch']
  %s0 = inlined_call_operand.smem [shape: u32[42], index: -1, kind: input, shape index: {}]
  %s1 = sld [smem:[%s0]]
  %s2 = scalar_lea.smem %s0, 1
  %s3 = sld [smem:[%s2]]
  %s4 = scalar_lea.smem %s0, 2
  %s5 = sld [smem:[%s4]]
  %s6 = scalar_lea.smem %s0, 3
  %s7 = sld [smem:[%s6]]
  %s8 = scalar_lea.smem %s0, 4
  %s9 = sld [smem:[%s8]]
  %s10 = scalar_lea.smem %s0, 5
  %s11 = sld [smem:[%s10]]
  %s12 = scalar_lea.smem %s0, 6
  %s13 = sld [smem:[%s12]]
  %s14 = scalar_lea.smem %s0, 7
  %s15 = sld [smem:[%s14]]
  %s16 = scalar_lea.smem %s0, 8
  %s17 = sld [smem:[%s16]]
  %s18 = scalar_lea.smem %s0, 9
  %s19 = sld [smem:[%s18]]
  %s20 = scalar_lea.smem %s0, 10
  %s21 = sld [smem:[%s20]]
  %s22 = scalar_lea.smem %s0, 11
  %s23 = sld [smem:[%s22]]
  %s24 = scalar_lea.smem %s0, 12
  %s25 = sld [smem:[%s24]]
  %s26 = scalar_lea.smem %s0, 13
  %s27 = sld [smem:[%s26]]
  %s28 = scalar_lea.smem %s0, 14
  %s29 = sld [smem:[%s28]]
  %s30 = scalar_lea.smem %s0, 15
  %s31 = sld [smem:[%s30]]
  %s32 = scalar_lea.smem %s0, 16
  %s33 = sld [smem:[%s32]]
  %s34 = scalar_lea.smem %s0, 17
  %s35 = sld [smem:[%s34]]
  %s36 = scalar_lea.smem %s0, 18
  %s37 = sld [smem:[%s36]]
  %s38 = scalar_lea.smem %s0, 19
  %s39 = sld [smem:[%s38]]
  %s40 = scalar_lea.smem %s0, 20
  %s41 = sld [smem:[%s40]]
  %s42 = scalar_lea.smem %s0, 21
  %s43 = sld [smem:[%s42]]
  %s44 = scalar_lea.smem %s0, 22
  %s45 = sld [smem:[%s44]]
  %s46 = scalar_lea.smem %s0, 23
  %s47 = sld [smem:[%s46]]
  %s48 = scalar_lea.smem %s0, 24
  %s49 = sld [smem:[%s48]]
  %s50 = scalar_lea.smem %s0, 25
  %s51 = sld [smem:[%s50]]
  %s52 = scalar_lea.smem %s0, 26
  %s53 = sld [smem:[%s52]]
  %s54 = scalar_lea.smem %s0, 27
  %s55 = sld [smem:[%s54]]
  %s56 = scalar_lea.smem %s0, 28
  %s57 = sld [smem:[%s56]]
  %s58 = scalar_lea.smem %s0, 29
  %s59 = sld [smem:[%s58]]
  %s60 = scalar_lea.smem %s0, 30
  %s61 = sld [smem:[%s60]]
  %s62 = scalar_lea.smem %s0, 31
  %s63 = sld [smem:[%s62]]
  %s64 = scalar_lea.smem %s0, 32
  %s65 = sld [smem:[%s64]]
  %s66 = scalar_lea.smem %s0, 33
  %s67 = sld [smem:[%s66]]
  %s68 = scalar_lea.smem %s0, 34
  %s69 = sld [smem:[%s68]]
  %s70 = scalar_lea.smem %s0, 35
  %s71 = sld [smem:[%s70]]
  %s72 = scalar_lea.smem %s0, 36
  %s73 = sld [smem:[%s72]]
  %s74 = scalar_lea.smem %s0, 37
  %s75 = sld [smem:[%s74]]
  %s76 = scalar_lea.smem %s0, 38
  %s77 = sld [smem:[%s76]]
  %s78 = scalar_lea.smem %s0, 39
  %s79 = sld [smem:[%s78]]
  %s80 = scalar_lea.smem %s0, 40
  %s81 = sld [smem:[%s80]]
  %s82 = scalar_lea.smem %s0, 41
  %s83 = sld [smem:[%s82]]
  %84 = xla_tuple %s73, %s75, %s77, %s79, %s81, %s83
  %s85 = sld [smem:[#allocation0]]
  $region217: #{_lambda_.1} parent=0
    _
  %s87 = ssub.s32 1, %s85
  %s88 = scalar_select 0, %s87, %s85
  loop: start=0, step=1, limit=4
  $region2: #{_lambda_.1} parent=0 // loop_pre_header
    _
  $region3: #{_lambda_.1} parent=0 // loop_header
    %s90 = sphi 0, %s94
    %p91 = scmp.ge.s32.totalorder %s90, 4
    %s100 = sphi 0, %s102
    %s103 = sphi 0, %s100
    %s104 = sphi 0, %s103
    %s120 = sphi 0, %s104
    %s124 = sphi 0, %s124
    %s126 = sphi 0, %s124
    %s127 = sphi 0, %s126
    %s141 = sphi 0, %s127
    %s145 = sphi 0, %s145
    %s147 = sphi 0, %s145
    %s148 = sphi 0, %s147
    %s162 = sphi 0, %s148
    %s166 = sphi 0, %s166
    %s168 = sphi 0, %s166
    %s169 = sphi 0, %s168
    %s183 = sphi 0, %s169
    %s187 = sphi 0, %s187
    %s189 = sphi 0, %s187
    %s190 = sphi 0, %s189
    %s204 = sphi 0, %s190
    %s208 = sphi 0, %s208
    %s210 = sphi 0, %s208
    %s211 = sphi 0, %s210
    %s225 = sphi 0, %s211
    %s229 = sphi 0, %s229
    %s231 = sphi 0, %s229
    %s232 = sphi 0, %s231
    %s246 = sphi 0, %s232
    %s250 = sphi 0, %s250
    %s252 = sphi 0, %s250
    %s253 = sphi 0, %s252
    %s267 = sphi 0, %s253
    %s271 = sphi 0, %s271
    %s273 = sphi 0, %s271
    %s274 = sphi 0, %s273
    %s288 = sphi 0, %s274
    %s292 = sphi 0, %s292
    %s294 = sphi 0, %s292
    %s295 = sphi 0, %s294
    %s309 = sphi 0, %s295
    %s313 = sphi 0, %s313
    %s315 = sphi 0, %s313
    %s316 = sphi 0, %s315
    %s330 = sphi 0, %s316
    %s334 = sphi 0, %s334
    %s336 = sphi 0, %s334
    %s337 = sphi 0, %s336
    %s351 = sphi 0, %s337
    %s355 = sphi 0, %s355
    %s357 = sphi 0, %s355
    %s358 = sphi 0, %s357
    %s372 = sphi 0, %s358
    %s376 = sphi 0, %s376
    %s378 = sphi 0, %s376
    %s379 = sphi 0, %s378
    %s393 = sphi 0, %s379
    %s397 = sphi 0, %s397
    %s399 = sphi 0, %s397
    %s400 = sphi 0, %s399
    %s414 = sphi 0, %s400
    %s418 = sphi 0, %s418
    %s420 = sphi 0, %s418
    %s421 = sphi 0, %s420
    %s435 = sphi 0, %s421
    %s439 = sphi 0, %s439
    %s441 = sphi 0, %s439
    %s442 = sphi 0, %s441
    %s456 = sphi 0, %s442
    %s460 = sphi 0, %s460
    %s462 = sphi 0, %s460
    %s463 = sphi 0, %s462
    %s477 = sphi 0, %s463
    %s481 = sphi 0, %s481
    %s483 = sphi 0, %s481
    %s484 = sphi 0, %s483
    %s498 = sphi 0, %s484
    %s502 = sphi 0, %s502
    %s504 = sphi 0, %s502
    %s505 = sphi 0, %s504
    %s519 = sphi 0, %s505
    %s523 = sphi 0, %s523
    %s525 = sphi 0, %s523
    %s526 = sphi 0, %s525
    %s540 = sphi 0, %s526
    %s544 = sphi 0, %s544
    %s546 = sphi 0, %s544
    %s547 = sphi 0, %s546
    %s561 = sphi 0, %s547
    %s565 = sphi 0, %s565
    %s567 = sphi 0, %s565
    %s568 = sphi 0, %s567
    %s582 = sphi 0, %s568
    %s586 = sphi 0, %s586
    %s588 = sphi 0, %s586
    %s589 = sphi 0, %s588
    %s603 = sphi 0, %s589
    %s607 = sphi 0, %s607
    %s609 = sphi 0, %s607
    %s610 = sphi 0, %s609
    %s624 = sphi 0, %s610
    %s628 = sphi 0, %s628
    %s630 = sphi 0, %s628
    %s631 = sphi 0, %s630
    %s645 = sphi 0, %s631
    %s649 = sphi 0, %s649
    %s651 = sphi 0, %s649
    %s652 = sphi 0, %s651
    %s666 = sphi 0, %s652
    %s670 = sphi 0, %s670
    %s672 = sphi 0, %s670
    %s673 = sphi 0, %s672
    %s687 = sphi 0, %s673
    %s691 = sphi 0, %s691
    %s693 = sphi 0, %s691
    %s694 = sphi 0, %s693
    %s708 = sphi 0, %s694
    %s712 = sphi 0, %s712
    %s714 = sphi 0, %s712
    %s715 = sphi 0, %s714
    %s729 = sphi 0, %s715
    %s733 = sphi 0, %s733
    %s735 = sphi 0, %s733
    %s736 = sphi 0, %s735
    %s750 = sphi 0, %s736
    %s754 = sphi 0, %s754
    %s756 = sphi 0, %s754
    %s757 = sphi 0, %s756
    %s771 = sphi 0, %s757
    %s775 = sphi 0, %s775
    %s777 = sphi 0, %s775
    %s778 = sphi 0, %s777
    %s792 = sphi 0, %s778
    %s796 = sphi 0, %s796
    %s798 = sphi 0, %s796
    %s799 = sphi 0, %s798
    %s813 = sphi 0, %s799
    %s817 = sphi 0, %s817
    %s819 = sphi 0, %s817
    %s820 = sphi 0, %s819
    %s834 = sphi 0, %s820
    %s838 = sphi 0, %s838
    %s840 = sphi 0, %s838
    %s841 = sphi 0, %s840
    %s855 = sphi 0, %s841
    %s861 = sphi 0, %s863
    %s864 = sphi 0, %s861
    %s865 = sphi 0, %s864
    %s881 = sphi 0, %s865
    %s887 = sphi 0, %s889
    %s890 = sphi 0, %s887
    %s891 = sphi 0, %s890
    %s907 = sphi 0, %s891
    %s913 = sphi 0, %s915
    %s916 = sphi 0, %s913
    %s917 = sphi 0, %s916
    %s933 = sphi 0, %s917
    %s939 = sphi 0, %s941
    %s942 = sphi 0, %s939
    %s943 = sphi 0, %s942
    %s959 = sphi 0, %s943
    %s965 = sphi 0, %s967
    %s968 = sphi 0, %s965
    %s969 = sphi 0, %s968
    %s985 = sphi 0, %s969
    %s991 = sphi 0, %s993
    %s994 = sphi 0, %s991
    %s995 = sphi 0, %s994
    %s1011 = sphi 0, %s995
  $region4: #{_lambda_.1} parent=0 // loop_header_branch
    %93 = sbr.rel (%p91) target = $region8
  $region5: #{_lambda_.1} parent=0 // loop_body
    %s95 = ssub.s32 %s90, 1
    %s96 = ssub.s32 %s90, 2
    %s97 = sadd.s32 %s90, 1
    %s98 = ssub.s32 %s90, %s97
    %p99 = scmp.eq.s32.totalorder %s98, 0
    %s101 = sadd.s32 %s100, 1
    %s102 = scalar_select %p99, %s100, %s101
    %p105 = pneg %p99
    %p106 = scmp.eq.s32.totalorder %s90, 1
    %p107 = por %p105, %p106
    %p108 = scmp.ne.s32.totalorder %s100, %s103
    %p109 = scmp.eq.s32.totalorder %s90, 0
    %p110 = por %p108, %p109
    %p111 = scmp.ne.s32.totalorder %s100, %s103
    %p112 = scmp.eq.s32.totalorder %s95, 1
    %p113 = por %p111, %p112
    %p114 = scmp.ne.s32.totalorder %s103, %s104
    %p115 = scmp.eq.s32.totalorder %s95, 0
    %p116 = por %p114, %p115
    %p117 = scmp.ne.s32.totalorder %s103, %s104
    %p118 = scmp.eq.s32.totalorder %s96, 1
    %p119 = por %p117, %p118
    %p121 = scmp.ne.s32.totalorder %s104, %s120
    %p122 = scmp.eq.s32.totalorder %s96, 0
    %p123 = por %p121, %p122
    %s125 = sadd.s32 %s124, 1
    %p128 = scmp.eq.s32.totalorder %s90, 1
    %p129 = scmp.ne.s32.totalorder %s124, %s126
    %p130 = scmp.eq.s32.totalorder %s90, 0
    %p131 = por %p129, %p130
    %p132 = scmp.ne.s32.totalorder %s124, %s126
    %p133 = scmp.eq.s32.totalorder %s95, 1
    %p134 = por %p132, %p133
    %p135 = scmp.ne.s32.totalorder %s126, %s127
    %p136 = scmp.eq.s32.totalorder %s95, 0
    %p137 = por %p135, %p136
    %p138 = scmp.ne.s32.totalorder %s126, %s127
    %p139 = scmp.eq.s32.totalorder %s96, 1
    %p140 = por %p138, %p139
    %p142 = scmp.ne.s32.totalorder %s127, %s141
    %p143 = scmp.eq.s32.totalorder %s96, 0
    %p144 = por %p142, %p143
    %s146 = sadd.s32 %s145, 1
    %p149 = scmp.eq.s32.totalorder %s90, 1
    %p150 = scmp.ne.s32.totalorder %s145, %s147
    %p151 = scmp.eq.s32.totalorder %s90, 0
    %p152 = por %p150, %p151
    %p153 = scmp.ne.s32.totalorder %s145, %s147
    %p154 = scmp.eq.s32.totalorder %s95, 1
    %p155 = por %p153, %p154
    %p156 = scmp.ne.s32.totalorder %s147, %s148
    %p157 = scmp.eq.s32.totalorder %s95, 0
    %p158 = por %p156, %p157
    %p159 = scmp.ne.s32.totalorder %s147, %s148
    %p160 = scmp.eq.s32.totalorder %s96, 1
    %p161 = por %p159, %p160
    %p163 = scmp.ne.s32.totalorder %s148, %s162
    %p164 = scmp.eq.s32.totalorder %s96, 0
    %p165 = por %p163, %p164
    %s167 = sadd.s32 %s166, 1
    %p170 = scmp.eq.s32.totalorder %s90, 1
    %p171 = scmp.ne.s32.totalorder %s166, %s168
    %p172 = scmp.eq.s32.totalorder %s90, 0
    %p173 = por %p171, %p172
    %p174 = scmp.ne.s32.totalorder %s166, %s168
    %p175 = scmp.eq.s32.totalorder %s95, 1
    %p176 = por %p174, %p175
    %p177 = scmp.ne.s32.totalorder %s168, %s169
    %p178 = scmp.eq.s32.totalorder %s95, 0
    %p179 = por %p177, %p178
    %p180 = scmp.ne.s32.totalorder %s168, %s169
    %p181 = scmp.eq.s32.totalorder %s96, 1
    %p182 = por %p180, %p181
    %p184 = scmp.ne.s32.totalorder %s169, %s183
    %p185 = scmp.eq.s32.totalorder %s96, 0
    %p186 = por %p184, %p185
    %s188 = sadd.s32 %s187, 1
    %p191 = scmp.eq.s32.totalorder %s90, 1
    %p192 = scmp.ne.s32.totalorder %s187, %s189
    %p193 = scmp.eq.s32.totalorder %s90, 0
    %p194 = por %p192, %p193
    %p195 = scmp.ne.s32.totalorder %s187, %s189
    %p196 = scmp.eq.s32.totalorder %s95, 1
    %p197 = por %p195, %p196
    %p198 = scmp.ne.s32.totalorder %s189, %s190
    %p199 = scmp.eq.s32.totalorder %s95, 0
    %p200 = por %p198, %p199
    %p201 = scmp.ne.s32.totalorder %s189, %s190
    %p202 = scmp.eq.s32.totalorder %s96, 1
    %p203 = por %p201, %p202
    %p205 = scmp.ne.s32.totalorder %s190, %s204
    %p206 = scmp.eq.s32.totalorder %s96, 0
    %p207 = por %p205, %p206
    %s209 = sadd.s32 %s208, 1
    %p212 = scmp.eq.s32.totalorder %s90, 1
    %p213 = scmp.ne.s32.totalorder %s208, %s210
    %p214 = scmp.eq.s32.totalorder %s90, 0
    %p215 = por %p213, %p214
    %p216 = scmp.ne.s32.totalorder %s208, %s210
    %p217 = scmp.eq.s32.totalorder %s95, 1
    %p218 = por %p216, %p217
    %p219 = scmp.ne.s32.totalorder %s210, %s211
    %p220 = scmp.eq.s32.totalorder %s95, 0
    %p221 = por %p219, %p220
    %p222 = scmp.ne.s32.totalorder %s210, %s211
    %p223 = scmp.eq.s32.totalorder %s96, 1
    %p224 = por %p222, %p223
    %p226 = scmp.ne.s32.totalorder %s211, %s225
    %p227 = scmp.eq.s32.totalorder %s96, 0
    %p228 = por %p226, %p227
    %s230 = sadd.s32 %s229, 1
    %p233 = scmp.eq.s32.totalorder %s90, 1
    %p234 = scmp.ne.s32.totalorder %s229, %s231
    %p235 = scmp.eq.s32.totalorder %s90, 0
    %p236 = por %p234, %p235
    %p237 = scmp.ne.s32.totalorder %s229, %s231
    %p238 = scmp.eq.s32.totalorder %s95, 1
    %p239 = por %p237, %p238
    %p240 = scmp.ne.s32.totalorder %s231, %s232
    %p241 = scmp.eq.s32.totalorder %s95, 0
    %p242 = por %p240, %p241
    %p243 = scmp.ne.s32.totalorder %s231, %s232
    %p244 = scmp.eq.s32.totalorder %s96, 1
    %p245 = por %p243, %p244
    %p247 = scmp.ne.s32.totalorder %s232, %s246
    %p248 = scmp.eq.s32.totalorder %s96, 0
    %p249 = por %p247, %p248
    %s251 = sadd.s32 %s250, 1
    %p254 = scmp.eq.s32.totalorder %s90, 1
    %p255 = scmp.ne.s32.totalorder %s250, %s252
    %p256 = scmp.eq.s32.totalorder %s90, 0
    %p257 = por %p255, %p256
    %p258 = scmp.ne.s32.totalorder %s250, %s252
    %p259 = scmp.eq.s32.totalorder %s95, 1
    %p260 = por %p258, %p259
    %p261 = scmp.ne.s32.totalorder %s252, %s253
    %p262 = scmp.eq.s32.totalorder %s95, 0
    %p263 = por %p261, %p262
    %p264 = scmp.ne.s32.totalorder %s252, %s253
    %p265 = scmp.eq.s32.totalorder %s96, 1
    %p266 = por %p264, %p265
    %p268 = scmp.ne.s32.totalorder %s253, %s267
    %p269 = scmp.eq.s32.totalorder %s96, 0
    %p270 = por %p268, %p269
    %s272 = sadd.s32 %s271, 1
    %p275 = scmp.eq.s32.totalorder %s90, 1
    %p276 = scmp.ne.s32.totalorder %s271, %s273
    %p277 = scmp.eq.s32.totalorder %s90, 0
    %p278 = por %p276, %p277
    %p279 = scmp.ne.s32.totalorder %s271, %s273
    %p280 = scmp.eq.s32.totalorder %s95, 1
    %p281 = por %p279, %p280
    %p282 = scmp.ne.s32.totalorder %s273, %s274
    %p283 = scmp.eq.s32.totalorder %s95, 0
    %p284 = por %p282, %p283
    %p285 = scmp.ne.s32.totalorder %s273, %s274
    %p286 = scmp.eq.s32.totalorder %s96, 1
    %p287 = por %p285, %p286
    %p289 = scmp.ne.s32.totalorder %s274, %s288
    %p290 = scmp.eq.s32.totalorder %s96, 0
    %p291 = por %p289, %p290
    %s293 = sadd.s32 %s292, 1
    %p296 = scmp.eq.s32.totalorder %s90, 1
    %p297 = scmp.ne.s32.totalorder %s292, %s294
    %p298 = scmp.eq.s32.totalorder %s90, 0
    %p299 = por %p297, %p298
    %p300 = scmp.ne.s32.totalorder %s292, %s294
    %p301 = scmp.eq.s32.totalorder %s95, 1
    %p302 = por %p300, %p301
    %p303 = scmp.ne.s32.totalorder %s294, %s295
    %p304 = scmp.eq.s32.totalorder %s95, 0
    %p305 = por %p303, %p304
    %p306 = scmp.ne.s32.totalorder %s294, %s295
    %p307 = scmp.eq.s32.totalorder %s96, 1
    %p308 = por %p306, %p307
    %p310 = scmp.ne.s32.totalorder %s295, %s309
    %p311 = scmp.eq.s32.totalorder %s96, 0
    %p312 = por %p310, %p311
    %s314 = sadd.s32 %s313, 1
    %p317 = scmp.eq.s32.totalorder %s90, 1
    %p318 = scmp.ne.s32.totalorder %s313, %s315
    %p319 = scmp.eq.s32.totalorder %s90, 0
    %p320 = por %p318, %p319
    %p321 = scmp.ne.s32.totalorder %s313, %s315
    %p322 = scmp.eq.s32.totalorder %s95, 1
    %p323 = por %p321, %p322
    %p324 = scmp.ne.s32.totalorder %s315, %s316
    %p325 = scmp.eq.s32.totalorder %s95, 0
    %p326 = por %p324, %p325
    %p327 = scmp.ne.s32.totalorder %s315, %s316
    %p328 = scmp.eq.s32.totalorder %s96, 1
    %p329 = por %p327, %p328
    %p331 = scmp.ne.s32.totalorder %s316, %s330
    %p332 = scmp.eq.s32.totalorder %s96, 0
    %p333 = por %p331, %p332
    %s335 = sadd.s32 %s334, 1
    %p338 = scmp.eq.s32.totalorder %s90, 1
    %p339 = scmp.ne.s32.totalorder %s334, %s336
    %p340 = scmp.eq.s32.totalorder %s90, 0
    %p341 = por %p339, %p340
    %p342 = scmp.ne.s32.totalorder %s334, %s336
    %p343 = scmp.eq.s32.totalorder %s95, 1
    %p344 = por %p342, %p343
    %p345 = scmp.ne.s32.totalorder %s336, %s337
    %p346 = scmp.eq.s32.totalorder %s95, 0
    %p347 = por %p345, %p346
    %p348 = scmp.ne.s32.totalorder %s336, %s337
    %p349 = scmp.eq.s32.totalorder %s96, 1
    %p350 = por %p348, %p349
    %p352 = scmp.ne.s32.totalorder %s337, %s351
    %p353 = scmp.eq.s32.totalorder %s96, 0
    %p354 = por %p352, %p353
    %s356 = sadd.s32 %s355, 1
    %p359 = scmp.eq.s32.totalorder %s90, 1
    %p360 = scmp.ne.s32.totalorder %s355, %s357
    %p361 = scmp.eq.s32.totalorder %s90, 0
    %p362 = por %p360, %p361
    %p363 = scmp.ne.s32.totalorder %s355, %s357
    %p364 = scmp.eq.s32.totalorder %s95, 1
    %p365 = por %p363, %p364
    %p366 = scmp.ne.s32.totalorder %s357, %s358
    %p367 = scmp.eq.s32.totalorder %s95, 0
    %p368 = por %p366, %p367
    %p369 = scmp.ne.s32.totalorder %s357, %s358
    %p370 = scmp.eq.s32.totalorder %s96, 1
    %p371 = por %p369, %p370
    %p373 = scmp.ne.s32.totalorder %s358, %s372
    %p374 = scmp.eq.s32.totalorder %s96, 0
    %p375 = por %p373, %p374
    %s377 = sadd.s32 %s376, 1
    %p380 = scmp.eq.s32.totalorder %s90, 1
    %p381 = scmp.ne.s32.totalorder %s376, %s378
    %p382 = scmp.eq.s32.totalorder %s90, 0
    %p383 = por %p381, %p382
    %p384 = scmp.ne.s32.totalorder %s376, %s378
    %p385 = scmp.eq.s32.totalorder %s95, 1
    %p386 = por %p384, %p385
    %p387 = scmp.ne.s32.totalorder %s378, %s379
    %p388 = scmp.eq.s32.totalorder %s95, 0
    %p389 = por %p387, %p388
    %p390 = scmp.ne.s32.totalorder %s378, %s379
    %p391 = scmp.eq.s32.totalorder %s96, 1
    %p392 = por %p390, %p391
    %p394 = scmp.ne.s32.totalorder %s379, %s393
    %p395 = scmp.eq.s32.totalorder %s96, 0
    %p396 = por %p394, %p395
    %s398 = sadd.s32 %s397, 1
    %p401 = scmp.eq.s32.totalorder %s90, 1
    %p402 = scmp.ne.s32.totalorder %s397, %s399
    %p403 = scmp.eq.s32.totalorder %s90, 0
    %p404 = por %p402, %p403
    %p405 = scmp.ne.s32.totalorder %s397, %s399
    %p406 = scmp.eq.s32.totalorder %s95, 1
    %p407 = por %p405, %p406
    %p408 = scmp.ne.s32.totalorder %s399, %s400
    %p409 = scmp.eq.s32.totalorder %s95, 0
    %p410 = por %p408, %p409
    %p411 = scmp.ne.s32.totalorder %s399, %s400
    %p412 = scmp.eq.s32.totalorder %s96, 1
    %p413 = por %p411, %p412
    %p415 = scmp.ne.s32.totalorder %s400, %s414
    %p416 = scmp.eq.s32.totalorder %s96, 0
    %p417 = por %p415, %p416
    %s419 = sadd.s32 %s418, 1
    %p422 = scmp.eq.s32.totalorder %s90, 1
    %p423 = scmp.ne.s32.totalorder %s418, %s420
    %p424 = scmp.eq.s32.totalorder %s90, 0
    %p425 = por %p423, %p424
    %p426 = scmp.ne.s32.totalorder %s418, %s420
    %p427 = scmp.eq.s32.totalorder %s95, 1
    %p428 = por %p426, %p427
    %p429 = scmp.ne.s32.totalorder %s420, %s421
    %p430 = scmp.eq.s32.totalorder %s95, 0
    %p431 = por %p429, %p430
    %p432 = scmp.ne.s32.totalorder %s420, %s421
    %p433 = scmp.eq.s32.totalorder %s96, 1
    %p434 = por %p432, %p433
    %p436 = scmp.ne.s32.totalorder %s421, %s435
    %p437 = scmp.eq.s32.totalorder %s96, 0
    %p438 = por %p436, %p437
    %s440 = sadd.s32 %s439, 1
    %p443 = scmp.eq.s32.totalorder %s90, 1
    %p444 = scmp.ne.s32.totalorder %s439, %s441
    %p445 = scmp.eq.s32.totalorder %s90, 0
    %p446 = por %p444, %p445
    %p447 = scmp.ne.s32.totalorder %s439, %s441
    %p448 = scmp.eq.s32.totalorder %s95, 1
    %p449 = por %p447, %p448
    %p450 = scmp.ne.s32.totalorder %s441, %s442
    %p451 = scmp.eq.s32.totalorder %s95, 0
    %p452 = por %p450, %p451
    %p453 = scmp.ne.s32.totalorder %s441, %s442
    %p454 = scmp.eq.s32.totalorder %s96, 1
    %p455 = por %p453, %p454
    %p457 = scmp.ne.s32.totalorder %s442, %s456
    %p458 = scmp.eq.s32.totalorder %s96, 0
    %p459 = por %p457, %p458
    %s461 = sadd.s32 %s460, 1
    %p464 = scmp.eq.s32.totalorder %s90, 1
    %p465 = scmp.ne.s32.totalorder %s460, %s462
    %p466 = scmp.eq.s32.totalorder %s90, 0
    %p467 = por %p465, %p466
    %p468 = scmp.ne.s32.totalorder %s460, %s462
    %p469 = scmp.eq.s32.totalorder %s95, 1
    %p470 = por %p468, %p469
    %p471 = scmp.ne.s32.totalorder %s462, %s463
    %p472 = scmp.eq.s32.totalorder %s95, 0
    %p473 = por %p471, %p472
    %p474 = scmp.ne.s32.totalorder %s462, %s463
    %p475 = scmp.eq.s32.totalorder %s96, 1
    %p476 = por %p474, %p475
    %p478 = scmp.ne.s32.totalorder %s463, %s477
    %p479 = scmp.eq.s32.totalorder %s96, 0
    %p480 = por %p478, %p479
    %s482 = sadd.s32 %s481, 1
    %p485 = scmp.eq.s32.totalorder %s90, 1
    %p486 = scmp.ne.s32.totalorder %s481, %s483
    %p487 = scmp.eq.s32.totalorder %s90, 0
    %p488 = por %p486, %p487
    %p489 = scmp.ne.s32.totalorder %s481, %s483
    %p490 = scmp.eq.s32.totalorder %s95, 1
    %p491 = por %p489, %p490
    %p492 = scmp.ne.s32.totalorder %s483, %s484
    %p493 = scmp.eq.s32.totalorder %s95, 0
    %p494 = por %p492, %p493
    %p495 = scmp.ne.s32.totalorder %s483, %s484
    %p496 = scmp.eq.s32.totalorder %s96, 1
    %p497 = por %p495, %p496
    %p499 = scmp.ne.s32.totalorder %s484, %s498
    %p500 = scmp.eq.s32.totalorder %s96, 0
    %p501 = por %p499, %p500
    %s503 = sadd.s32 %s502, 1
    %p506 = scmp.eq.s32.totalorder %s90, 1
    %p507 = scmp.ne.s32.totalorder %s502, %s504
    %p508 = scmp.eq.s32.totalorder %s90, 0
    %p509 = por %p507, %p508
    %p510 = scmp.ne.s32.totalorder %s502, %s504
    %p511 = scmp.eq.s32.totalorder %s95, 1
    %p512 = por %p510, %p511
    %p513 = scmp.ne.s32.totalorder %s504, %s505
    %p514 = scmp.eq.s32.totalorder %s95, 0
    %p515 = por %p513, %p514
    %p516 = scmp.ne.s32.totalorder %s504, %s505
    %p517 = scmp.eq.s32.totalorder %s96, 1
    %p518 = por %p516, %p517
    %p520 = scmp.ne.s32.totalorder %s505, %s519
    %p521 = scmp.eq.s32.totalorder %s96, 0
    %p522 = por %p520, %p521
    %s524 = sadd.s32 %s523, 1
    %p527 = scmp.eq.s32.totalorder %s90, 1
    %p528 = scmp.ne.s32.totalorder %s523, %s525
    %p529 = scmp.eq.s32.totalorder %s90, 0
    %p530 = por %p528, %p529
    %p531 = scmp.ne.s32.totalorder %s523, %s525
    %p532 = scmp.eq.s32.totalorder %s95, 1
    %p533 = por %p531, %p532
    %p534 = scmp.ne.s32.totalorder %s525, %s526
    %p535 = scmp.eq.s32.totalorder %s95, 0
    %p536 = por %p534, %p535
    %p537 = scmp.ne.s32.totalorder %s525, %s526
    %p538 = scmp.eq.s32.totalorder %s96, 1
    %p539 = por %p537, %p538
    %p541 = scmp.ne.s32.totalorder %s526, %s540
    %p542 = scmp.eq.s32.totalorder %s96, 0
    %p543 = por %p541, %p542
    %s545 = sadd.s32 %s544, 1
    %p548 = scmp.eq.s32.totalorder %s90, 1
    %p549 = scmp.ne.s32.totalorder %s544, %s546
    %p550 = scmp.eq.s32.totalorder %s90, 0
    %p551 = por %p549, %p550
    %p552 = scmp.ne.s32.totalorder %s544, %s546
    %p553 = scmp.eq.s32.totalorder %s95, 1
    %p554 = por %p552, %p553
    %p555 = scmp.ne.s32.totalorder %s546, %s547
    %p556 = scmp.eq.s32.totalorder %s95, 0
    %p557 = por %p555, %p556
    %p558 = scmp.ne.s32.totalorder %s546, %s547
    %p559 = scmp.eq.s32.totalorder %s96, 1
    %p560 = por %p558, %p559
    %p562 = scmp.ne.s32.totalorder %s547, %s561
    %p563 = scmp.eq.s32.totalorder %s96, 0
    %p564 = por %p562, %p563
    %s566 = sadd.s32 %s565, 1
    %p569 = scmp.eq.s32.totalorder %s90, 1
    %p570 = scmp.ne.s32.totalorder %s565, %s567
    %p571 = scmp.eq.s32.totalorder %s90, 0
    %p572 = por %p570, %p571
    %p573 = scmp.ne.s32.totalorder %s565, %s567
    %p574 = scmp.eq.s32.totalorder %s95, 1
    %p575 = por %p573, %p574
    %p576 = scmp.ne.s32.totalorder %s567, %s568
    %p577 = scmp.eq.s32.totalorder %s95, 0
    %p578 = por %p576, %p577
    %p579 = scmp.ne.s32.totalorder %s567, %s568
    %p580 = scmp.eq.s32.totalorder %s96, 1
    %p581 = por %p579, %p580
    %p583 = scmp.ne.s32.totalorder %s568, %s582
    %p584 = scmp.eq.s32.totalorder %s96, 0
    %p585 = por %p583, %p584
    %s587 = sadd.s32 %s586, 1
    %p590 = scmp.eq.s32.totalorder %s90, 1
    %p591 = scmp.ne.s32.totalorder %s586, %s588
    %p592 = scmp.eq.s32.totalorder %s90, 0
    %p593 = por %p591, %p592
    %p594 = scmp.ne.s32.totalorder %s586, %s588
    %p595 = scmp.eq.s32.totalorder %s95, 1
    %p596 = por %p594, %p595
    %p597 = scmp.ne.s32.totalorder %s588, %s589
    %p598 = scmp.eq.s32.totalorder %s95, 0
    %p599 = por %p597, %p598
    %p600 = scmp.ne.s32.totalorder %s588, %s589
    %p601 = scmp.eq.s32.totalorder %s96, 1
    %p602 = por %p600, %p601
    %p604 = scmp.ne.s32.totalorder %s589, %s603
    %p605 = scmp.eq.s32.totalorder %s96, 0
    %p606 = por %p604, %p605
    %s608 = sadd.s32 %s607, 1
    %p611 = scmp.eq.s32.totalorder %s90, 1
    %p612 = scmp.ne.s32.totalorder %s607, %s609
    %p613 = scmp.eq.s32.totalorder %s90, 0
    %p614 = por %p612, %p613
    %p615 = scmp.ne.s32.totalorder %s607, %s609
    %p616 = scmp.eq.s32.totalorder %s95, 1
    %p617 = por %p615, %p616
    %p618 = scmp.ne.s32.totalorder %s609, %s610
    %p619 = scmp.eq.s32.totalorder %s95, 0
    %p620 = por %p618, %p619
    %p621 = scmp.ne.s32.totalorder %s609, %s610
    %p622 = scmp.eq.s32.totalorder %s96, 1
    %p623 = por %p621, %p622
    %p625 = scmp.ne.s32.totalorder %s610, %s624
    %p626 = scmp.eq.s32.totalorder %s96, 0
    %p627 = por %p625, %p626
    %s629 = sadd.s32 %s628, 1
    %p632 = scmp.eq.s32.totalorder %s90, 1
    %p633 = scmp.ne.s32.totalorder %s628, %s630
    %p634 = scmp.eq.s32.totalorder %s90, 0
    %p635 = por %p633, %p634
    %p636 = scmp.ne.s32.totalorder %s628, %s630
    %p637 = scmp.eq.s32.totalorder %s95, 1
    %p638 = por %p636, %p637
    %p639 = scmp.ne.s32.totalorder %s630, %s631
    %p640 = scmp.eq.s32.totalorder %s95, 0
    %p641 = por %p639, %p640
    %p642 = scmp.ne.s32.totalorder %s630, %s631
    %p643 = scmp.eq.s32.totalorder %s96, 1
    %p644 = por %p642, %p643
    %p646 = scmp.ne.s32.totalorder %s631, %s645
    %p647 = scmp.eq.s32.totalorder %s96, 0
    %p648 = por %p646, %p647
    %s650 = sadd.s32 %s649, 1
    %p653 = scmp.eq.s32.totalorder %s90, 1
    %p654 = scmp.ne.s32.totalorder %s649, %s651
    %p655 = scmp.eq.s32.totalorder %s90, 0
    %p656 = por %p654, %p655
    %p657 = scmp.ne.s32.totalorder %s649, %s651
    %p658 = scmp.eq.s32.totalorder %s95, 1
    %p659 = por %p657, %p658
    %p660 = scmp.ne.s32.totalorder %s651, %s652
    %p661 = scmp.eq.s32.totalorder %s95, 0
    %p662 = por %p660, %p661
    %p663 = scmp.ne.s32.totalorder %s651, %s652
    %p664 = scmp.eq.s32.totalorder %s96, 1
    %p665 = por %p663, %p664
    %p667 = scmp.ne.s32.totalorder %s652, %s666
    %p668 = scmp.eq.s32.totalorder %s96, 0
    %p669 = por %p667, %p668
    %s671 = sadd.s32 %s670, 1
    %p674 = scmp.eq.s32.totalorder %s90, 1
    %p675 = scmp.ne.s32.totalorder %s670, %s672
    %p676 = scmp.eq.s32.totalorder %s90, 0
    %p677 = por %p675, %p676
    %p678 = scmp.ne.s32.totalorder %s670, %s672
    %p679 = scmp.eq.s32.totalorder %s95, 1
    %p680 = por %p678, %p679
    %p681 = scmp.ne.s32.totalorder %s672, %s673
    %p682 = scmp.eq.s32.totalorder %s95, 0
    %p683 = por %p681, %p682
    %p684 = scmp.ne.s32.totalorder %s672, %s673
    %p685 = scmp.eq.s32.totalorder %s96, 1
    %p686 = por %p684, %p685
    %p688 = scmp.ne.s32.totalorder %s673, %s687
    %p689 = scmp.eq.s32.totalorder %s96, 0
    %p690 = por %p688, %p689
    %s692 = sadd.s32 %s691, 1
    %p695 = scmp.eq.s32.totalorder %s90, 1
    %p696 = scmp.ne.s32.totalorder %s691, %s693
    %p697 = scmp.eq.s32.totalorder %s90, 0
    %p698 = por %p696, %p697
    %p699 = scmp.ne.s32.totalorder %s691, %s693
    %p700 = scmp.eq.s32.totalorder %s95, 1
    %p701 = por %p699, %p700
    %p702 = scmp.ne.s32.totalorder %s693, %s694
    %p703 = scmp.eq.s32.totalorder %s95, 0
    %p704 = por %p702, %p703
    %p705 = scmp.ne.s32.totalorder %s693, %s694
    %p706 = scmp.eq.s32.totalorder %s96, 1
    %p707 = por %p705, %p706
    %p709 = scmp.ne.s32.totalorder %s694, %s708
    %p710 = scmp.eq.s32.totalorder %s96, 0
    %p711 = por %p709, %p710
    %s713 = sadd.s32 %s712, 1
    %p716 = scmp.eq.s32.totalorder %s90, 1
    %p717 = scmp.ne.s32.totalorder %s712, %s714
    %p718 = scmp.eq.s32.totalorder %s90, 0
    %p719 = por %p717, %p718
    %p720 = scmp.ne.s32.totalorder %s712, %s714
    %p721 = scmp.eq.s32.totalorder %s95, 1
    %p722 = por %p720, %p721
    %p723 = scmp.ne.s32.totalorder %s714, %s715
    %p724 = scmp.eq.s32.totalorder %s95, 0
    %p725 = por %p723, %p724
    %p726 = scmp.ne.s32.totalorder %s714, %s715
    %p727 = scmp.eq.s32.totalorder %s96, 1
    %p728 = por %p726, %p727
    %p730 = scmp.ne.s32.totalorder %s715, %s729
    %p731 = scmp.eq.s32.totalorder %s96, 0
    %p732 = por %p730, %p731
    %s734 = sadd.s32 %s733, 1
    %p737 = scmp.eq.s32.totalorder %s90, 1
    %p738 = scmp.ne.s32.totalorder %s733, %s735
    %p739 = scmp.eq.s32.totalorder %s90, 0
    %p740 = por %p738, %p739
    %p741 = scmp.ne.s32.totalorder %s733, %s735
    %p742 = scmp.eq.s32.totalorder %s95, 1
    %p743 = por %p741, %p742
    %p744 = scmp.ne.s32.totalorder %s735, %s736
    %p745 = scmp.eq.s32.totalorder %s95, 0
    %p746 = por %p744, %p745
    %p747 = scmp.ne.s32.totalorder %s735, %s736
    %p748 = scmp.eq.s32.totalorder %s96, 1
    %p749 = por %p747, %p748
    %p751 = scmp.ne.s32.totalorder %s736, %s750
    %p752 = scmp.eq.s32.totalorder %s96, 0
    %p753 = por %p751, %p752
    %s755 = sadd.s32 %s754, 1
    %p758 = scmp.eq.s32.totalorder %s90, 1
    %p759 = scmp.ne.s32.totalorder %s754, %s756
    %p760 = scmp.eq.s32.totalorder %s90, 0
    %p761 = por %p759, %p760
    %p762 = scmp.ne.s32.totalorder %s754, %s756
    %p763 = scmp.eq.s32.totalorder %s95, 1
    %p764 = por %p762, %p763
    %p765 = scmp.ne.s32.totalorder %s756, %s757
    %p766 = scmp.eq.s32.totalorder %s95, 0
    %p767 = por %p765, %p766
    %p768 = scmp.ne.s32.totalorder %s756, %s757
    %p769 = scmp.eq.s32.totalorder %s96, 1
    %p770 = por %p768, %p769
    %p772 = scmp.ne.s32.totalorder %s757, %s771
    %p773 = scmp.eq.s32.totalorder %s96, 0
    %p774 = por %p772, %p773
    %s776 = sadd.s32 %s775, 1
    %p779 = scmp.eq.s32.totalorder %s90, 1
    %p780 = scmp.ne.s32.totalorder %s775, %s777
    %p781 = scmp.eq.s32.totalorder %s90, 0
    %p782 = por %p780, %p781
    %p783 = scmp.ne.s32.totalorder %s775, %s777
    %p784 = scmp.eq.s32.totalorder %s95, 1
    %p785 = por %p783, %p784
    %p786 = scmp.ne.s32.totalorder %s777, %s778
    %p787 = scmp.eq.s32.totalorder %s95, 0
    %p788 = por %p786, %p787
    %p789 = scmp.ne.s32.totalorder %s777, %s778
    %p790 = scmp.eq.s32.totalorder %s96, 1
    %p791 = por %p789, %p790
    %p793 = scmp.ne.s32.totalorder %s778, %s792
    %p794 = scmp.eq.s32.totalorder %s96, 0
    %p795 = por %p793, %p794
    %s797 = sadd.s32 %s796, 1
    %p800 = scmp.eq.s32.totalorder %s90, 1
    %p801 = scmp.ne.s32.totalorder %s796, %s798
    %p802 = scmp.eq.s32.totalorder %s90, 0
    %p803 = por %p801, %p802
    %p804 = scmp.ne.s32.totalorder %s796, %s798
    %p805 = scmp.eq.s32.totalorder %s95, 1
    %p806 = por %p804, %p805
    %p807 = scmp.ne.s32.totalorder %s798, %s799
    %p808 = scmp.eq.s32.totalorder %s95, 0
    %p809 = por %p807, %p808
    %p810 = scmp.ne.s32.totalorder %s798, %s799
    %p811 = scmp.eq.s32.totalorder %s96, 1
    %p812 = por %p810, %p811
    %p814 = scmp.ne.s32.totalorder %s799, %s813
    %p815 = scmp.eq.s32.totalorder %s96, 0
    %p816 = por %p814, %p815
    %s818 = sadd.s32 %s817, 1
    %p821 = scmp.eq.s32.totalorder %s90, 1
    %p822 = scmp.ne.s32.totalorder %s817, %s819
    %p823 = scmp.eq.s32.totalorder %s90, 0
    %p824 = por %p822, %p823
    %p825 = scmp.ne.s32.totalorder %s817, %s819
    %p826 = scmp.eq.s32.totalorder %s95, 1
    %p827 = por %p825, %p826
    %p828 = scmp.ne.s32.totalorder %s819, %s820
    %p829 = scmp.eq.s32.totalorder %s95, 0
    %p830 = por %p828, %p829
    %p831 = scmp.ne.s32.totalorder %s819, %s820
    %p832 = scmp.eq.s32.totalorder %s96, 1
    %p833 = por %p831, %p832
    %p835 = scmp.ne.s32.totalorder %s820, %s834
    %p836 = scmp.eq.s32.totalorder %s96, 0
    %p837 = por %p835, %p836
    %s839 = sadd.s32 %s838, 1
    %p842 = scmp.eq.s32.totalorder %s90, 1
    %p843 = scmp.ne.s32.totalorder %s838, %s840
    %p844 = scmp.eq.s32.totalorder %s90, 0
    %p845 = por %p843, %p844
    %p846 = scmp.ne.s32.totalorder %s838, %s840
    %p847 = scmp.eq.s32.totalorder %s95, 1
    %p848 = por %p846, %p847
    %p849 = scmp.ne.s32.totalorder %s840, %s841
    %p850 = scmp.eq.s32.totalorder %s95, 0
    %p851 = por %p849, %p850
    %p852 = scmp.ne.s32.totalorder %s840, %s841
    %p853 = scmp.eq.s32.totalorder %s96, 1
    %p854 = por %p852, %p853
    %p856 = scmp.ne.s32.totalorder %s841, %s855
    %p857 = scmp.eq.s32.totalorder %s96, 0
    %p858 = por %p856, %p857
    %s859 = ssub.s32 %s90, %s97
    %p860 = scmp.eq.s32.totalorder %s859, 0
    %s862 = sadd.s32 %s861, 1
    %s863 = scalar_select %p860, %s861, %s862
    %p866 = pneg %p860
    %p867 = scmp.eq.s32.totalorder %s90, 1
    %p868 = por %p866, %p867
    %p869 = scmp.ne.s32.totalorder %s861, %s864
    %p870 = scmp.eq.s32.totalorder %s90, 0
    %p871 = por %p869, %p870
    %p872 = scmp.ne.s32.totalorder %s861, %s864
    %p873 = scmp.eq.s32.totalorder %s95, 1
    %p874 = por %p872, %p873
    %p875 = scmp.ne.s32.totalorder %s864, %s865
    %p876 = scmp.eq.s32.totalorder %s95, 0
    %p877 = por %p875, %p876
    %p878 = scmp.ne.s32.totalorder %s864, %s865
    %p879 = scmp.eq.s32.totalorder %s96, 1
    %p880 = por %p878, %p879
    %p882 = scmp.ne.s32.totalorder %s865, %s881
    %p883 = scmp.eq.s32.totalorder %s96, 0
    %p884 = por %p882, %p883
    %s885 = ssub.s32 %s90, %s97
    %p886 = scmp.eq.s32.totalorder %s885, 0
    %s888 = sadd.s32 %s887, 1
    %s889 = scalar_select %p886, %s887, %s888
    %p892 = pneg %p886
    %p893 = scmp.eq.s32.totalorder %s90, 1
    %p894 = por %p892, %p893
    %p895 = scmp.ne.s32.totalorder %s887, %s890
    %p896 = scmp.eq.s32.totalorder %s90, 0
    %p897 = por %p895, %p896
    %p898 = scmp.ne.s32.totalorder %s887, %s890
    %p899 = scmp.eq.s32.totalorder %s95, 1
    %p900 = por %p898, %p899
    %p901 = scmp.ne.s32.totalorder %s890, %s891
    %p902 = scmp.eq.s32.totalorder %s95, 0
    %p903 = por %p901, %p902
    %p904 = scmp.ne.s32.totalorder %s890, %s891
    %p905 = scmp.eq.s32.totalorder %s96, 1
    %p906 = por %p904, %p905
    %p908 = scmp.ne.s32.totalorder %s891, %s907
    %p909 = scmp.eq.s32.totalorder %s96, 0
    %p910 = por %p908, %p909
    %s911 = ssub.s32 %s90, %s97
    %p912 = scmp.eq.s32.totalorder %s911, 0
    %s914 = sadd.s32 %s913, 1
    %s915 = scalar_select %p912, %s913, %s914
    %p918 = pneg %p912
    %p919 = scmp.eq.s32.totalorder %s90, 1
    %p920 = por %p918, %p919
    %p921 = scmp.ne.s32.totalorder %s913, %s916
    %p922 = scmp.eq.s32.totalorder %s90, 0
    %p923 = por %p921, %p922
    %p924 = scmp.ne.s32.totalorder %s913, %s916
    %p925 = scmp.eq.s32.totalorder %s95, 1
    %p926 = por %p924, %p925
    %p927 = scmp.ne.s32.totalorder %s916, %s917
    %p928 = scmp.eq.s32.totalorder %s95, 0
    %p929 = por %p927, %p928
    %p930 = scmp.ne.s32.totalorder %s916, %s917
    %p931 = scmp.eq.s32.totalorder %s96, 1
    %p932 = por %p930, %p931
    %p934 = scmp.ne.s32.totalorder %s917, %s933
    %p935 = scmp.eq.s32.totalorder %s96, 0
    %p936 = por %p934, %p935
    %s937 = ssub.s32 %s90, %s97
    %p938 = scmp.eq.s32.totalorder %s937, 0
    %s940 = sadd.s32 %s939, 1
    %s941 = scalar_select %p938, %s939, %s940
    %p944 = pneg %p938
    %p945 = scmp.eq.s32.totalorder %s90, 1
    %p946 = por %p944, %p945
    %p947 = scmp.ne.s32.totalorder %s939, %s942
    %p948 = scmp.eq.s32.totalorder %s90, 0
    %p949 = por %p947, %p948
    %p950 = scmp.ne.s32.totalorder %s939, %s942
    %p951 = scmp.eq.s32.totalorder %s95, 1
    %p952 = por %p950, %p951
    %p953 = scmp.ne.s32.totalorder %s942, %s943
    %p954 = scmp.eq.s32.totalorder %s95, 0
    %p955 = por %p953, %p954
    %p956 = scmp.ne.s32.totalorder %s942, %s943
    %p957 = scmp.eq.s32.totalorder %s96, 1
    %p958 = por %p956, %p957
    %p960 = scmp.ne.s32.totalorder %s943, %s959
    %p961 = scmp.eq.s32.totalorder %s96, 0
    %p962 = por %p960, %p961
    %s963 = ssub.s32 %s90, %s97
    %p964 = scmp.eq.s32.totalorder %s963, 0
    %s966 = sadd.s32 %s965, 1
    %s967 = scalar_select %p964, %s965, %s966
    %p970 = pneg %p964
    %p971 = scmp.eq.s32.totalorder %s90, 1
    %p972 = por %p970, %p971
    %p973 = scmp.ne.s32.totalorder %s965, %s968
    %p974 = scmp.eq.s32.totalorder %s90, 0
    %p975 = por %p973, %p974
    %p976 = scmp.ne.s32.totalorder %s965, %s968
    %p977 = scmp.eq.s32.totalorder %s95, 1
    %p978 = por %p976, %p977
    %p979 = scmp.ne.s32.totalorder %s968, %s969
    %p980 = scmp.eq.s32.totalorder %s95, 0
    %p981 = por %p979, %p980
    %p982 = scmp.ne.s32.totalorder %s968, %s969
    %p983 = scmp.eq.s32.totalorder %s96, 1
    %p984 = por %p982, %p983
    %p986 = scmp.ne.s32.totalorder %s969, %s985
    %p987 = scmp.eq.s32.totalorder %s96, 0
    %p988 = por %p986, %p987
    %s989 = ssub.s32 %s90, %s97
    %p990 = scmp.eq.s32.totalorder %s989, 0
    %s992 = sadd.s32 %s991, 1
    %s993 = scalar_select %p990, %s991, %s992
    %p996 = pneg %p990
    %p997 = scmp.eq.s32.totalorder %s90, 1
    %p998 = por %p996, %p997
    %p999 = scmp.ne.s32.totalorder %s991, %s994
    %p1000 = scmp.eq.s32.totalorder %s90, 0
    %p1001 = por %p999, %p1000
    %p1002 = scmp.ne.s32.totalorder %s991, %s994
    %p1003 = scmp.eq.s32.totalorder %s95, 1
    %p1004 = por %p1002, %p1003
    %p1005 = scmp.ne.s32.totalorder %s994, %s995
    %p1006 = scmp.eq.s32.totalorder %s95, 0
    %p1007 = por %p1005, %p1006
    %p1008 = scmp.ne.s32.totalorder %s994, %s995
    %p1009 = scmp.eq.s32.totalorder %s96, 1
    %p1010 = por %p1008, %p1009
    %p1012 = scmp.ne.s32.totalorder %s995, %s1011
    %p1013 = scmp.eq.s32.totalorder %s96, 0
    %p1014 = por %p1012, %p1013
    %p1015 = scmp.le.s32.totalorder 1, %s90
    %p1016 = scmp.lt.s32.totalorder %s90, 3
    %p1017 = pnand %p1015, %p1016
    %p1018 = pneg %p1017
    // Predicated region
    $region9: #{_lambda_.1} parent=5 // pred_check
      _
    $region10: #{_lambda_.1} parent=5 // pred_check_branch
      %1020 = sbr.rel (%p1017) target = $region12
    $region11: #{_lambda_.1} parent=5 // pred_region
      %s1021 = ssub.s32 %s90, 1
      // Predicated region
      $region13: #{_lambda_.1} parent=11 // pred_check
        %p1022 = pneg %p137
      $region14: #{_lambda_.1} parent=11 // pred_check_branch
        %1024 = sbr.rel (%p1022) target = $region16
      $region15: #{_lambda_.1} parent=11 // pred_region
        _
      $region16: #{_lambda_.1} parent=11 // pred_fallthru
        _
      // Predicated region
      $region17: #{_lambda_.1} parent=11 // pred_check
        %p1025 = pneg %p158
      $region18: #{_lambda_.1} parent=11 // pred_check_branch
        %1027 = sbr.rel (%p1025) target = $region20
      $region19: #{_lambda_.1} parent=11 // pred_region
        _
      $region20: #{_lambda_.1} parent=11 // pred_fallthru
        _
      // Predicated region
      $region21: #{_lambda_.1} parent=11 // pred_check
        %p1028 = pneg %p179
      $region22: #{_lambda_.1} parent=11 // pred_check_branch
        %1030 = sbr.rel (%p1028) target = $region24
      $region23: #{_lambda_.1} parent=11 // pred_region
        _
      $region24: #{_lambda_.1} parent=11 // pred_fallthru
        _
      // Predicated region
      $region25: #{_lambda_.1} parent=11 // pred_check
        %p1031 = pneg %p200
      $region26: #{_lambda_.1} parent=11 // pred_check_branch
        %1033 = sbr.rel (%p1031) target = $region28
      $region27: #{_lambda_.1} parent=11 // pred_region
        _
      $region28: #{_lambda_.1} parent=11 // pred_fallthru
        _
      // Predicated region
      $region29: #{_lambda_.1} parent=11 // pred_check
        %p1034 = pneg %p221
      $region30: #{_lambda_.1} parent=11 // pred_check_branch
        %1036 = sbr.rel (%p1034) target = $region32
      $region31: #{_lambda_.1} parent=11 // pred_region
        _
      $region32: #{_lambda_.1} parent=11 // pred_fallthru
        _
      // Predicated region
      $region33: #{_lambda_.1} parent=11 // pred_check
        %p1037 = pneg %p242
      $region34: #{_lambda_.1} parent=11 // pred_check_branch
        %1039 = sbr.rel (%p1037) target = $region36
      $region35: #{_lambda_.1} parent=11 // pred_region
        _
      $region36: #{_lambda_.1} parent=11 // pred_fallthru
        _
      // Predicated region
      $region37: #{_lambda_.1} parent=11 // pred_check
        %p1040 = pneg %p263
      $region38: #{_lambda_.1} parent=11 // pred_check_branch
        %1042 = sbr.rel (%p1040) target = $region40
      $region39: #{_lambda_.1} parent=11 // pred_region
        _
      $region40: #{_lambda_.1} parent=11 // pred_fallthru
        _
      // Predicated region
      $region41: #{_lambda_.1} parent=11 // pred_check
        %p1043 = pneg %p284
      $region42: #{_lambda_.1} parent=11 // pred_check_branch
        %1045 = sbr.rel (%p1043) target = $region44
      $region43: #{_lambda_.1} parent=11 // pred_region
        _
      $region44: #{_lambda_.1} parent=11 // pred_fallthru
        _
      // Predicated region
      $region45: #{_lambda_.1} parent=11 // pred_check
        %p1046 = pneg %p305
      $region46: #{_lambda_.1} parent=11 // pred_check_branch
        %1048 = sbr.rel (%p1046) target = $region48
      $region47: #{_lambda_.1} parent=11 // pred_region
        _
      $region48: #{_lambda_.1} parent=11 // pred_fallthru
        _
      // Predicated region
      $region49: #{_lambda_.1} parent=11 // pred_check
        %p1049 = pneg %p326
      $region50: #{_lambda_.1} parent=11 // pred_check_branch
        %1051 = sbr.rel (%p1049) target = $region52
      $region51: #{_lambda_.1} parent=11 // pred_region
        _
      $region52: #{_lambda_.1} parent=11 // pred_fallthru
        _
      // Predicated region
      $region53: #{_lambda_.1} parent=11 // pred_check
        %p1052 = pneg %p347
      $region54: #{_lambda_.1} parent=11 // pred_check_branch
        %1054 = sbr.rel (%p1052) target = $region56
      $region55: #{_lambda_.1} parent=11 // pred_region
        _
      $region56: #{_lambda_.1} parent=11 // pred_fallthru
        _
      // Predicated region
      $region57: #{_lambda_.1} parent=11 // pred_check
        %p1055 = pneg %p368
      $region58: #{_lambda_.1} parent=11 // pred_check_branch
        %1057 = sbr.rel (%p1055) target = $region60
      $region59: #{_lambda_.1} parent=11 // pred_region
        _
      $region60: #{_lambda_.1} parent=11 // pred_fallthru
        _
      // Predicated region
      $region61: #{_lambda_.1} parent=11 // pred_check
        %p1058 = pneg %p389
      $region62: #{_lambda_.1} parent=11 // pred_check_branch
        %1060 = sbr.rel (%p1058) target = $region64
      $region63: #{_lambda_.1} parent=11 // pred_region
        _
      $region64: #{_lambda_.1} parent=11 // pred_fallthru
        _
      // Predicated region
      $region65: #{_lambda_.1} parent=11 // pred_check
        %p1061 = pneg %p410
      $region66: #{_lambda_.1} parent=11 // pred_check_branch
        %1063 = sbr.rel (%p1061) target = $region68
      $region67: #{_lambda_.1} parent=11 // pred_region
        _
      $region68: #{_lambda_.1} parent=11 // pred_fallthru
        _
      // Predicated region
      $region69: #{_lambda_.1} parent=11 // pred_check
        %p1064 = pneg %p431
      $region70: #{_lambda_.1} parent=11 // pred_check_branch
        %1066 = sbr.rel (%p1064) target = $region72
      $region71: #{_lambda_.1} parent=11 // pred_region
        _
      $region72: #{_lambda_.1} parent=11 // pred_fallthru
        _
      // Predicated region
      $region73: #{_lambda_.1} parent=11 // pred_check
        %p1067 = pneg %p452
      $region74: #{_lambda_.1} parent=11 // pred_check_branch
        %1069 = sbr.rel (%p1067) target = $region76
      $region75: #{_lambda_.1} parent=11 // pred_region
        _
      $region76: #{_lambda_.1} parent=11 // pred_fallthru
        _
      // Predicated region
      $region77: #{_lambda_.1} parent=11 // pred_check
        %p1070 = pneg %p473
      $region78: #{_lambda_.1} parent=11 // pred_check_branch
        %1072 = sbr.rel (%p1070) target = $region80
      $region79: #{_lambda_.1} parent=11 // pred_region
        _
      $region80: #{_lambda_.1} parent=11 // pred_fallthru
        _
      // Predicated region
      $region81: #{_lambda_.1} parent=11 // pred_check
        %p1073 = pneg %p494
      $region82: #{_lambda_.1} parent=11 // pred_check_branch
        %1075 = sbr.rel (%p1073) target = $region84
      $region83: #{_lambda_.1} parent=11 // pred_region
        _
      $region84: #{_lambda_.1} parent=11 // pred_fallthru
        _
      // Predicated region
      $region85: #{_lambda_.1} parent=11 // pred_check
        %p1076 = pneg %p515
      $region86: #{_lambda_.1} parent=11 // pred_check_branch
        %1078 = sbr.rel (%p1076) target = $region88
      $region87: #{_lambda_.1} parent=11 // pred_region
        _
      $region88: #{_lambda_.1} parent=11 // pred_fallthru
        _
      // Predicated region
      $region89: #{_lambda_.1} parent=11 // pred_check
        %p1079 = pneg %p536
      $region90: #{_lambda_.1} parent=11 // pred_check_branch
        %1081 = sbr.rel (%p1079) target = $region92
      $region91: #{_lambda_.1} parent=11 // pred_region
        _
      $region92: #{_lambda_.1} parent=11 // pred_fallthru
        _
      // Predicated region
      $region93: #{_lambda_.1} parent=11 // pred_check
        %p1082 = pneg %p557
      $region94: #{_lambda_.1} parent=11 // pred_check_branch
        %1084 = sbr.rel (%p1082) target = $region96
      $region95: #{_lambda_.1} parent=11 // pred_region
        _
      $region96: #{_lambda_.1} parent=11 // pred_fallthru
        _
      // Predicated region
      $region97: #{_lambda_.1} parent=11 // pred_check
        %p1085 = pneg %p578
      $region98: #{_lambda_.1} parent=11 // pred_check_branch
        %1087 = sbr.rel (%p1085) target = $region100
      $region99: #{_lambda_.1} parent=11 // pred_region
        _
      $region100: #{_lambda_.1} parent=11 // pred_fallthru
        _
      // Predicated region
      $region101: #{_lambda_.1} parent=11 // pred_check
        %p1088 = pneg %p599
      $region102: #{_lambda_.1} parent=11 // pred_check_branch
        %1090 = sbr.rel (%p1088) target = $region104
      $region103: #{_lambda_.1} parent=11 // pred_region
        _
      $region104: #{_lambda_.1} parent=11 // pred_fallthru
        _
      // Predicated region
      $region105: #{_lambda_.1} parent=11 // pred_check
        %p1091 = pneg %p620
      $region106: #{_lambda_.1} parent=11 // pred_check_branch
        %1093 = sbr.rel (%p1091) target = $region108
      $region107: #{_lambda_.1} parent=11 // pred_region
        _
      $region108: #{_lambda_.1} parent=11 // pred_fallthru
        _
      // Predicated region
      $region109: #{_lambda_.1} parent=11 // pred_check
        %p1094 = pneg %p641
      $region110: #{_lambda_.1} parent=11 // pred_check_branch
        %1096 = sbr.rel (%p1094) target = $region112
      $region111: #{_lambda_.1} parent=11 // pred_region
        _
      $region112: #{_lambda_.1} parent=11 // pred_fallthru
        _
      // Predicated region
      $region113: #{_lambda_.1} parent=11 // pred_check
        %p1097 = pneg %p662
      $region114: #{_lambda_.1} parent=11 // pred_check_branch
        %1099 = sbr.rel (%p1097) target = $region116
      $region115: #{_lambda_.1} parent=11 // pred_region
        _
      $region116: #{_lambda_.1} parent=11 // pred_fallthru
        _
      // Predicated region
      $region117: #{_lambda_.1} parent=11 // pred_check
        %p1100 = pneg %p683
      $region118: #{_lambda_.1} parent=11 // pred_check_branch
        %1102 = sbr.rel (%p1100) target = $region120
      $region119: #{_lambda_.1} parent=11 // pred_region
        _
      $region120: #{_lambda_.1} parent=11 // pred_fallthru
        _
      // Predicated region
      $region121: #{_lambda_.1} parent=11 // pred_check
        %p1103 = pneg %p704
      $region122: #{_lambda_.1} parent=11 // pred_check_branch
        %1105 = sbr.rel (%p1103) target = $region124
      $region123: #{_lambda_.1} parent=11 // pred_region
        _
      $region124: #{_lambda_.1} parent=11 // pred_fallthru
        _
      // Predicated region
      $region125: #{_lambda_.1} parent=11 // pred_check
        %p1106 = pneg %p725
      $region126: #{_lambda_.1} parent=11 // pred_check_branch
        %1108 = sbr.rel (%p1106) target = $region128
      $region127: #{_lambda_.1} parent=11 // pred_region
        _
      $region128: #{_lambda_.1} parent=11 // pred_fallthru
        _
      // Predicated region
      $region129: #{_lambda_.1} parent=11 // pred_check
        %p1109 = pneg %p746
      $region130: #{_lambda_.1} parent=11 // pred_check_branch
        %1111 = sbr.rel (%p1109) target = $region132
      $region131: #{_lambda_.1} parent=11 // pred_region
        _
      $region132: #{_lambda_.1} parent=11 // pred_fallthru
        _
      // Predicated region
      $region133: #{_lambda_.1} parent=11 // pred_check
        %p1112 = pneg %p767
      $region134: #{_lambda_.1} parent=11 // pred_check_branch
        %1114 = sbr.rel (%p1112) target = $region136
      $region135: #{_lambda_.1} parent=11 // pred_region
        _
      $region136: #{_lambda_.1} parent=11 // pred_fallthru
        _
      // Predicated region
      $region137: #{_lambda_.1} parent=11 // pred_check
        %p1115 = pneg %p788
      $region138: #{_lambda_.1} parent=11 // pred_check_branch
        %1117 = sbr.rel (%p1115) target = $region140
      $region139: #{_lambda_.1} parent=11 // pred_region
        _
      $region140: #{_lambda_.1} parent=11 // pred_fallthru
        _
      // Predicated region
      $region141: #{_lambda_.1} parent=11 // pred_check
        %p1118 = pneg %p809
      $region142: #{_lambda_.1} parent=11 // pred_check_branch
        %1120 = sbr.rel (%p1118) target = $region144
      $region143: #{_lambda_.1} parent=11 // pred_region
        _
      $region144: #{_lambda_.1} parent=11 // pred_fallthru
        _
      // Predicated region
      $region145: #{_lambda_.1} parent=11 // pred_check
        %p1121 = pneg %p830
      $region146: #{_lambda_.1} parent=11 // pred_check_branch
        %1123 = sbr.rel (%p1121) target = $region148
      $region147: #{_lambda_.1} parent=11 // pred_region
        _
      $region148: #{_lambda_.1} parent=11 // pred_fallthru
        _
      // Predicated region
      $region149: #{_lambda_.1} parent=11 // pred_check
        %p1124 = pneg %p851
      $region150: #{_lambda_.1} parent=11 // pred_check_branch
        %1126 = sbr.rel (%p1124) target = $region152
      $region151: #{_lambda_.1} parent=11 // pred_region
        _
      $region152: #{_lambda_.1} parent=11 // pred_fallthru
        _
    $region12: #{_lambda_.1} parent=5 // pred_fallthru
      _
    %p1127 = scmp.lt.s32.totalorder %s90, 2
    // Predicated region
    $region153: #{_lambda_.1} parent=5 // pred_check
      %p1128 = pneg %p1127
    $region154: #{_lambda_.1} parent=5 // pred_check_branch
      %1130 = sbr.rel (%p1128) target = $region156
    $region155: #{_lambda_.1} parent=5 // pred_region
      // Predicated region
      $region157: #{_lambda_.1} parent=155 // pred_check
        %p1131 = pneg %p110
      $region158: #{_lambda_.1} parent=155 // pred_check_branch
        %1133 = sbr.rel (%p1131) target = $region160
      $region159: #{_lambda_.1} parent=155 // pred_region
        %p1134 = scmp.lt.s32.totalorder %s90, 1
        %s1135 = scalar_select %p1134, %s90, 1
        %s1136 = smul.addr %s1135, 16
        %s1137 = smul.addr %s1136, 8
        %s1138 = scalar_lea.vmem %s1, %s1137
      $region160: #{_lambda_.1} parent=155 // pred_fallthru
        _
    $region156: #{_lambda_.1} parent=5 // pred_fallthru
      _
    %p1139 = scmp.le.s32.totalorder 1, %s90
    %p1140 = scmp.lt.s32.totalorder %s90, 3
    %p1141 = pnand %p1139, %p1140
    %p1142 = pneg %p1141
    // Predicated region
    $region161: #{_lambda_.1} parent=5 // pred_check
      _
    $region162: #{_lambda_.1} parent=5 // pred_check_branch
      %1144 = sbr.rel (%p1141) target = $region164
    $region163: #{_lambda_.1} parent=5 // pred_region
      %s1145 = ssub.s32 %s90, 1
      %p1146 = scmp.lt.s32.totalorder %s95, 1
      %s1147 = scalar_select %p1146, %s95, 1
      %s1148 = smul.addr %s1147, 16
      %s1149 = smul.addr %s1148, 8
      %s1150 = scalar_lea.vmem %s1, %s1149
      %p1151 = pneg %p116
      %p1152 = pneg %p113
      %p1153 = pneg %p137
      %p1154 = pneg %p134
      %p1155 = pneg %p158
      %p1156 = pneg %p155
      %p1157 = pneg %p179
      %p1158 = pneg %p176
      %p1159 = pneg %p200
      %p1160 = pneg %p197
      %p1161 = pneg %p221
      %p1162 = pneg %p218
      %p1163 = pneg %p242
      %p1164 = pneg %p239
      %p1165 = pneg %p263
      %p1166 = pneg %p260
      %p1167 = pneg %p284
      %p1168 = pneg %p281
      %p1169 = pneg %p305
      %p1170 = pneg %p302
      %p1171 = pneg %p326
      %p1172 = pneg %p323
      %p1173 = pneg %p347
      %p1174 = pneg %p344
      %p1175 = pneg %p368
      %p1176 = pneg %p365
      %p1177 = pneg %p389
      %p1178 = pneg %p386
      %p1179 = pneg %p410
      %p1180 = pneg %p407
      %p1181 = pneg %p431
      %p1182 = pneg %p428
      %p1183 = pneg %p452
      %p1184 = pneg %p449
      %p1185 = pneg %p473
      %p1186 = pneg %p470
      %p1187 = pneg %p494
      %p1188 = pneg %p491
      %p1189 = pneg %p515
      %p1190 = pneg %p512
      %p1191 = pneg %p536
      %p1192 = pneg %p533
      %p1193 = pneg %p557
      %p1194 = pneg %p554
      %p1195 = pneg %p578
      %p1196 = pneg %p575
      %p1197 = pneg %p599
      %p1198 = pneg %p596
      %p1199 = pneg %p620
      %p1200 = pneg %p617
      %p1201 = pneg %p641
      %p1202 = pneg %p638
      %p1203 = pneg %p662
      %p1204 = pneg %p659
      %p1205 = pneg %p683
      %p1206 = pneg %p680
      %p1207 = pneg %p704
      %p1208 = pneg %p701
      %p1209 = pneg %p725
      %p1210 = pneg %p722
      %p1211 = pneg %p746
      %p1212 = pneg %p743
      %p1213 = pneg %p767
      %p1214 = pneg %p764
      %p1215 = pneg %p788
      %p1216 = pneg %p785
      %p1217 = pneg %p809
      %p1218 = pneg %p806
      %p1219 = pneg %p830
      %p1220 = pneg %p827
      %p1221 = pneg %p851
      %p1222 = pneg %p848
      %p1223 = pneg %p877
      %p1224 = pneg %p874
      %p1225 = scmp.lt.s32.totalorder %s95, 1
      %s1226 = scalar_select %p1225, %s95, 1
      %s1227 = smul.addr %s1226, 2
      %s1228 = smul.addr %s1227, 8
      %s1229 = scalar_lea.vmem %s73, %s1228
      %p1230 = pneg %p903
      %p1231 = pneg %p900
      %p1232 = scmp.lt.s32.totalorder %s95, 1
      %s1233 = scalar_select %p1232, %s95, 1
      %s1234 = smul.addr %s1233, 2
      %s1235 = smul.addr %s1234, 8
      %s1236 = scalar_lea.vmem %s75, %s1235
      %p1237 = pneg %p929
      %p1238 = pneg %p926
      %p1239 = scmp.lt.s32.totalorder %s95, 1
      %s1240 = scalar_select %p1239, %s95, 1
      %s1241 = smul.addr %s1240, 4
      %s1242 = scalar_lea.vmem %s77, %s1241
      %p1243 = pneg %p955
      %p1244 = pneg %p952
      %p1245 = scmp.lt.s32.totalorder %s95, 1
      %s1246 = scalar_select %p1245, %s95, 1
      %s1247 = smul.addr %s1246, 4
      %s1248 = scalar_lea.vmem %s79, %s1247
      %p1249 = pneg %p981
      %p1250 = pneg %p978
      %p1251 = scmp.lt.s32.totalorder %s95, 1
      %s1252 = scalar_select %p1251, %s95, 1
      %s1253 = smul.addr %s1252, 2
      %s1254 = scalar_lea.vmem %s81, %s1253
      %p1255 = pneg %p1007
      %p1256 = pneg %p1004
      %p1257 = scmp.lt.s32.totalorder %s95, 1
      %s1258 = scalar_select %p1257, %s95, 1
      %s1259 = smul.addr %s1258, 2
      %s1260 = scalar_lea.vmem %s83, %s1259
      %p1261 = scmp.lt.s32.totalorder %s95, 1
      %s1262 = scalar_select %p1261, %s95, 1
      %s1263 = smul.addr %s1262, 16
      %s1264 = smul.addr %s1263, 8
      %s1265 = scalar_lea.vmem %s1, %s1264
      %p1266 = scmp.lt.s32.totalorder %s95, 1
      %s1267 = scalar_select %p1266, %s95, 1
      %s1268 = smul.addr %s1267, 2
      %s1269 = smul.addr %s1268, 8
      %s1270 = scalar_lea.vmem %s73, %s1269
      %p1271 = scmp.lt.s32.totalorder %s95, 1
      %s1272 = scalar_select %p1271, %s95, 1
      %s1273 = smul.addr %s1272, 2
      %s1274 = smul.addr %s1273, 8
      %s1275 = scalar_lea.vmem %s75, %s1274
      %p1276 = scmp.lt.s32.totalorder %s95, 1
      %s1277 = scalar_select %p1276, %s95, 1
      %s1278 = smul.addr %s1277, 4
      %s1279 = scalar_lea.vmem %s77, %s1278
      %p1280 = scmp.lt.s32.totalorder %s95, 1
      %s1281 = scalar_select %p1280, %s95, 1
      %s1282 = smul.addr %s1281, 4
      %s1283 = scalar_lea.vmem %s79, %s1282
      %p1284 = scmp.lt.s32.totalorder %s95, 1
      %s1285 = scalar_select %p1284, %s95, 1
      %s1286 = smul.addr %s1285, 2
      %s1287 = scalar_lea.vmem %s81, %s1286
      %p1288 = scmp.lt.s32.totalorder %s95, 1
      %s1289 = scalar_select %p1288, %s95, 1
      %s1290 = smul.addr %s1289, 2
      %s1291 = scalar_lea.vmem %s83, %s1290
      %v1293 = vld [vmem:[%s1265] sm:$0xff]
      %v1294 = vld [vmem:[%s1265 + $0x8] sm:$0xff]
      %v1295 = vld [vmem:[%s1265 + $0x10] sm:$0xff]
      %v1296 = vld [vmem:[%s1265 + $0x18] sm:$0xff]
      %v1297 = vld [vmem:[%s1265 + $0x20] sm:$0xff]
      %v1298 = vld [vmem:[%s1265 + $0x28] sm:$0xff]
      %v1299 = vld [vmem:[%s1265 + $0x30] sm:$0xff]
      %v1300 = vld [vmem:[%s1265 + $0x38] sm:$0xff]
      %v1301 = vld [vmem:[%s1265 + $0x40] sm:$0xff]
      %v1302 = vld [vmem:[%s1265 + $0x48] sm:$0xff]
      %v1303 = vld [vmem:[%s1265 + $0x50] sm:$0xff]
      %v1304 = vld [vmem:[%s1265 + $0x58] sm:$0xff]
      %v1305 = vld [vmem:[%s1265 + $0x60] sm:$0xff]
      %v1306 = vld [vmem:[%s1265 + $0x68] sm:$0xff]
      %v1307 = vld [vmem:[%s1265 + $0x70] sm:$0xff]
      %v1308 = vld [vmem:[%s1265 + $0x78] sm:$0xff]
      %v1309 = vpack.c.bf16 %v1295, %v1293
      %v1310 = vpack.c.bf16 %v1296, %v1294
      %v1311 = vpack.c.bf16 %v1299, %v1297
      %v1312 = vpack.c.bf16 %v1300, %v1298
      %v1313 = vpack.c.bf16 %v1303, %v1301
      %v1314 = vpack.c.bf16 %v1304, %v1302
      %v1315 = vpack.c.bf16 %v1307, %v1305
      %v1316 = vpack.c.bf16 %v1308, %v1306
      %v1317 = vld [vmem:[%s5] sm:$0xff]
      %v1318 = vld [vmem:[%s5 + $0x8] sm:$0xff]
      %v1319 = vld [vmem:[%s5 + $0x10] sm:$0xff]
      %v1320 = vld [vmem:[%s5 + $0x18] sm:$0xff]
      %v1321 = vld [vmem:[%s5 + $0x20] sm:$0xff]
      %v1322 = vld [vmem:[%s5 + $0x28] sm:$0xff]
      %v1323 = vld [vmem:[%s5 + $0x30] sm:$0xff]
      %v1324 = vld [vmem:[%s5 + $0x38] sm:$0xff]
      %v1325 = vld [vmem:[%s5 + $0x40] sm:$0xff]
      %v1326 = vld [vmem:[%s5 + $0x48] sm:$0xff]
      %v1327 = vld [vmem:[%s5 + $0x50] sm:$0xff]
      %v1328 = vld [vmem:[%s5 + $0x58] sm:$0xff]
      %v1329 = vld [vmem:[%s5 + $0x60] sm:$0xff]
      %v1330 = vld [vmem:[%s5 + $0x68] sm:$0xff]
      %v1331 = vld [vmem:[%s5 + $0x70] sm:$0xff]
      %v1332 = vld [vmem:[%s5 + $0x78] sm:$0xff]
      %v1333 = vld [vmem:[%s5 + $0x80] sm:$0xff]
      %v1334 = vld [vmem:[%s5 + $0x88] sm:$0xff]
      %v1335 = vld [vmem:[%s5 + $0x90] sm:$0xff]
      %v1336 = vld [vmem:[%s5 + $0x98] sm:$0xff]
      %v1337 = vld [vmem:[%s5 + $0xa0] sm:$0xff]
      %v1338 = vld [vmem:[%s5 + $0xa8] sm:$0xff]
      %v1339 = vld [vmem:[%s5 + $0xb0] sm:$0xff]
      %v1340 = vld [vmem:[%s5 + $0xb8] sm:$0xff]
      %v1341 = vld [vmem:[%s5 + $0xc0] sm:$0xff]
      %v1342 = vld [vmem:[%s5 + $0xc8] sm:$0xff]
      %v1343 = vld [vmem:[%s5 + $0xd0] sm:$0xff]
      %v1344 = vld [vmem:[%s5 + $0xd8] sm:$0xff]
      %v1345 = vld [vmem:[%s5 + $0xe0] sm:$0xff]
      %v1346 = vld [vmem:[%s5 + $0xe8] sm:$0xff]
      %v1347 = vld [vmem:[%s5 + $0xf0] sm:$0xff]
      %v1348 = vld [vmem:[%s5 + $0xf8] sm:$0xff]
      %v1349 = vld [vmem:[%s5 + $0x100] sm:$0xff]
      %v1350 = vld [vmem:[%s5 + $0x108] sm:$0xff]
      %v1351 = vld [vmem:[%s5 + $0x110] sm:$0xff]
      %v1352 = vld [vmem:[%s5 + $0x118] sm:$0xff]
      %v1353 = vld [vmem:[%s5 + $0x120] sm:$0xff]
      %v1354 = vld [vmem:[%s5 + $0x128] sm:$0xff]
      %v1355 = vld [vmem:[%s5 + $0x130] sm:$0xff]
      %v1356 = vld [vmem:[%s5 + $0x138] sm:$0xff]
      %v1357 = vld [vmem:[%s5 + $0x140] sm:$0xff]
      %v1358 = vld [vmem:[%s5 + $0x148] sm:$0xff]
      %v1359 = vld [vmem:[%s5 + $0x150] sm:$0xff]
      %v1360 = vld [vmem:[%s5 + $0x158] sm:$0xff]
      %v1361 = vld [vmem:[%s5 + $0x160] sm:$0xff]
      %v1362 = vld [vmem:[%s5 + $0x168] sm:$0xff]
      %v1363 = vld [vmem:[%s5 + $0x170] sm:$0xff]
      %v1364 = vld [vmem:[%s5 + $0x178] sm:$0xff]
      %v1365 = vld [vmem:[%s5 + $0x180] sm:$0xff]
      %v1366 = vld [vmem:[%s5 + $0x188] sm:$0xff]
      %v1367 = vld [vmem:[%s5 + $0x190] sm:$0xff]
      %v1368 = vld [vmem:[%s5 + $0x198] sm:$0xff]
      %v1369 = vld [vmem:[%s5 + $0x1a0] sm:$0xff]
      %v1370 = vld [vmem:[%s5 + $0x1a8] sm:$0xff]
      %v1371 = vld [vmem:[%s5 + $0x1b0] sm:$0xff]
      %v1372 = vld [vmem:[%s5 + $0x1b8] sm:$0xff]
      %v1373 = vld [vmem:[%s5 + $0x1c0] sm:$0xff]
      %v1374 = vld [vmem:[%s5 + $0x1c8] sm:$0xff]
      %v1375 = vld [vmem:[%s5 + $0x1d0] sm:$0xff]
      %v1376 = vld [vmem:[%s5 + $0x1d8] sm:$0xff]
      %v1377 = vld [vmem:[%s5 + $0x1e0] sm:$0xff]
      %v1378 = vld [vmem:[%s5 + $0x1e8] sm:$0xff]
      %v1379 = vld [vmem:[%s5 + $0x1f0] sm:$0xff]
      %v1380 = vld [vmem:[%s5 + $0x1f8] sm:$0xff]
      %v1381 = vld [vmem:[%s5 + $0x200] sm:$0xff]
      %v1382 = vld [vmem:[%s5 + $0x208] sm:$0xff]
      %v1383 = vld [vmem:[%s5 + $0x210] sm:$0xff]
      %v1384 = vld [vmem:[%s5 + $0x218] sm:$0xff]
      %v1385 = vld [vmem:[%s5 + $0x220] sm:$0xff]
      %v1386 = vld [vmem:[%s5 + $0x228] sm:$0xff]
      %v1387 = vld [vmem:[%s5 + $0x230] sm:$0xff]
      %v1388 = vld [vmem:[%s5 + $0x238] sm:$0xff]
      %v1461 = vunpack.c.l.b16 %v1317
      %v1462 = vunpack.c.h.b16 %v1317
      %v1463 = vunpack.c.l.b16 %v1318
      %v1464 = vunpack.c.h.b16 %v1318
      %v1465 = vunpack.c.l.b16 %v1319
      %v1466 = vunpack.c.h.b16 %v1319
      %v1467 = vunpack.c.l.b16 %v1320
      %v1468 = vunpack.c.h.b16 %v1320
      %v1469 = vunpack.c.l.b16 %v1321
      %v1470 = vunpack.c.h.b16 %v1321
      %v1471 = vunpack.c.l.b16 %v1322
      %v1472 = vunpack.c.h.b16 %v1322
      %v1473 = vunpack.c.l.b16 %v1323
      %v1474 = vunpack.c.h.b16 %v1323
      %v1475 = vunpack.c.l.b16 %v1324
      %v1476 = vunpack.c.h.b16 %v1324
      %v1477 = vunpack.c.l.b16 %v1325
      %v1478 = vunpack.c.h.b16 %v1325
      %v1479 = vunpack.c.l.b16 %v1326
      %v1480 = vunpack.c.h.b16 %v1326
      %v1481 = vunpack.c.l.b16 %v1327
      %v1482 = vunpack.c.h.b16 %v1327
      %v1483 = vunpack.c.l.b16 %v1328
      %v1484 = vunpack.c.h.b16 %v1328
      %v1485 = vunpack.c.l.b16 %v1329
      %v1486 = vunpack.c.h.b16 %v1329
      %v1487 = vunpack.c.l.b16 %v1330
      %v1488 = vunpack.c.h.b16 %v1330
      %v1489 = vunpack.c.l.b16 %v1331
      %v1490 = vunpack.c.h.b16 %v1331
      %v1491 = vunpack.c.l.b16 %v1332
      %v1492 = vunpack.c.h.b16 %v1332
      %v1493 = vunpack.c.l.b16 %v1333
      %v1494 = vunpack.c.h.b16 %v1333
      %v1495 = vunpack.c.l.b16 %v1334
      %v1496 = vunpack.c.h.b16 %v1334
      %v1497 = vunpack.c.l.b16 %v1335
      %v1498 = vunpack.c.h.b16 %v1335
      %v1499 = vunpack.c.l.b16 %v1336
      %v1500 = vunpack.c.h.b16 %v1336
      %v1501 = vunpack.c.l.b16 %v1337
      %v1502 = vunpack.c.h.b16 %v1337
      %v1503 = vunpack.c.l.b16 %v1338
      %v1504 = vunpack.c.h.b16 %v1338
      %v1505 = vunpack.c.l.b16 %v1339
      %v1506 = vunpack.c.h.b16 %v1339
      %v1507 = vunpack.c.l.b16 %v1340
      %v1508 = vunpack.c.h.b16 %v1340
      %v1509 = vunpack.c.l.b16 %v1341
      %v1510 = vunpack.c.h.b16 %v1341
      %v1511 = vunpack.c.l.b16 %v1342
      %v1512 = vunpack.c.h.b16 %v1342
      %v1513 = vunpack.c.l.b16 %v1343
      %v1514 = vunpack.c.h.b16 %v1343
      %v1515 = vunpack.c.l.b16 %v1344
      %v1516 = vunpack.c.h.b16 %v1344
      %v1517 = vunpack.c.l.b16 %v1345
      %v1518 = vunpack.c.h.b16 %v1345
      %v1519 = vunpack.c.l.b16 %v1346
      %v1520 = vunpack.c.h.b16 %v1346
      %v1521 = vunpack.c.l.b16 %v1347
      %v1522 = vunpack.c.h.b16 %v1347
      %v1523 = vunpack.c.l.b16 %v1348
      %v1524 = vunpack.c.h.b16 %v1348
      %v1525 = vunpack.c.l.b16 %v1349
      %v1526 = vunpack.c.h.b16 %v1349
      %v1527 = vunpack.c.l.b16 %v1350
      %v1528 = vunpack.c.h.b16 %v1350
      %v1529 = vunpack.c.l.b16 %v1351
      %v1530 = vunpack.c.h.b16 %v1351
      %v1531 = vunpack.c.l.b16 %v1352
      %v1532 = vunpack.c.h.b16 %v1352
      %v1533 = vunpack.c.l.b16 %v1353
      %v1534 = vunpack.c.h.b16 %v1353
      %v1535 = vunpack.c.l.b16 %v1354
      %v1536 = vunpack.c.h.b16 %v1354
      %v1537 = vunpack.c.l.b16 %v1355
      %v1538 = vunpack.c.h.b16 %v1355
      %v1539 = vunpack.c.l.b16 %v1356
      %v1540 = vunpack.c.h.b16 %v1356
      %v1541 = vunpack.c.l.b16 %v1357
      %v1542 = vunpack.c.h.b16 %v1357
      %v1543 = vunpack.c.l.b16 %v1358
      %v1544 = vunpack.c.h.b16 %v1358
      %v1545 = vunpack.c.l.b16 %v1359
      %v1546 = vunpack.c.h.b16 %v1359
      %v1547 = vunpack.c.l.b16 %v1360
      %v1548 = vunpack.c.h.b16 %v1360
      %v1549 = vunpack.c.l.b16 %v1361
      %v1550 = vunpack.c.h.b16 %v1361
      %v1551 = vunpack.c.l.b16 %v1362
      %v1552 = vunpack.c.h.b16 %v1362
      %v1553 = vunpack.c.l.b16 %v1363
      %v1554 = vunpack.c.h.b16 %v1363
      %v1555 = vunpack.c.l.b16 %v1364
      %v1556 = vunpack.c.h.b16 %v1364
      %v1557 = vunpack.c.l.b16 %v1365
      %v1558 = vunpack.c.h.b16 %v1365
      %v1559 = vunpack.c.l.b16 %v1366
      %v1560 = vunpack.c.h.b16 %v1366
      %v1561 = vunpack.c.l.b16 %v1367
      %v1562 = vunpack.c.h.b16 %v1367
      %v1563 = vunpack.c.l.b16 %v1368
      %v1564 = vunpack.c.h.b16 %v1368
      %v1565 = vunpack.c.l.b16 %v1369
      %v1566 = vunpack.c.h.b16 %v1369
      %v1567 = vunpack.c.l.b16 %v1370
      %v1568 = vunpack.c.h.b16 %v1370
      %v1569 = vunpack.c.l.b16 %v1371
      %v1570 = vunpack.c.h.b16 %v1371
      %v1571 = vunpack.c.l.b16 %v1372
      %v1572 = vunpack.c.h.b16 %v1372
      %v1573 = vunpack.c.l.b16 %v1373
      %v1574 = vunpack.c.h.b16 %v1373
      %v1575 = vunpack.c.l.b16 %v1374
      %v1576 = vunpack.c.h.b16 %v1374
      %v1577 = vunpack.c.l.b16 %v1375
      %v1578 = vunpack.c.h.b16 %v1375
      %v1579 = vunpack.c.l.b16 %v1376
      %v1580 = vunpack.c.h.b16 %v1376
      %v1581 = vunpack.c.l.b16 %v1377
      %v1582 = vunpack.c.h.b16 %v1377
      %v1583 = vunpack.c.l.b16 %v1378
      %v1584 = vunpack.c.h.b16 %v1378
      %v1585 = vunpack.c.l.b16 %v1379
      %v1586 = vunpack.c.h.b16 %v1379
      %v1587 = vunpack.c.l.b16 %v1380
      %v1588 = vunpack.c.h.b16 %v1380
      %v1589 = vunpack.c.l.b16 %v1381
      %v1590 = vunpack.c.h.b16 %v1381
      %v1591 = vunpack.c.l.b16 %v1382
      %v1592 = vunpack.c.h.b16 %v1382
      %v1593 = vunpack.c.l.b16 %v1383
      %v1594 = vunpack.c.h.b16 %v1383
      %v1595 = vunpack.c.l.b16 %v1384
      %v1596 = vunpack.c.h.b16 %v1384
      %v1597 = vunpack.c.l.b16 %v1385
      %v1598 = vunpack.c.h.b16 %v1385
      %v1599 = vunpack.c.l.b16 %v1386
      %v1600 = vunpack.c.h.b16 %v1386
      %v1601 = vunpack.c.l.b16 %v1387
      %v1602 = vunpack.c.h.b16 %v1387
      %v1603 = vunpack.c.l.b16 %v1388
      %v1604 = vunpack.c.h.b16 %v1388
      %v1605 = vpack.c.b16 %v1467, %v1461
      %v1606 = vpack.c.b16 %v1468, %v1462
      %v1607 = vpack.c.b16 %v1469, %v1463
      %v1608 = vpack.c.b16 %v1470, %v1464
      %v1609 = vpack.c.b16 %v1471, %v1465
      %v1610 = vpack.c.b16 %v1472, %v1466
      %v1611 = vpack.c.b16 %v1479, %v1473
      %v1612 = vpack.c.b16 %v1480, %v1474
      %v1613 = vpack.c.b16 %v1481, %v1475
      %v1614 = vpack.c.b16 %v1482, %v1476
      %v1615 = vpack.c.b16 %v1483, %v1477
      %v1616 = vpack.c.b16 %v1484, %v1478
      %v1617 = vpack.c.b16 %v1491, %v1485
      %v1618 = vpack.c.b16 %v1492, %v1486
      %v1619 = vpack.c.b16 %v1493, %v1487
      %v1620 = vpack.c.b16 %v1494, %v1488
      %v1621 = vpack.c.b16 %v1495, %v1489
      %v1622 = vpack.c.b16 %v1496, %v1490
      %v1623 = vpack.c.b16 %v1503, %v1497
      %v1624 = vpack.c.b16 %v1504, %v1498
      %v1625 = vpack.c.b16 %v1505, %v1499
      %v1626 = vpack.c.b16 %v1506, %v1500
      %v1627 = vpack.c.b16 %v1507, %v1501
      %v1628 = vpack.c.b16 %v1508, %v1502
      %v1629 = vpack.c.b16 %v1515, %v1509
      %v1630 = vpack.c.b16 %v1516, %v1510
      %v1631 = vpack.c.b16 %v1517, %v1511
      %v1632 = vpack.c.b16 %v1518, %v1512
      %v1633 = vpack.c.b16 %v1519, %v1513
      %v1634 = vpack.c.b16 %v1520, %v1514
      %v1635 = vpack.c.b16 %v1527, %v1521
      %v1636 = vpack.c.b16 %v1528, %v1522
      %v1637 = vpack.c.b16 %v1529, %v1523
      %v1638 = vpack.c.b16 %v1530, %v1524
      %v1639 = vpack.c.b16 %v1531, %v1525
      %v1640 = vpack.c.b16 %v1532, %v1526
      %v1641 = vpack.c.b16 %v1539, %v1533
      %v1642 = vpack.c.b16 %v1540, %v1534
      %v1643 = vpack.c.b16 %v1541, %v1535
      %v1644 = vpack.c.b16 %v1542, %v1536
      %v1645 = vpack.c.b16 %v1543, %v1537
      %v1646 = vpack.c.b16 %v1544, %v1538
      %v1647 = vpack.c.b16 %v1551, %v1545
      %v1648 = vpack.c.b16 %v1552, %v1546
      %v1649 = vpack.c.b16 %v1553, %v1547
      %v1650 = vpack.c.b16 %v1554, %v1548
      %v1651 = vpack.c.b16 %v1555, %v1549
      %v1652 = vpack.c.b16 %v1556, %v1550
      %v1653 = vpack.c.b16 %v1563, %v1557
      %v1654 = vpack.c.b16 %v1564, %v1558
      %v1655 = vpack.c.b16 %v1565, %v1559
      %v1656 = vpack.c.b16 %v1566, %v1560
      %v1657 = vpack.c.b16 %v1567, %v1561
      %v1658 = vpack.c.b16 %v1568, %v1562
      %v1659 = vpack.c.b16 %v1575, %v1569
      %v1660 = vpack.c.b16 %v1576, %v1570
      %v1661 = vpack.c.b16 %v1577, %v1571
      %v1662 = vpack.c.b16 %v1578, %v1572
      %v1663 = vpack.c.b16 %v1579, %v1573
      %v1664 = vpack.c.b16 %v1580, %v1574
      %v1665 = vpack.c.b16 %v1587, %v1581
      %v1666 = vpack.c.b16 %v1588, %v1582
      %v1667 = vpack.c.b16 %v1589, %v1583
      %v1668 = vpack.c.b16 %v1590, %v1584
      %v1669 = vpack.c.b16 %v1591, %v1585
      %v1670 = vpack.c.b16 %v1592, %v1586
      %v1671 = vpack.c.b16 %v1599, %v1593
      %v1672 = vpack.c.b16 %v1600, %v1594
      %v1673 = vpack.c.b16 %v1601, %v1595
      %v1674 = vpack.c.b16 %v1602, %v1596
      %v1675 = vpack.c.b16 %v1603, %v1597
      %v1676 = vpack.c.b16 %v1604, %v1598
      %vm1749 = vcmask 523264
      %v1751 = vsel %vm1749, %v1310, 0
      %v1754 = vsel %vm1749, %v1312, 0
      %v1757 = vsel %vm1749, %v1314, 0
      %v1760 = vsel %vm1749, %v1316, 0
      %1762 = vmatprep.subr.bf16.mxu0 %v1606
      %1763 = vmatpush1.bf16.msra.mxu0 %v1605
      %1764 = vmatprep.subr.bf16.mxu0 %v1612
      %1765 = vmatpush1.bf16.msra.mxu0 %v1611
      %1766 = vmatprep.subr.bf16.mxu0 %v1618
      %1767 = vmatpush1.bf16.msra.mxu0 %v1617
      %1768 = vmatprep.subr.bf16.mxu0 %v1624
      %1769 = vmatpush1.bf16.msra.mxu0 %v1623
      %1770 = vmatprep.subr.bf16.mxu0 %v1630
      %1771 = vmatpush1.bf16.msra.mxu0 %v1629
      %1772 = vmatprep.subr.bf16.mxu0 %v1636
      %1773 = vmatpush1.bf16.msra.mxu0 %v1635
      %1774 = vmatprep.subr.bf16.mxu0 %v1642
      %1775 = vmatpush1.bf16.msra.mxu0 %v1641
      %1776 = vmatprep.subr.bf16.mxu0 %v1648
      %1777 = vmatpush1.bf16.msra.mxu0 %v1647
      %1778 = vmatprep.subr.bf16.mxu0 %v1654
      %1779 = vmatpush1.bf16.msra.mxu0 %v1653
      %1780 = vmatprep.subr.bf16.mxu0 %v1660
      %1781 = vmatpush1.bf16.msra.mxu0 %v1659
      %1782 = vmatprep.subr.bf16.mxu0 %v1666
      %1783 = vmatpush1.bf16.msra.mxu0 %v1665
      %1784 = vmatprep.subr.bf16.mxu0 %v1672
      %1785 = vmatpush1.bf16.msra.mxu0 %v1671
      %1786 = vmatprep.subr.bf16.mxu0 0
      %1787 = vmatpush1.bf16.msra.mxu0 0
      %1788 = vmatprep.subr.bf16.mxu0 0
      %1789 = vmatpush1.bf16.msra.mxu0 0
      %1790 = vmatprep.subr.bf16.mxu0 0
      %1791 = vmatpush1.bf16.msra.mxu0 0
      %1792 = vmatprep.subr.bf16.mxu0 0
      %1793 = vmatpush1.bf16.msra.mxu0 0
      %1794 = vmatprep.mubr.bf16.mxu0 %v1751
      %1795 = vmatmul.mubr.bf16.gmra.mrb[0].mxu0 %v1309
      %v1796 = vpop.f32.mrb[0].mxu0
      %v1797 = vadd.f32 0.0, %v1796
      %v1798 = vpop.f32.mrb[0].mxu0
      %v1799 = vadd.f32 0.0, %v1798
      %v1800 = vpop.f32.mrb[0].mxu0
      %v1801 = vadd.f32 0.0, %v1800
      %v1802 = vpop.f32.mrb[0].mxu0
      %v1803 = vadd.f32 0.0, %v1802
      %1804 = vmatprep.mubr.bf16.mxu0 %v1754
      %1805 = vmatmul.mubr.bf16.gmra.mrb[0].mxu0 %v1311
      %v1806 = vpop.f32.mrb[0].mxu0
      %v1807 = vadd.f32 0.0, %v1806
      %v1808 = vpop.f32.mrb[0].mxu0
      %v1809 = vadd.f32 0.0, %v1808
      %v1810 = vpop.f32.mrb[0].mxu0
      %v1811 = vadd.f32 0.0, %v1810
      %v1812 = vpop.f32.mrb[0].mxu0
      %v1813 = vadd.f32 0.0, %v1812
      %1814 = vmatprep.mubr.bf16.mxu0 %v1757
      %1815 = vmatmul.mubr.bf16.gmra.mrb[0].mxu0 %v1313
      %v1816 = vpop.f32.mrb[0].mxu0
      %v1817 = vadd.f32 0.0, %v1816
      %v1818 = vpop.f32.mrb[0].mxu0
      %v1819 = vadd.f32 0.0, %v1818
      %v1820 = vpop.f32.mrb[0].mxu0
      %v1821 = vadd.f32 0.0, %v1820
      %v1822 = vpop.f32.mrb[0].mxu0
      %v1823 = vadd.f32 0.0, %v1822
      %1824 = vmatprep.mubr.bf16.mxu0 %v1760
      %1825 = vmatmul.mubr.bf16.gmra.mrb[0].mxu0 %v1315
      %v1826 = vpop.f32.mrb[0].mxu0
      %v1827 = vadd.f32 0.0, %v1826
      %v1828 = vpop.f32.mrb[0].mxu0
      %v1829 = vadd.f32 0.0, %v1828
      %v1830 = vpop.f32.mrb[0].mxu0
      %v1831 = vadd.f32 0.0, %v1830
      %v1832 = vpop.f32.mrb[0].mxu0
      %v1833 = vadd.f32 0.0, %v1832
      %1834 = vdwg.mxu0
      %1835 = vmatprep.subr.bf16.mxu0 %v1608
      %1836 = vmatpush1.bf16.msra.mxu0 %v1607
      %1837 = vmatprep.subr.bf16.mxu0 %v1614
      %1838 = vmatpush1.bf16.msra.mxu0 %v1613
      %1839 = vmatprep.subr.bf16.mxu0 %v1620
      %1840 = vmatpush1.bf16.msra.mxu0 %v1619
      %1841 = vmatprep.subr.bf16.mxu0 %v1626
      %1842 = vmatpush1.bf16.msra.mxu0 %v1625
      %1843 = vmatprep.subr.bf16.mxu0 %v1632
      %1844 = vmatpush1.bf16.msra.mxu0 %v1631
      %1845 = vmatprep.subr.bf16.mxu0 %v1638
      %1846 = vmatpush1.bf16.msra.mxu0 %v1637
      %1847 = vmatprep.subr.bf16.mxu0 %v1644
      %1848 = vmatpush1.bf16.msra.mxu0 %v1643
      %1849 = vmatprep.subr.bf16.mxu0 %v1650
      %1850 = vmatpush1.bf16.msra.mxu0 %v1649
      %1851 = vmatprep.subr.bf16.mxu0 %v1656
      %1852 = vmatpush1.bf16.msra.mxu0 %v1655
      %1853 = vmatprep.subr.bf16.mxu0 %v1662
      %1854 = vmatpush1.bf16.msra.mxu0 %v1661
      %1855 = vmatprep.subr.bf16.mxu0 %v1668
      %1856 = vmatpush1.bf16.msra.mxu0 %v1667
      %1857 = vmatprep.subr.bf16.mxu0 %v1674
      %1858 = vmatpush1.bf16.msra.mxu0 %v1673
      %1859 = vmatprep.subr.bf16.mxu0 0
      %1860 = vmatpush1.bf16.msra.mxu0 0
      %1861 = vmatprep.subr.bf16.mxu0 0
      %1862 = vmatpush1.bf16.msra.mxu0 0
      %1863 = vmatprep.subr.bf16.mxu0 0
      %1864 = vmatpush1.bf16.msra.mxu0 0
      %1865 = vmatprep.subr.bf16.mxu0 0
      %1866 = vmatpush1.bf16.msra.mxu0 0
      %1867 = vmatprep.mubr.bf16.mxu0 %v1751
      %1868 = vmatmul.mubr.bf16.gmra.mrb[0].mxu0 %v1309
      %v1869 = vpop.f32.mrb[0].mxu0
      %v1870 = vadd.f32 0.0, %v1869
      %v1871 = vpop.f32.mrb[0].mxu0
      %v1872 = vadd.f32 0.0, %v1871
      %v1873 = vpop.f32.mrb[0].mxu0
      %v1874 = vadd.f32 0.0, %v1873
      %v1875 = vpop.f32.mrb[0].mxu0
      %v1876 = vadd.f32 0.0, %v1875
      %1877 = vmatprep.mubr.bf16.mxu0 %v1754
      %1878 = vmatmul.mubr.bf16.gmra.mrb[0].mxu0 %v1311
      %v1879 = vpop.f32.mrb[0].mxu0
      %v1880 = vadd.f32 0.0, %v1879
      %v1881 = vpop.f32.mrb[0].mxu0
      %v1882 = vadd.f32 0.0, %v1881
      %v1883 = vpop.f32.mrb[0].mxu0
      %v1884 = vadd.f32 0.0, %v1883
      %v1885 = vpop.f32.mrb[0].mxu0
      %v1886 = vadd.f32 0.0, %v1885
      %1887 = vmatprep.mubr.bf16.mxu0 %v1757
      %1888 = vmatmul.mubr.bf16.gmra.mrb[0].mxu0 %v1313
      %v1889 = vpop.f32.mrb[0].mxu0
      %v1890 = vadd.f32 0.0, %v1889
      %v1891 = vpop.f32.mrb[0].mxu0
      %v1892 = vadd.f32 0.0, %v1891
      %v1893 = vpop.f32.mrb[0].mxu0
      %v1894 = vadd.f32 0.0, %v1893
      %v1895 = vpop.f32.mrb[0].mxu0
      %v1896 = vadd.f32 0.0, %v1895
      %1897 = vmatprep.mubr.bf16.mxu0 %v1760
      %1898 = vmatmul.mubr.bf16.gmra.mrb[0].mxu0 %v1315
      %v1899 = vpop.f32.mrb[0].mxu0
      %v1900 = vadd.f32 0.0, %v1899
      %v1901 = vpop.f32.mrb[0].mxu0
      %v1902 = vadd.f32 0.0, %v1901
      %v1903 = vpop.f32.mrb[0].mxu0
      %v1904 = vadd.f32 0.0, %v1903
      %v1905 = vpop.f32.mrb[0].mxu0
      %v1906 = vadd.f32 0.0, %v1905
      %1907 = vdwg.mxu0
      %1908 = vmatprep.subr.bf16.mxu0 %v1610
      %1909 = vmatpush1.bf16.msra.mxu0 %v1609
      %1910 = vmatprep.subr.bf16.mxu0 %v1616
      %1911 = vmatpush1.bf16.msra.mxu0 %v1615
      %1912 = vmatprep.subr.bf16.mxu0 %v1622
      %1913 = vmatpush1.bf16.msra.mxu0 %v1621
      %1914 = vmatprep.subr.bf16.mxu0 %v1628
      %1915 = vmatpush1.bf16.msra.mxu0 %v1627
      %1916 = vmatprep.subr.bf16.mxu0 %v1634
      %1917 = vmatpush1.bf16.msra.mxu0 %v1633
      %1918 = vmatprep.subr.bf16.mxu0 %v1640
      %1919 = vmatpush1.bf16.msra.mxu0 %v1639
      %1920 = vmatprep.subr.bf16.mxu0 %v1646
      %1921 = vmatpush1.bf16.msra.mxu0 %v1645
      %1922 = vmatprep.subr.bf16.mxu0 %v1652
      %1923 = vmatpush1.bf16.msra.mxu0 %v1651
      %1924 = vmatprep.subr.bf16.mxu0 %v1658
      %1925 = vmatpush1.bf16.msra.mxu0 %v1657
      %1926 = vmatprep.subr.bf16.mxu0 %v1664
      %1927 = vmatpush1.bf16.msra.mxu0 %v1663
      %1928 = vmatprep.subr.bf16.mxu0 %v1670
      %1929 = vmatpush1.bf16.msra.mxu0 %v1669
      %1930 = vmatprep.subr.bf16.mxu0 %v1676
      %1931 = vmatpush1.bf16.msra.mxu0 %v1675
      %1932 = vmatprep.subr.bf16.mxu0 0
      %1933 = vmatpush1.bf16.msra.mxu0 0
      %1934 = vmatprep.subr.bf16.mxu0 0
      %1935 = vmatpush1.bf16.msra.mxu0 0
      %1936 = vmatprep.subr.bf16.mxu0 0
      %1937 = vmatpush1.bf16.msra.mxu0 0
      %1938 = vmatprep.subr.bf16.mxu0 0
      %1939 = vmatpush1.bf16.msra.mxu0 0
      %1940 = vmatprep.mubr.bf16.mxu0 %v1751
      %1941 = vmatmul.mubr.bf16.gmra.mrb[0].mxu0 %v1309
      %v1942 = vpop.f32.mrb[0].mxu0
      %v1943 = vadd.f32 0.0, %v1942
      %v1944 = vpop.f32.mrb[0].mxu0
      %v1945 = vadd.f32 0.0, %v1944
      %v1946 = vpop.f32.mrb[0].mxu0
      %v1947 = vadd.f32 0.0, %v1946
      %v1948 = vpop.f32.mrb[0].mxu0
      %v1949 = vadd.f32 0.0, %v1948
      %1950 = vmatprep.mubr.bf16.mxu0 %v1754
      %1951 = vmatmul.mubr.bf16.gmra.mrb[0].mxu0 %v1311
      %v1952 = vpop.f32.mrb[0].mxu0
      %v1953 = vadd.f32 0.0, %v1952
      %v1954 = vpop.f32.mrb[0].mxu0
      %v1955 = vadd.f32 0.0, %v1954
      %v1956 = vpop.f32.mrb[0].mxu0
      %v1957 = vadd.f32 0.0, %v1956
      %v1958 = vpop.f32.mrb[0].mxu0
      %v1959 = vadd.f32 0.0, %v1958
      %1960 = vmatprep.mubr.bf16.mxu0 %v1757
      %1961 = vmatmul.mubr.bf16.gmra.mrb[0].mxu0 %v1313
      %v1962 = vpop.f32.mrb[0].mxu0
      %v1963 = vadd.f32 0.0, %v1962
      %v1964 = vpop.f32.mrb[0].mxu0
      %v1965 = vadd.f32 0.0, %v1964
      %v1966 = vpop.f32.mrb[0].mxu0
      %v1967 = vadd.f32 0.0, %v1966
      %v1968 = vpop.f32.mrb[0].mxu0
      %v1969 = vadd.f32 0.0, %v1968
      %1970 = vmatprep.mubr.bf16.mxu0 %v1760
      %1971 = vmatmul.mubr.bf16.gmra.mrb[0].mxu0 %v1315
      %v1972 = vpop.f32.mrb[0].mxu0
      %v1973 = vadd.f32 0.0, %v1972
      %v1974 = vpop.f32.mrb[0].mxu0
      %v1975 = vadd.f32 0.0, %v1974
      %v1976 = vpop.f32.mrb[0].mxu0
      %v1977 = vadd.f32 0.0, %v1976
      %v1978 = vpop.f32.mrb[0].mxu0
      %v1979 = vadd.f32 0.0, %v1978
      %1980 = vdwg.mxu0
      %v1981 = vld [vmem:[%s3] sm:$0xff]
      %v1982 = vld [vmem:[%s3 + $0x8] sm:$0xff]
      %v1983 = vld [vmem:[%s3 + $0x10] sm:$0xff]
      %v1984 = vld [vmem:[%s3 + $0x18] sm:$0xff]
      %s1985 = scalar_lea.vmem %s3, 32
      %v1986 = vld [vmem:[%s1985] sm:$0xff]
      %v1987 = vld [vmem:[%s1985 + $0x8] sm:$0xff]
      %v1988 = vld [vmem:[%s1985 + $0x10] sm:$0xff]
      %v1989 = vld [vmem:[%s1985 + $0x18] sm:$0xff]
      %v1991 = vsel %vm1749, %v1986, 0
      %v1994 = vsel %vm1749, %v1987, 0
      %v1997 = vsel %vm1749, %v1988, 0
      %v2000 = vsel %vm1749, %v1989, 0
      %2002 = vmatprep.subr.mxu0 %v1872
      %2003 = vmatpush1.msra.mxu0 %v1870
      %2004 = vmatprep.subr.mxu0 %v1876
      %2005 = vmatpush1.msra.mxu0 %v1874
      %2006 = vmatprep.subr.mxu0 %v1882
      %2007 = vmatpush1.msra.mxu0 %v1880
      %2008 = vmatprep.subr.mxu0 %v1886
      %2009 = vmatpush1.msra.mxu0 %v1884
      %2010 = vmatprep.subr.mxu0 %v1892
      %2011 = vmatpush1.msra.mxu0 %v1890
      %2012 = vmatprep.subr.mxu0 %v1896
      %2013 = vmatpush1.msra.mxu0 %v1894
      %2014 = vmatprep.subr.mxu0 %v1902
      %2015 = vmatpush1.msra.mxu0 %v1900
      %2016 = vmatprep.subr.mxu0 %v1906
      %2017 = vmatpush1.msra.mxu0 %v1904
      %2018 = vmatprep.subr.mxu0 0.0
      %2019 = vmatpush1.msra.mxu0 0.0
      %2020 = vmatprep.subr.mxu0 0.0
      %2021 = vmatpush1.msra.mxu0 0.0
      %2022 = vmatprep.subr.mxu0 0.0
      %2023 = vmatpush1.msra.mxu0 0.0
      %2024 = vmatprep.subr.mxu0 0.0
      %2025 = vmatpush1.msra.mxu0 0.0
      %2026 = vmatprep.subr.mxu0 0.0
      %2027 = vmatpush1.msra.mxu0 0.0
      %2028 = vmatprep.subr.mxu0 0.0
      %2029 = vmatpush1.msra.mxu0 0.0
      %2030 = vmatprep.subr.mxu0 0.0
      %2031 = vmatpush1.msra.mxu0 0.0
      %2032 = vmatprep.subr.mxu0 0.0
      %2033 = vmatpush1.msra.mxu0 0.0
      %2034 = vmatprep.subr.mxu0 0.0
      %2035 = vmatpush1.msra.mxu0 0.0
      %2036 = vmatprep.subr.mxu0 0.0
      %2037 = vmatpush1.msra.mxu0 0.0
      %2038 = vmatprep.subr.mxu0 0.0
      %2039 = vmatpush1.msra.mxu0 0.0
      %2040 = vmatprep.subr.mxu0 0.0
      %2041 = vmatpush1.msra.mxu0 0.0
      %2042 = vmatprep.subr.mxu0 0.0
      %2043 = vmatpush1.msra.mxu0 0.0
      %2044 = vmatprep.subr.mxu0 0.0
      %2045 = vmatpush1.msra.mxu0 0.0
      %2046 = vmatprep.subr.mxu0 0.0
      %2047 = vmatpush1.msra.mxu0 0.0
      %2048 = vmatprep.subr.mxu0 0.0
      %2049 = vmatpush1.msra.mxu0 0.0
      %2050 = vmatprep.subr.mxu0 0.0
      %2051 = vmatpush1.msra.mxu0 0.0
      %2052 = vmatprep.subr.mxu0 0.0
      %2053 = vmatpush1.msra.mxu0 0.0
      %2054 = vmatprep.subr.mxu0 0.0
      %2055 = vmatpush1.msra.mxu0 0.0
      %2056 = vmatprep.subr.mxu0 0.0
      %2057 = vmatpush1.msra.mxu0 0.0
      %2058 = vmatprep.subr.mxu0 0.0
      %2059 = vmatpush1.msra.mxu0 0.0
      %2060 = vmatprep.subr.mxu0 0.0
      %2061 = vmatpush1.msra.mxu0 0.0
      %2062 = vmatprep.subr.mxu0 0.0
      %2063 = vmatpush1.msra.mxu0 0.0
      %2064 = vmatprep.subr.mxu0 0.0
      %2065 = vmatpush1.msra.mxu0 0.0
      %2066 = vmatprep.mubr.f32.mxu0 0.0
      %2067 = vmatmul.mubr.f32.gmra.mrb[0].mxu0 %v1991
      %v2068 = vpop.f32.mrb[0].mxu0
      %v2069 = vadd.f32 0.0, %v2068
      %v2070 = vpop.f32.mrb[0].mxu0
      %v2071 = vadd.f32 0.0, %v2070
      %2072 = vmatprep.mubr.f32.mxu0 0.0
      %2073 = vmatmul.mubr.f32.gmra.mrb[0].mxu0 %v1994
      %v2074 = vpop.f32.mrb[0].mxu0
      %v2075 = vadd.f32 0.0, %v2074
      %v2076 = vpop.f32.mrb[0].mxu0
      %v2077 = vadd.f32 0.0, %v2076
      %2078 = vmatprep.mubr.f32.mxu0 0.0
      %2079 = vmatmul.mubr.f32.gmra.mrb[0].mxu0 %v1997
      %v2080 = vpop.f32.mrb[0].mxu0
      %v2081 = vadd.f32 0.0, %v2080
      %v2082 = vpop.f32.mrb[0].mxu0
      %v2083 = vadd.f32 0.0, %v2082
      %2084 = vmatprep.mubr.f32.mxu0 0.0
      %2085 = vmatmul.mubr.f32.gmra.mrb[0].mxu0 %v2000
      %v2086 = vpop.f32.mrb[0].mxu0
      %v2087 = vadd.f32 0.0, %v2086
      %v2088 = vpop.f32.mrb[0].mxu0
      %v2089 = vadd.f32 0.0, %v2088
      %2090 = vdwg.mxu0
      %v2092 = vsel %vm1749, %v1981, 0
      %v2095 = vsel %vm1749, %v1982, 0
      %v2098 = vsel %vm1749, %v1983, 0
      %v2101 = vsel %vm1749, %v1984, 0
      %2103 = vmatprep.subr.mxu0 %v1799
      %2104 = vmatpush1.msra.mxu0 %v1797
      %2105 = vmatprep.subr.mxu0 %v1803
      %2106 = vmatpush1.msra.mxu0 %v1801
      %2107 = vmatprep.subr.mxu0 %v1809
      %2108 = vmatpush1.msra.mxu0 %v1807
      %2109 = vmatprep.subr.mxu0 %v1813
      %2110 = vmatpush1.msra.mxu0 %v1811
      %2111 = vmatprep.subr.mxu0 %v1819
      %2112 = vmatpush1.msra.mxu0 %v1817
      %2113 = vmatprep.subr.mxu0 %v1823
      %2114 = vmatpush1.msra.mxu0 %v1821
      %2115 = vmatprep.subr.mxu0 %v1829
      %2116 = vmatpush1.msra.mxu0 %v1827
      %2117 = vmatprep.subr.mxu0 %v1833
      %2118 = vmatpush1.msra.mxu0 %v1831
      %2119 = vmatprep.subr.mxu0 0.0
      %2120 = vmatpush1.msra.mxu0 0.0
      %2121 = vmatprep.subr.mxu0 0.0
      %2122 = vmatpush1.msra.mxu0 0.0
      %2123 = vmatprep.subr.mxu0 0.0
      %2124 = vmatpush1.msra.mxu0 0.0
      %2125 = vmatprep.subr.mxu0 0.0
      %2126 = vmatpush1.msra.mxu0 0.0
      %2127 = vmatprep.subr.mxu0 0.0
      %2128 = vmatpush1.msra.mxu0 0.0
      %2129 = vmatprep.subr.mxu0 0.0
      %2130 = vmatpush1.msra.mxu0 0.0
      %2131 = vmatprep.subr.mxu0 0.0
      %2132 = vmatpush1.msra.mxu0 0.0
      %2133 = vmatprep.subr.mxu0 0.0
      %2134 = vmatpush1.msra.mxu0 0.0
      %2135 = vmatprep.subr.mxu0 0.0
      %2136 = vmatpush1.msra.mxu0 0.0
      %2137 = vmatprep.subr.mxu0 0.0
      %2138 = vmatpush1.msra.mxu0 0.0
      %2139 = vmatprep.subr.mxu0 0.0
      %2140 = vmatpush1.msra.mxu0 0.0
      %2141 = vmatprep.subr.mxu0 0.0
      %2142 = vmatpush1.msra.mxu0 0.0
      %2143 = vmatprep.subr.mxu0 0.0
      %2144 = vmatpush1.msra.mxu0 0.0
      %2145 = vmatprep.subr.mxu0 0.0
      %2146 = vmatpush1.msra.mxu0 0.0
      %2147 = vmatprep.subr.mxu0 0.0
      %2148 = vmatpush1.msra.mxu0 0.0
      %2149 = vmatprep.subr.mxu0 0.0
      %2150 = vmatpush1.msra.mxu0 0.0
      %2151 = vmatprep.subr.mxu0 0.0
      %2152 = vmatpush1.msra.mxu0 0.0
      %2153 = vmatprep.subr.mxu0 0.0
      %2154 = vmatpush1.msra.mxu0 0.0
      %2155 = vmatprep.subr.mxu0 0.0
      %2156 = vmatpush1.msra.mxu0 0.0
      %2157 = vmatprep.subr.mxu0 0.0
      %2158 = vmatpush1.msra.mxu0 0.0
      %2159 = vmatprep.subr.mxu0 0.0
      %2160 = vmatpush1.msra.mxu0 0.0
      %2161 = vmatprep.subr.mxu0 0.0
      %2162 = vmatpush1.msra.mxu0 0.0
      %2163 = vmatprep.subr.mxu0 0.0
      %2164 = vmatpush1.msra.mxu0 0.0
      %2165 = vmatprep.subr.mxu0 0.0
      %2166 = vmatpush1.msra.mxu0 0.0
      %2167 = vmatprep.mubr.f32.mxu0 0.0
      %2168 = vmatmul.mubr.f32.gmra.mrb[0].mxu0 %v2092
      %v2169 = vpop.f32.mrb[0].mxu0
      %v2170 = vadd.f32 %v2069, %v2169
      %v2171 = vpop.f32.mrb[0].mxu0
      %v2172 = vadd.f32 %v2071, %v2171
      %2173 = vmatprep.mubr.f32.mxu0 0.0
      %2174 = vmatmul.mubr.f32.gmra.mrb[0].mxu0 %v2095
      %v2175 = vpop.f32.mrb[0].mxu0
      %v2176 = vadd.f32 %v2075, %v2175
      %v2177 = vpop.f32.mrb[0].mxu0
      %v2178 = vadd.f32 %v2077, %v2177
      %2179 = vmatprep.mubr.f32.mxu0 0.0
      %2180 = vmatmul.mubr.f32.gmra.mrb[0].mxu0 %v2098
      %v2181 = vpop.f32.mrb[0].mxu0
      %v2182 = vadd.f32 %v2081, %v2181
      %v2183 = vpop.f32.mrb[0].mxu0
      %v2184 = vadd.f32 %v2083, %v2183
      %2185 = vmatprep.mubr.f32.mxu0 0.0
      %2186 = vmatmul.mubr.f32.gmra.mrb[0].mxu0 %v2101
      %v2187 = vpop.f32.mrb[0].mxu0
      %v2188 = vadd.f32 %v2087, %v2187
      %v2189 = vpop.f32.mrb[0].mxu0
      %v2190 = vadd.f32 %v2089, %v2189
      %2191 = vdwg.mxu0
      %s2192 = scalar_lea.vmem %s3, 64
      %v2193 = vld [vmem:[%s2192] sm:$0xff]
      %v2194 = vld [vmem:[%s2192 + $0x8] sm:$0xff]
      %v2195 = vld [vmem:[%s2192 + $0x10] sm:$0xff]
      %v2196 = vld [vmem:[%s2192 + $0x18] sm:$0xff]
      %v2198 = vsel %vm1749, %v2193, 0
      %v2201 = vsel %vm1749, %v2194, 0
      %v2204 = vsel %vm1749, %v2195, 0
      %v2207 = vsel %vm1749, %v2196, 0
      %2209 = vmatprep.subr.mxu0 %v1945
      %2210 = vmatpush1.msra.mxu0 %v1943
      %2211 = vmatprep.subr.mxu0 %v1949
      %2212 = vmatpush1.msra.mxu0 %v1947
      %2213 = vmatprep.subr.mxu0 %v1955
      %2214 = vmatpush1.msra.mxu0 %v1953
      %2215 = vmatprep.subr.mxu0 %v1959
      %2216 = vmatpush1.msra.mxu0 %v1957
      %2217 = vmatprep.subr.mxu0 %v1965
      %2218 = vmatpush1.msra.mxu0 %v1963
      %2219 = vmatprep.subr.mxu0 %v1969
      %2220 = vmatpush1.msra.mxu0 %v1967
      %2221 = vmatprep.subr.mxu0 %v1975
      %2222 = vmatpush1.msra.mxu0 %v1973
      %2223 = vmatprep.subr.mxu0 %v1979
      %2224 = vmatpush1.msra.mxu0 %v1977
      %2225 = vmatprep.subr.mxu0 0.0
      %2226 = vmatpush1.msra.mxu0 0.0
      %2227 = vmatprep.subr.mxu0 0.0
      %2228 = vmatpush1.msra.mxu0 0.0
      %2229 = vmatprep.subr.mxu0 0.0
      %2230 = vmatpush1.msra.mxu0 0.0
      %2231 = vmatprep.subr.mxu0 0.0
      %2232 = vmatpush1.msra.mxu0 0.0
      %2233 = vmatprep.subr.mxu0 0.0
      %2234 = vmatpush1.msra.mxu0 0.0
      %2235 = vmatprep.subr.mxu0 0.0
      %2236 = vmatpush1.msra.mxu0 0.0
      %2237 = vmatprep.subr.mxu0 0.0
      %2238 = vmatpush1.msra.mxu0 0.0
      %2239 = vmatprep.subr.mxu0 0.0
      %2240 = vmatpush1.msra.mxu0 0.0
      %2241 = vmatprep.subr.mxu0 0.0
      %2242 = vmatpush1.msra.mxu0 0.0
      %2243 = vmatprep.subr.mxu0 0.0
      %2244 = vmatpush1.msra.mxu0 0.0
      %2245 = vmatprep.subr.mxu0 0.0
      %2246 = vmatpush1.msra.mxu0 0.0
      %2247 = vmatprep.subr.mxu0 0.0
      %2248 = vmatpush1.msra.mxu0 0.0
      %2249 = vmatprep.subr.mxu0 0.0
      %2250 = vmatpush1.msra.mxu0 0.0
      %2251 = vmatprep.subr.mxu0 0.0
      %2252 = vmatpush1.msra.mxu0 0.0
      %2253 = vmatprep.subr.mxu0 0.0
      %2254 = vmatpush1.msra.mxu0 0.0
      %2255 = vmatprep.subr.mxu0 0.0
      %2256 = vmatpush1.msra.mxu0 0.0
      %2257 = vmatprep.subr.mxu0 0.0
      %2258 = vmatpush1.msra.mxu0 0.0
      %2259 = vmatprep.subr.mxu0 0.0
      %2260 = vmatpush1.msra.mxu0 0.0
      %2261 = vmatprep.subr.mxu0 0.0
      %2262 = vmatpush1.msra.mxu0 0.0
      %2263 = vmatprep.subr.mxu0 0.0
      %2264 = vmatpush1.msra.mxu0 0.0
      %2265 = vmatprep.subr.mxu0 0.0
      %2266 = vmatpush1.msra.mxu0 0.0
      %2267 = vmatprep.subr.mxu0 0.0
      %2268 = vmatpush1.msra.mxu0 0.0
      %2269 = vmatprep.subr.mxu0 0.0
      %2270 = vmatpush1.msra.mxu0 0.0
      %2271 = vmatprep.subr.mxu0 0.0
      %2272 = vmatpush1.msra.mxu0 0.0
      %2273 = vmatprep.mubr.f32.mxu0 0.0
      %2274 = vmatmul.mubr.f32.gmra.mrb[0].mxu0 %v2198
      %v2275 = vpop.f32.mrb[0].mxu0
      %v2276 = vadd.f32 0.0, %v2275
      %v2277 = vpop.f32.mrb[0].mxu0
      %v2278 = vadd.f32 0.0, %v2277
      %2279 = vmatprep.mubr.f32.mxu0 0.0
      %2280 = vmatmul.mubr.f32.gmra.mrb[0].mxu0 %v2201
      %v2281 = vpop.f32.mrb[0].mxu0
      %v2282 = vadd.f32 0.0, %v2281
      %v2283 = vpop.f32.mrb[0].mxu0
      %v2284 = vadd.f32 0.0, %v2283
      %2285 = vmatprep.mubr.f32.mxu0 0.0
      %2286 = vmatmul.mubr.f32.gmra.mrb[0].mxu0 %v2204
      %v2287 = vpop.f32.mrb[0].mxu0
      %v2288 = vadd.f32 0.0, %v2287
      %v2289 = vpop.f32.mrb[0].mxu0
      %v2290 = vadd.f32 0.0, %v2289
      %2291 = vmatprep.mubr.f32.mxu0 0.0
      %2292 = vmatmul.mubr.f32.gmra.mrb[0].mxu0 %v2207
      %v2293 = vpop.f32.mrb[0].mxu0
      %v2294 = vadd.f32 0.0, %v2293
      %v2295 = vpop.f32.mrb[0].mxu0
      %v2296 = vadd.f32 0.0, %v2295
      %2297 = vdwg.mxu0
      %v2298 = vadd.f32 %v2170, %v2276
      %v2299 = vadd.f32 %v2172, %v2278
      %v2300 = vadd.f32 %v2176, %v2282
      %v2301 = vadd.f32 %v2178, %v2284
      %v2302 = vadd.f32 %v2182, %v2288
      %v2303 = vadd.f32 %v2184, %v2290
      %v2304 = vadd.f32 %v2188, %v2294
      %v2305 = vadd.f32 %v2190, %v2296
      %v2306 = vld [vmem:[%s7] sm:$0x3]
      %v2308 = vlaneseq
      %v2309 = vshrl.u32 %v2308, 7
      %v2310 = vsub.s32 0, %v2309
      %v2311 = vrot.slane %v2306, %v2310
      %v2312 = vlaneseq
      %v2313 = vshrl.u32 %v2312, 7
      %v2314 = vsub.s32 1, %v2313
      %v2315 = vrot.slane %v2306, %v2314
      %v2318 = vmul.f32 %v2298, %v2311
      %v2319 = vmul.f32 %v2299, %v2315
      %v2320 = vmul.f32 %v2300, %v2311
      %v2321 = vmul.f32 %v2301, %v2315
      %v2322 = vmul.f32 %v2302, %v2311
      %v2323 = vmul.f32 %v2303, %v2315
      %v2324 = vmul.f32 %v2304, %v2311
      %v2325 = vmul.f32 %v2305, %v2315
      %v2326 = vld [vmem:[%s9] sm:$0x3]
      %v2328 = vlaneseq
      %v2329 = vshrl.u32 %v2328, 7
      %v2330 = vsub.s32 0, %v2329
      %v2331 = vrot.slane %v2326, %v2330
      %v2332 = vlaneseq
      %v2333 = vshrl.u32 %v2332, 7
      %v2334 = vsub.s32 1, %v2333
      %v2335 = vrot.slane %v2326, %v2334
      %v2338 = vadd.f32 %v2318, %v2331
      %v2339 = vadd.f32 %v2319, %v2335
      %v2340 = vadd.f32 %v2320, %v2331
      %v2341 = vadd.f32 %v2321, %v2335
      %v2342 = vadd.f32 %v2322, %v2331
      %v2343 = vadd.f32 %v2323, %v2335
      %v2344 = vadd.f32 %v2324, %v2331
      %v2345 = vadd.f32 %v2325, %v2335
      %v2346 = vxor.u32 %v2338, 2147483648
      %v2347 = vxor.u32 %v2339, 2147483648
      %v2348 = vxor.u32 %v2340, 2147483648
      %v2349 = vxor.u32 %v2341, 2147483648
      %v2350 = vxor.u32 %v2342, 2147483648
      %v2351 = vxor.u32 %v2343, 2147483648
      %v2352 = vxor.u32 %v2344, 2147483648
      %v2353 = vxor.u32 %v2345, 2147483648
      %v2354 = vmul.f32 %v2346, 1.442695
      %v2355 = vpow.pop %v2354
      %v2356 = vmul.f32 %v2347, 1.442695
      %v2357 = vpow.pop %v2356
      %v2358 = vmul.f32 %v2348, 1.442695
      %v2359 = vpow.pop %v2358
      %v2360 = vmul.f32 %v2349, 1.442695
      %v2361 = vpow.pop %v2360
      %v2362 = vmul.f32 %v2350, 1.442695
      %v2363 = vpow.pop %v2362
      %v2364 = vmul.f32 %v2351, 1.442695
      %v2365 = vpow.pop %v2364
      %v2366 = vmul.f32 %v2352, 1.442695
      %v2367 = vpow.pop %v2366
      %v2368 = vmul.f32 %v2353, 1.442695
      %v2369 = vpow.pop %v2368
      %v2370 = vadd.f32 %v2355, 1.0
      %v2371 = vadd.f32 %v2357, 1.0
      %v2372 = vadd.f32 %v2359, 1.0
      %v2373 = vadd.f32 %v2361, 1.0
      %v2374 = vadd.f32 %v2363, 1.0
      %v2375 = vadd.f32 %v2365, 1.0
      %v2376 = vadd.f32 %v2367, 1.0
      %v2377 = vadd.f32 %v2369, 1.0
      %v2378 = vrcp.pop %v2370
      %v2379 = vmul.f32 1.0, %v2378
      %v2380 = vrcp.pop %v2371
      %v2381 = vmul.f32 1.0, %v2380
      %v2382 = vrcp.pop %v2372
      %v2383 = vmul.f32 1.0, %v2382
      %v2384 = vrcp.pop %v2373
      %v2385 = vmul.f32 1.0, %v2384
      %v2386 = vrcp.pop %v2374
      %v2387 = vmul.f32 1.0, %v2386
      %v2388 = vrcp.pop %v2375
      %v2389 = vmul.f32 1.0, %v2388
      %v2390 = vrcp.pop %v2376
      %v2391 = vmul.f32 1.0, %v2390
      %v2392 = vrcp.pop %v2377
      %v2393 = vmul.f32 1.0, %v2392
      %v2394 = vmul.f32 %v2338, %v2379
      %v2395 = vmul.f32 %v2339, %v2381
      %v2396 = vmul.f32 %v2340, %v2383
      %v2397 = vmul.f32 %v2341, %v2385
      %v2398 = vmul.f32 %v2342, %v2387
      %v2399 = vmul.f32 %v2343, %v2389
      %v2400 = vmul.f32 %v2344, %v2391
      %v2401 = vmul.f32 %v2345, %v2393
      %v2402 = vpack.c.bf16 %v2396, %v2394
      %v2403 = vpack.c.bf16 %v2397, %v2395
      %v2404 = vpack.c.bf16 %v2400, %v2398
      %v2405 = vpack.c.bf16 %v2401, %v2399
      %v2406 = vld [vmem:[%s13] sm:$0xff]
      %v2407 = vld [vmem:[%s13 + $0x8] sm:$0xff]
      %v2408 = vld [vmem:[%s13 + $0x10] sm:$0xff]
      %v2409 = vld [vmem:[%s13 + $0x18] sm:$0xff]
      %v2410 = vld [vmem:[%s13 + $0x20] sm:$0xff]
      %v2411 = vld [vmem:[%s13 + $0x28] sm:$0xff]
      %v2412 = vld [vmem:[%s13 + $0x30] sm:$0xff]
      %v2413 = vld [vmem:[%s13 + $0x38] sm:$0xff]
      %v2414 = vld [vmem:[%s13 + $0x40] sm:$0xff]
      %v2415 = vld [vmem:[%s13 + $0x48] sm:$0xff]
      %v2416 = vld [vmem:[%s13 + $0x50] sm:$0xff]
      %v2417 = vld [vmem:[%s13 + $0x58] sm:$0xff]
      %v2418 = vld [vmem:[%s13 + $0x60] sm:$0xff]
      %v2419 = vld [vmem:[%s13 + $0x68] sm:$0xff]
      %v2420 = vld [vmem:[%s13 + $0x70] sm:$0xff]
      %v2421 = vld [vmem:[%s13 + $0x78] sm:$0xff]
      %v2422 = vld [vmem:[%s13 + $0x80] sm:$0xff]
      %v2423 = vld [vmem:[%s13 + $0x88] sm:$0xff]
      %v2424 = vld [vmem:[%s13 + $0x90] sm:$0xff]
      %v2425 = vld [vmem:[%s13 + $0x98] sm:$0xff]
      %v2426 = vld [vmem:[%s13 + $0xa0] sm:$0xff]
      %v2427 = vld [vmem:[%s13 + $0xa8] sm:$0xff]
      %v2428 = vld [vmem:[%s13 + $0xb0] sm:$0xff]
      %v2429 = vld [vmem:[%s13 + $0xb8] sm:$0xff]
      %v2430 = vld [vmem:[%s13 + $0xc0] sm:$0xff]
      %v2431 = vld [vmem:[%s13 + $0xc8] sm:$0xff]
      %v2432 = vld [vmem:[%s13 + $0xd0] sm:$0xff]
      %v2433 = vld [vmem:[%s13 + $0xd8] sm:$0xff]
      %v2434 = vld [vmem:[%s13 + $0xe0] sm:$0xff]
      %v2435 = vld [vmem:[%s13 + $0xe8] sm:$0xff]
      %v2436 = vld [vmem:[%s13 + $0xf0] sm:$0xff]
      %v2437 = vld [vmem:[%s13 + $0xf8] sm:$0xff]
      %v2438 = vld [vmem:[%s13 + $0x100] sm:$0xff]
      %v2439 = vld [vmem:[%s13 + $0x108] sm:$0xff]
      %v2440 = vld [vmem:[%s13 + $0x110] sm:$0xff]
      %v2441 = vld [vmem:[%s13 + $0x118] sm:$0xff]
      %v2442 = vld [vmem:[%s13 + $0x120] sm:$0xff]
      %v2443 = vld [vmem:[%s13 + $0x128] sm:$0xff]
      %v2444 = vld [vmem:[%s13 + $0x130] sm:$0xff]
      %v2445 = vld [vmem:[%s13 + $0x138] sm:$0xff]
      %v2446 = vld [vmem:[%s13 + $0x140] sm:$0xff]
      %v2447 = vld [vmem:[%s13 + $0x148] sm:$0xff]
      %v2448 = vld [vmem:[%s13 + $0x150] sm:$0xff]
      %v2449 = vld [vmem:[%s13 + $0x158] sm:$0xff]
      %v2450 = vld [vmem:[%s13 + $0x160] sm:$0xff]
      %v2451 = vld [vmem:[%s13 + $0x168] sm:$0xff]
      %v2452 = vld [vmem:[%s13 + $0x170] sm:$0xff]
      %v2453 = vld [vmem:[%s13 + $0x178] sm:$0xff]
      %v2454 = vld [vmem:[%s13 + $0x180] sm:$0xff]
      %v2455 = vld [vmem:[%s13 + $0x188] sm:$0xff]
      %v2456 = vld [vmem:[%s13 + $0x190] sm:$0xff]
      %v2457 = vld [vmem:[%s13 + $0x198] sm:$0xff]
      %v2458 = vld [vmem:[%s13 + $0x1a0] sm:$0xff]
      %v2459 = vld [vmem:[%s13 + $0x1a8] sm:$0xff]
      %v2460 = vld [vmem:[%s13 + $0x1b0] sm:$0xff]
      %v2461 = vld [vmem:[%s13 + $0x1b8] sm:$0xff]
      %v2462 = vld [vmem:[%s13 + $0x1c0] sm:$0xff]
      %v2463 = vld [vmem:[%s13 + $0x1c8] sm:$0xff]
      %v2464 = vld [vmem:[%s13 + $0x1d0] sm:$0xff]
      %v2465 = vld [vmem:[%s13 + $0x1d8] sm:$0xff]
      %v2466 = vld [vmem:[%s13 + $0x1e0] sm:$0xff]
      %v2467 = vld [vmem:[%s13 + $0x1e8] sm:$0xff]
      %v2468 = vld [vmem:[%s13 + $0x1f0] sm:$0xff]
      %v2469 = vld [vmem:[%s13 + $0x1f8] sm:$0xff]
      %v2470 = vld [vmem:[%s13 + $0x200] sm:$0xff]
      %v2471 = vld [vmem:[%s13 + $0x208] sm:$0xff]
      %v2472 = vld [vmem:[%s13 + $0x210] sm:$0xff]
      %v2473 = vld [vmem:[%s13 + $0x218] sm:$0xff]
      %v2474 = vld [vmem:[%s13 + $0x220] sm:$0xff]
      %v2475 = vld [vmem:[%s13 + $0x228] sm:$0xff]
      %v2476 = vld [vmem:[%s13 + $0x230] sm:$0xff]
      %v2477 = vld [vmem:[%s13 + $0x238] sm:$0xff]
      %v2478 = vld [vmem:[%s13 + $0x240] sm:$0xff]
      %v2479 = vld [vmem:[%s13 + $0x248] sm:$0xff]
      %v2480 = vld [vmem:[%s13 + $0x250] sm:$0xff]
      %v2481 = vld [vmem:[%s13 + $0x258] sm:$0xff]
      %v2482 = vld [vmem:[%s13 + $0x260] sm:$0xff]
      %v2483 = vld [vmem:[%s13 + $0x268] sm:$0xff]
      %v2484 = vld [vmem:[%s13 + $0x270] sm:$0xff]
      %v2485 = vld [vmem:[%s13 + $0x278] sm:$0xff]
      %v2486 = vld [vmem:[%s13 + $0x280] sm:$0xff]
      %v2487 = vld [vmem:[%s13 + $0x288] sm:$0xff]
      %v2488 = vld [vmem:[%s13 + $0x290] sm:$0xff]
      %v2489 = vld [vmem:[%s13 + $0x298] sm:$0xff]
      %v2490 = vld [vmem:[%s13 + $0x2a0] sm:$0xff]
      %v2491 = vld [vmem:[%s13 + $0x2a8] sm:$0xff]
      %v2492 = vld [vmem:[%s13 + $0x2b0] sm:$0xff]
      %v2493 = vld [vmem:[%s13 + $0x2b8] sm:$0xff]
      %v2494 = vld [vmem:[%s13 + $0x2c0] sm:$0xff]
      %v2495 = vld [vmem:[%s13 + $0x2c8] sm:$0xff]
      %v2496 = vld [vmem:[%s13 + $0x2d0] sm:$0xff]
      %v2497 = vld [vmem:[%s13 + $0x2d8] sm:$0xff]
      %v2498 = vld [vmem:[%s13 + $0x2e0] sm:$0xff]
      %v2499 = vld [vmem:[%s13 + $0x2e8] sm:$0xff]
      %v2500 = vld [vmem:[%s13 + $0x2f0] sm:$0xff]
      %v2501 = vld [vmem:[%s13 + $0x2f8] sm:$0xff]
      %v2598 = vunpack.c.l.b16 %v2406
      %v2599 = vunpack.c.h.b16 %v2406
      %v2600 = vunpack.c.l.b16 %v2407
      %v2601 = vunpack.c.h.b16 %v2407
      %v2602 = vunpack.c.l.b16 %v2408
      %v2603 = vunpack.c.h.b16 %v2408
      %v2604 = vunpack.c.l.b16 %v2409
      %v2605 = vunpack.c.h.b16 %v2409
      %v2606 = vunpack.c.l.b16 %v2410
      %v2607 = vunpack.c.h.b16 %v2410
      %v2608 = vunpack.c.l.b16 %v2411
      %v2609 = vunpack.c.h.b16 %v2411
      %v2610 = vunpack.c.l.b16 %v2412
      %v2611 = vunpack.c.h.b16 %v2412
      %v2612 = vunpack.c.l.b16 %v2413
      %v2613 = vunpack.c.h.b16 %v2413
      %v2614 = vunpack.c.l.b16 %v2414
      %v2615 = vunpack.c.h.b16 %v2414
      %v2616 = vunpack.c.l.b16 %v2415
      %v2617 = vunpack.c.h.b16 %v2415
      %v2618 = vunpack.c.l.b16 %v2416
      %v2619 = vunpack.c.h.b16 %v2416
      %v2620 = vunpack.c.l.b16 %v2417
      %v2621 = vunpack.c.h.b16 %v2417
      %v2622 = vunpack.c.l.b16 %v2418
      %v2623 = vunpack.c.h.b16 %v2418
      %v2624 = vunpack.c.l.b16 %v2419
      %v2625 = vunpack.c.h.b16 %v2419
      %v2626 = vunpack.c.l.b16 %v2420
      %v2627 = vunpack.c.h.b16 %v2420
      %v2628 = vunpack.c.l.b16 %v2421
      %v2629 = vunpack.c.h.b16 %v2421
      %v2630 = vunpack.c.l.b16 %v2422
      %v2631 = vunpack.c.h.b16 %v2422
      %v2632 = vunpack.c.l.b16 %v2423
      %v2633 = vunpack.c.h.b16 %v2423
      %v2634 = vunpack.c.l.b16 %v2424
      %v2635 = vunpack.c.h.b16 %v2424
      %v2636 = vunpack.c.l.b16 %v2425
      %v2637 = vunpack.c.h.b16 %v2425
      %v2638 = vunpack.c.l.b16 %v2426
      %v2639 = vunpack.c.h.b16 %v2426
      %v2640 = vunpack.c.l.b16 %v2427
      %v2641 = vunpack.c.h.b16 %v2427
      %v2642 = vunpack.c.l.b16 %v2428
      %v2643 = vunpack.c.h.b16 %v2428
      %v2644 = vunpack.c.l.b16 %v2429
      %v2645 = vunpack.c.h.b16 %v2429
      %v2646 = vunpack.c.l.b16 %v2430
      %v2647 = vunpack.c.h.b16 %v2430
      %v2648 = vunpack.c.l.b16 %v2431
      %v2649 = vunpack.c.h.b16 %v2431
      %v2650 = vunpack.c.l.b16 %v2432
      %v2651 = vunpack.c.h.b16 %v2432
      %v2652 = vunpack.c.l.b16 %v2433
      %v2653 = vunpack.c.h.b16 %v2433
      %v2654 = vunpack.c.l.b16 %v2434
      %v2655 = vunpack.c.h.b16 %v2434
      %v2656 = vunpack.c.l.b16 %v2435
      %v2657 = vunpack.c.h.b16 %v2435
      %v2658 = vunpack.c.l.b16 %v2436
      %v2659 = vunpack.c.h.b16 %v2436
      %v2660 = vunpack.c.l.b16 %v2437
      %v2661 = vunpack.c.h.b16 %v2437
      %v2662 = vunpack.c.l.b16 %v2438
      %v2663 = vunpack.c.h.b16 %v2438
      %v2664 = vunpack.c.l.b16 %v2439
      %v2665 = vunpack.c.h.b16 %v2439
      %v2666 = vunpack.c.l.b16 %v2440
      %v2667 = vunpack.c.h.b16 %v2440
      %v2668 = vunpack.c.l.b16 %v2441
      %v2669 = vunpack.c.h.b16 %v2441
      %v2670 = vunpack.c.l.b16 %v2442
      %v2671 = vunpack.c.h.b16 %v2442
      %v2672 = vunpack.c.l.b16 %v2443
      %v2673 = vunpack.c.h.b16 %v2443
      %v2674 = vunpack.c.l.b16 %v2444
      %v2675 = vunpack.c.h.b16 %v2444
      %v2676 = vunpack.c.l.b16 %v2445
      %v2677 = vunpack.c.h.b16 %v2445
      %v2678 = vunpack.c.l.b16 %v2446
      %v2679 = vunpack.c.h.b16 %v2446
      %v2680 = vunpack.c.l.b16 %v2447
      %v2681 = vunpack.c.h.b16 %v2447
      %v2682 = vunpack.c.l.b16 %v2448
      %v2683 = vunpack.c.h.b16 %v2448
      %v2684 = vunpack.c.l.b16 %v2449
      %v2685 = vunpack.c.h.b16 %v2449
      %v2686 = vunpack.c.l.b16 %v2450
      %v2687 = vunpack.c.h.b16 %v2450
      %v2688 = vunpack.c.l.b16 %v2451
      %v2689 = vunpack.c.h.b16 %v2451
      %v2690 = vunpack.c.l.b16 %v2452
      %v2691 = vunpack.c.h.b16 %v2452
      %v2692 = vunpack.c.l.b16 %v2453
      %v2693 = vunpack.c.h.b16 %v2453
      %v2694 = vunpack.c.l.b16 %v2454
      %v2695 = vunpack.c.h.b16 %v2454
      %v2696 = vunpack.c.l.b16 %v2455
      %v2697 = vunpack.c.h.b16 %v2455
      %v2698 = vunpack.c.l.b16 %v2456
      %v2699 = vunpack.c.h.b16 %v2456
      %v2700 = vunpack.c.l.b16 %v2457
      %v2701 = vunpack.c.h.b16 %v2457
      %v2702 = vunpack.c.l.b16 %v2458
      %v2703 = vunpack.c.h.b16 %v2458
      %v2704 = vunpack.c.l.b16 %v2459
      %v2705 = vunpack.c.h.b16 %v2459
      %v2706 = vunpack.c.l.b16 %v2460
      %v2707 = vunpack.c.h.b16 %v2460
      %v2708 = vunpack.c.l.b16 %v2461
      %v2709 = vunpack.c.h.b16 %v2461
      %v2710 = vunpack.c.l.b16 %v2462
      %v2711 = vunpack.c.h.b16 %v2462
      %v2712 = vunpack.c.l.b16 %v2463
      %v2713 = vunpack.c.h.b16 %v2463
      %v2714 = vunpack.c.l.b16 %v2464
      %v2715 = vunpack.c.h.b16 %v2464
      %v2716 = vunpack.c.l.b16 %v2465
      %v2717 = vunpack.c.h.b16 %v2465
      %v2718 = vunpack.c.l.b16 %v2466
      %v2719 = vunpack.c.h.b16 %v2466
      %v2720 = vunpack.c.l.b16 %v2467
      %v2721 = vunpack.c.h.b16 %v2467
      %v2722 = vunpack.c.l.b16 %v2468
      %v2723 = vunpack.c.h.b16 %v2468
      %v2724 = vunpack.c.l.b16 %v2469
      %v2725 = vunpack.c.h.b16 %v2469
      %v2726 = vunpack.c.l.b16 %v2470
      %v2727 = vunpack.c.h.b16 %v2470
      %v2728 = vunpack.c.l.b16 %v2471
      %v2729 = vunpack.c.h.b16 %v2471
      %v2730 = vunpack.c.l.b16 %v2472
      %v2731 = vunpack.c.h.b16 %v2472
      %v2732 = vunpack.c.l.b16 %v2473
      %v2733 = vunpack.c.h.b16 %v2473
      %v2734 = vunpack.c.l.b16 %v2474
      %v2735 = vunpack.c.h.b16 %v2474
      %v2736 = vunpack.c.l.b16 %v2475
      %v2737 = vunpack.c.h.b16 %v2475
      %v2738 = vunpack.c.l.b16 %v2476
      %v2739 = vunpack.c.h.b16 %v2476
      %v2740 = vunpack.c.l.b16 %v2477
      %v2741 = vunpack.c.h.b16 %v2477
      %v2742 = vunpack.c.l.b16 %v2478
      %v2743 = vunpack.c.h.b16 %v2478
      %v2744 = vunpack.c.l.b16 %v2479
      %v2745 = vunpack.c.h.b16 %v2479
      %v2746 = vunpack.c.l.b16 %v2480
      %v2747 = vunpack.c.h.b16 %v2480
      %v2748 = vunpack.c.l.b16 %v2481
      %v2749 = vunpack.c.h.b16 %v2481
      %v2750 = vunpack.c.l.b16 %v2482
      %v2751 = vunpack.c.h.b16 %v2482
      %v2752 = vunpack.c.l.b16 %v2483
      %v2753 = vunpack.c.h.b16 %v2483
      %v2754 = vunpack.c.l.b16 %v2484
      %v2755 = vunpack.c.h.b16 %v2484
      %v2756 = vunpack.c.l.b16 %v2485
      %v2757 = vunpack.c.h.b16 %v2485
      %v2758 = vunpack.c.l.b16 %v2486
      %v2759 = vunpack.c.h.b16 %v2486
      %v2760 = vunpack.c.l.b16 %v2487
      %v2761 = vunpack.c.h.b16 %v2487
      %v2762 = vunpack.c.l.b16 %v2488
      %v2763 = vunpack.c.h.b16 %v2488
      %v2764 = vunpack.c.l.b16 %v2489
      %v2765 = vunpack.c.h.b16 %v2489
      %v2766 = vunpack.c.l.b16 %v2490
      %v2767 = vunpack.c.h.b16 %v2490
      %v2768 = vunpack.c.l.b16 %v2491
      %v2769 = vunpack.c.h.b16 %v2491
      %v2770 = vunpack.c.l.b16 %v2492
      %v2771 = vunpack.c.h.b16 %v2492
      %v2772 = vunpack.c.l.b16 %v2493
      %v2773 = vunpack.c.h.b16 %v2493
      %v2774 = vunpack.c.l.b16 %v2494
      %v2775 = vunpack.c.h.b16 %v2494
      %v2776 = vunpack.c.l.b16 %v2495
      %v2777 = vunpack.c.h.b16 %v2495
      %v2778 = vunpack.c.l.b16 %v2496
      %v2779 = vunpack.c.h.b16 %v2496
      %v2780 = vunpack.c.l.b16 %v2497
      %v2781 = vunpack.c.h.b16 %v2497
      %v2782 = vunpack.c.l.b16 %v2498
      %v2783 = vunpack.c.h.b16 %v2498
      %v2784 = vunpack.c.l.b16 %v2499
      %v2785 = vunpack.c.h.b16 %v2499
      %v2786 = vunpack.c.l.b16 %v2500
      %v2787 = vunpack.c.h.b16 %v2500
      %v2788 = vunpack.c.l.b16 %v2501
      %v2789 = vunpack.c.h.b16 %v2501
      %v2790 = vpack.c.b16 %v2604, %v2598
      %v2791 = vpack.c.b16 %v2605, %v2599
      %v2792 = vpack.c.b16 %v2606, %v2600
      %v2793 = vpack.c.b16 %v2607, %v2601
      %v2794 = vpack.c.b16 %v2608, %v2602
      %v2795 = vpack.c.b16 %v2609, %v2603
      %v2796 = vpack.c.b16 %v2616, %v2610
      %v2797 = vpack.c.b16 %v2617, %v2611
      %v2798 = vpack.c.b16 %v2618, %v2612
      %v2799 = vpack.c.b16 %v2619, %v2613
      %v2800 = vpack.c.b16 %v2620, %v2614
      %v2801 = vpack.c.b16 %v2621, %v2615
      %v2802 = vpack.c.b16 %v2628, %v2622
      %v2803 = vpack.c.b16 %v2629, %v2623
      %v2804 = vpack.c.b16 %v2630, %v2624
      %v2805 = vpack.c.b16 %v2631, %v2625
      %v2806 = vpack.c.b16 %v2632, %v2626
      %v2807 = vpack.c.b16 %v2633, %v2627
      %v2808 = vpack.c.b16 %v2640, %v2634
      %v2809 = vpack.c.b16 %v2641, %v2635
      %v2810 = vpack.c.b16 %v2642, %v2636
      %v2811 = vpack.c.b16 %v2643, %v2637
      %v2812 = vpack.c.b16 %v2644, %v2638
      %v2813 = vpack.c.b16 %v2645, %v2639
      %v2814 = vpack.c.b16 %v2652, %v2646
      %v2815 = vpack.c.b16 %v2653, %v2647
      %v2816 = vpack.c.b16 %v2654, %v2648
      %v2817 = vpack.c.b16 %v2655, %v2649
      %v2818 = vpack.c.b16 %v2656, %v2650
      %v2819 = vpack.c.b16 %v2657, %v2651
      %v2820 = vpack.c.b16 %v2664, %v2658
      %v2821 = vpack.c.b16 %v2665, %v2659
      %v2822 = vpack.c.b16 %v2666, %v2660
      %v2823 = vpack.c.b16 %v2667, %v2661
      %v2824 = vpack.c.b16 %v2668, %v2662
      %v2825 = vpack.c.b16 %v2669, %v2663
      %v2826 = vpack.c.b16 %v2676, %v2670
      %v2827 = vpack.c.b16 %v2677, %v2671
      %v2828 = vpack.c.b16 %v2678, %v2672
      %v2829 = vpack.c.b16 %v2679, %v2673
      %v2830 = vpack.c.b16 %v2680, %v2674
      %v2831 = vpack.c.b16 %v2681, %v2675
      %v2832 = vpack.c.b16 %v2688, %v2682
      %v2833 = vpack.c.b16 %v2689, %v2683
      %v2834 = vpack.c.b16 %v2690, %v2684
      %v2835 = vpack.c.b16 %v2691, %v2685
      %v2836 = vpack.c.b16 %v2692, %v2686
      %v2837 = vpack.c.b16 %v2693, %v2687
      %v2838 = vpack.c.b16 %v2700, %v2694
      %v2839 = vpack.c.b16 %v2701, %v2695
      %v2840 = vpack.c.b16 %v2702, %v2696
      %v2841 = vpack.c.b16 %v2703, %v2697
      %v2842 = vpack.c.b16 %v2704, %v2698
      %v2843 = vpack.c.b16 %v2705, %v2699
      %v2844 = vpack.c.b16 %v2712, %v2706
      %v2845 = vpack.c.b16 %v2713, %v2707
      %v2846 = vpack.c.b16 %v2714, %v2708
      %v2847 = vpack.c.b16 %v2715, %v2709
      %v2848 = vpack.c.b16 %v2716, %v2710
      %v2849 = vpack.c.b16 %v2717, %v2711
      %v2850 = vpack.c.b16 %v2724, %v2718
      %v2851 = vpack.c.b16 %v2725, %v2719
      %v2852 = vpack.c.b16 %v2726, %v2720
      %v2853 = vpack.c.b16 %v2727, %v2721
      %v2854 = vpack.c.b16 %v2728, %v2722
      %v2855 = vpack.c.b16 %v2729, %v2723
      %v2856 = vpack.c.b16 %v2736, %v2730
      %v2857 = vpack.c.b16 %v2737, %v2731
      %v2858 = vpack.c.b16 %v2738, %v2732
      %v2859 = vpack.c.b16 %v2739, %v2733
      %v2860 = vpack.c.b16 %v2740, %v2734
      %v2861 = vpack.c.b16 %v2741, %v2735
      %v2862 = vpack.c.b16 %v2748, %v2742
      %v2863 = vpack.c.b16 %v2749, %v2743
      %v2864 = vpack.c.b16 %v2750, %v2744
      %v2865 = vpack.c.b16 %v2751, %v2745
      %v2866 = vpack.c.b16 %v2752, %v2746
      %v2867 = vpack.c.b16 %v2753, %v2747
      %v2868 = vpack.c.b16 %v2760, %v2754
      %v2869 = vpack.c.b16 %v2761, %v2755
      %v2870 = vpack.c.b16 %v2762, %v2756
      %v2871 = vpack.c.b16 %v2763, %v2757
      %v2872 = vpack.c.b16 %v2764, %v2758
      %v2873 = vpack.c.b16 %v2765, %v2759
      %v2874 = vpack.c.b16 %v2772, %v2766
      %v2875 = vpack.c.b16 %v2773, %v2767
      %v2876 = vpack.c.b16 %v2774, %v2768
      %v2877 = vpack.c.b16 %v2775, %v2769
      %v2878 = vpack.c.b16 %v2776, %v2770
      %v2879 = vpack.c.b16 %v2777, %v2771
      %v2880 = vpack.c.b16 %v2784, %v2778
      %v2881 = vpack.c.b16 %v2785, %v2779
      %v2882 = vpack.c.b16 %v2786, %v2780
      %v2883 = vpack.c.b16 %v2787, %v2781
      %v2884 = vpack.c.b16 %v2788, %v2782
      %v2885 = vpack.c.b16 %v2789, %v2783
      %2982 = vmatprep.subr.bf16.mxu0 %v2791
      %2983 = vmatpush1.bf16.msra.mxu0 %v2790
      %2984 = vmatprep.subr.bf16.mxu0 %v2797
      %2985 = vmatpush1.bf16.msra.mxu0 %v2796
      %2986 = vmatprep.subr.bf16.mxu0 %v2803
      %2987 = vmatpush1.bf16.msra.mxu0 %v2802
      %2988 = vmatprep.subr.bf16.mxu0 %v2809
      %2989 = vmatpush1.bf16.msra.mxu0 %v2808
      %2990 = vmatprep.subr.bf16.mxu0 %v2815
      %2991 = vmatpush1.bf16.msra.mxu0 %v2814
      %2992 = vmatprep.subr.bf16.mxu0 %v2821
      %2993 = vmatpush1.bf16.msra.mxu0 %v2820
      %2994 = vmatprep.subr.bf16.mxu0 %v2827
      %2995 = vmatpush1.bf16.msra.mxu0 %v2826
      %2996 = vmatprep.subr.bf16.mxu0 %v2833
      %2997 = vmatpush1.bf16.msra.mxu0 %v2832
      %2998 = vmatprep.subr.bf16.mxu0 %v2839
      %2999 = vmatpush1.bf16.msra.mxu0 %v2838
      %3000 = vmatprep.subr.bf16.mxu0 %v2845
      %3001 = vmatpush1.bf16.msra.mxu0 %v2844
      %3002 = vmatprep.subr.bf16.mxu0 %v2851
      %3003 = vmatpush1.bf16.msra.mxu0 %v2850
      %3004 = vmatprep.subr.bf16.mxu0 %v2857
      %3005 = vmatpush1.bf16.msra.mxu0 %v2856
      %3006 = vmatprep.subr.bf16.mxu0 %v2863
      %3007 = vmatpush1.bf16.msra.mxu0 %v2862
      %3008 = vmatprep.subr.bf16.mxu0 %v2869
      %3009 = vmatpush1.bf16.msra.mxu0 %v2868
      %3010 = vmatprep.subr.bf16.mxu0 %v2875
      %3011 = vmatpush1.bf16.msra.mxu0 %v2874
      %3012 = vmatprep.subr.bf16.mxu0 %v2881
      %3013 = vmatpush1.bf16.msra.mxu0 %v2880
      %3014 = vmatprep.mubr.bf16.mxu0 %v2403
      %3015 = vmatmul.mubr.bf16.gmra.mrb[0].mxu0 %v2402
      %v3016 = vpop.f32.mrb[0].mxu0
      %v3017 = vadd.f32 0.0, %v3016
      %v3018 = vpop.f32.mrb[0].mxu0
      %v3019 = vadd.f32 0.0, %v3018
      %v3020 = vpop.f32.mrb[0].mxu0
      %v3021 = vadd.f32 0.0, %v3020
      %v3022 = vpop.f32.mrb[0].mxu0
      %v3023 = vadd.f32 0.0, %v3022
      %3024 = vmatprep.mubr.bf16.mxu0 %v2405
      %3025 = vmatmul.mubr.bf16.gmra.mrb[0].mxu0 %v2404
      %v3026 = vpop.f32.mrb[0].mxu0
      %v3027 = vadd.f32 0.0, %v3026
      %v3028 = vpop.f32.mrb[0].mxu0
      %v3029 = vadd.f32 0.0, %v3028
      %v3030 = vpop.f32.mrb[0].mxu0
      %v3031 = vadd.f32 0.0, %v3030
      %v3032 = vpop.f32.mrb[0].mxu0
      %v3033 = vadd.f32 0.0, %v3032
      %3034 = vdwg.mxu0
      %3035 = vmatprep.subr.bf16.mxu0 %v2793
      %3036 = vmatpush1.bf16.msra.mxu0 %v2792
      %3037 = vmatprep.subr.bf16.mxu0 %v2799
      %3038 = vmatpush1.bf16.msra.mxu0 %v2798
      %3039 = vmatprep.subr.bf16.mxu0 %v2805
      %3040 = vmatpush1.bf16.msra.mxu0 %v2804
      %3041 = vmatprep.subr.bf16.mxu0 %v2811
      %3042 = vmatpush1.bf16.msra.mxu0 %v2810
      %3043 = vmatprep.subr.bf16.mxu0 %v2817
      %3044 = vmatpush1.bf16.msra.mxu0 %v2816
      %3045 = vmatprep.subr.bf16.mxu0 %v2823
      %3046 = vmatpush1.bf16.msra.mxu0 %v2822
      %3047 = vmatprep.subr.bf16.mxu0 %v2829
      %3048 = vmatpush1.bf16.msra.mxu0 %v2828
      %3049 = vmatprep.subr.bf16.mxu0 %v2835
      %3050 = vmatpush1.bf16.msra.mxu0 %v2834
      %3051 = vmatprep.subr.bf16.mxu0 %v2841
      %3052 = vmatpush1.bf16.msra.mxu0 %v2840
      %3053 = vmatprep.subr.bf16.mxu0 %v2847
      %3054 = vmatpush1.bf16.msra.mxu0 %v2846
      %3055 = vmatprep.subr.bf16.mxu0 %v2853
      %3056 = vmatpush1.bf16.msra.mxu0 %v2852
      %3057 = vmatprep.subr.bf16.mxu0 %v2859
      %3058 = vmatpush1.bf16.msra.mxu0 %v2858
      %3059 = vmatprep.subr.bf16.mxu0 %v2865
      %3060 = vmatpush1.bf16.msra.mxu0 %v2864
      %3061 = vmatprep.subr.bf16.mxu0 %v2871
      %3062 = vmatpush1.bf16.msra.mxu0 %v2870
      %3063 = vmatprep.subr.bf16.mxu0 %v2877
      %3064 = vmatpush1.bf16.msra.mxu0 %v2876
      %3065 = vmatprep.subr.bf16.mxu0 %v2883
      %3066 = vmatpush1.bf16.msra.mxu0 %v2882
      %3067 = vmatprep.mubr.bf16.mxu0 %v2403
      %3068 = vmatmul.mubr.bf16.gmra.mrb[0].mxu0 %v2402
      %v3069 = vpop.f32.mrb[0].mxu0
      %v3070 = vadd.f32 0.0, %v3069
      %v3071 = vpop.f32.mrb[0].mxu0
      %v3072 = vadd.f32 0.0, %v3071
      %v3073 = vpop.f32.mrb[0].mxu0
      %v3074 = vadd.f32 0.0, %v3073
      %v3075 = vpop.f32.mrb[0].mxu0
      %v3076 = vadd.f32 0.0, %v3075
      %3077 = vmatprep.mubr.bf16.mxu0 %v2405
      %3078 = vmatmul.mubr.bf16.gmra.mrb[0].mxu0 %v2404
      %v3079 = vpop.f32.mrb[0].mxu0
      %v3080 = vadd.f32 0.0, %v3079
      %v3081 = vpop.f32.mrb[0].mxu0
      %v3082 = vadd.f32 0.0, %v3081
      %v3083 = vpop.f32.mrb[0].mxu0
      %v3084 = vadd.f32 0.0, %v3083
      %v3085 = vpop.f32.mrb[0].mxu0
      %v3086 = vadd.f32 0.0, %v3085
      %3087 = vdwg.mxu0
      %3088 = vmatprep.subr.bf16.mxu0 %v2795
      %3089 = vmatpush1.bf16.msra.mxu0 %v2794
      %3090 = vmatprep.subr.bf16.mxu0 %v2801
      %3091 = vmatpush1.bf16.msra.mxu0 %v2800
      %3092 = vmatprep.subr.bf16.mxu0 %v2807
      %3093 = vmatpush1.bf16.msra.mxu0 %v2806
      %3094 = vmatprep.subr.bf16.mxu0 %v2813
      %3095 = vmatpush1.bf16.msra.mxu0 %v2812
      %3096 = vmatprep.subr.bf16.mxu0 %v2819
      %3097 = vmatpush1.bf16.msra.mxu0 %v2818
      %3098 = vmatprep.subr.bf16.mxu0 %v2825
      %3099 = vmatpush1.bf16.msra.mxu0 %v2824
      %3100 = vmatprep.subr.bf16.mxu0 %v2831
      %3101 = vmatpush1.bf16.msra.mxu0 %v2830
      %3102 = vmatprep.subr.bf16.mxu0 %v2837
      %3103 = vmatpush1.bf16.msra.mxu0 %v2836
      %3104 = vmatprep.subr.bf16.mxu0 %v2843
      %3105 = vmatpush1.bf16.msra.mxu0 %v2842
      %3106 = vmatprep.subr.bf16.mxu0 %v2849
      %3107 = vmatpush1.bf16.msra.mxu0 %v2848
      %3108 = vmatprep.subr.bf16.mxu0 %v2855
      %3109 = vmatpush1.bf16.msra.mxu0 %v2854
      %3110 = vmatprep.subr.bf16.mxu0 %v2861
      %3111 = vmatpush1.bf16.msra.mxu0 %v2860
      %3112 = vmatprep.subr.bf16.mxu0 %v2867
      %3113 = vmatpush1.bf16.msra.mxu0 %v2866
      %3114 = vmatprep.subr.bf16.mxu0 %v2873
      %3115 = vmatpush1.bf16.msra.mxu0 %v2872
      %3116 = vmatprep.subr.bf16.mxu0 %v2879
      %3117 = vmatpush1.bf16.msra.mxu0 %v2878
      %3118 = vmatprep.subr.bf16.mxu0 %v2885
      %3119 = vmatpush1.bf16.msra.mxu0 %v2884
      %3120 = vmatprep.mubr.bf16.mxu0 %v2403
      %3121 = vmatmul.mubr.bf16.gmra.mrb[0].mxu0 %v2402
      %v3122 = vpop.f32.mrb[0].mxu0
      %v3123 = vadd.f32 0.0, %v3122
      %v3124 = vpop.f32.mrb[0].mxu0
      %v3125 = vadd.f32 0.0, %v3124
      %v3126 = vpop.f32.mrb[0].mxu0
      %v3127 = vadd.f32 0.0, %v3126
      %v3128 = vpop.f32.mrb[0].mxu0
      %v3129 = vadd.f32 0.0, %v3128
      %3130 = vmatprep.mubr.bf16.mxu0 %v2405
      %3131 = vmatmul.mubr.bf16.gmra.mrb[0].mxu0 %v2404
      %v3132 = vpop.f32.mrb[0].mxu0
      %v3133 = vadd.f32 0.0, %v3132
      %v3134 = vpop.f32.mrb[0].mxu0
      %v3135 = vadd.f32 0.0, %v3134
      %v3136 = vpop.f32.mrb[0].mxu0
      %v3137 = vadd.f32 0.0, %v3136
      %v3138 = vpop.f32.mrb[0].mxu0
      %v3139 = vadd.f32 0.0, %v3138
      %3140 = vdwg.mxu0
      %v3141 = vld [vmem:[%s11] sm:$0xff]
      %v3142 = vld [vmem:[%s11 + $0x8] sm:$0xff]
      %s3143 = scalar_lea.vmem %s11, 16
      %v3144 = vld [vmem:[%s3143] sm:$0xff]
      %v3145 = vld [vmem:[%s3143 + $0x8] sm:$0xff]
      %vm3146 = vcmask 261120
      %v3148 = vsel %vm3146, %v3144, 0
      %v3151 = vsel %vm3146, %v3145, 0
      %3153 = vmatprep.subr.mxu0 %v3072
      %3154 = vmatpush1.msra.mxu0 %v3070
      %3155 = vmatprep.subr.mxu0 %v3076
      %3156 = vmatpush1.msra.mxu0 %v3074
      %3157 = vmatprep.subr.mxu0 %v3082
      %3158 = vmatpush1.msra.mxu0 %v3080
      %3159 = vmatprep.subr.mxu0 %v3086
      %3160 = vmatpush1.msra.mxu0 %v3084
      %3161 = vmatprep.subr.mxu0 0.0
      %3162 = vmatpush1.msra.mxu0 0.0
      %3163 = vmatprep.subr.mxu0 0.0
      %3164 = vmatpush1.msra.mxu0 0.0
      %3165 = vmatprep.subr.mxu0 0.0
      %3166 = vmatpush1.msra.mxu0 0.0
      %3167 = vmatprep.subr.mxu0 0.0
      %3168 = vmatpush1.msra.mxu0 0.0
      %3169 = vmatprep.subr.mxu0 0.0
      %3170 = vmatpush1.msra.mxu0 0.0
      %3171 = vmatprep.subr.mxu0 0.0
      %3172 = vmatpush1.msra.mxu0 0.0
      %3173 = vmatprep.subr.mxu0 0.0
      %3174 = vmatpush1.msra.mxu0 0.0
      %3175 = vmatprep.subr.mxu0 0.0
      %3176 = vmatpush1.msra.mxu0 0.0
      %3177 = vmatprep.subr.mxu0 0.0
      %3178 = vmatpush1.msra.mxu0 0.0
      %3179 = vmatprep.subr.mxu0 0.0
      %3180 = vmatpush1.msra.mxu0 0.0
      %3181 = vmatprep.subr.mxu0 0.0
      %3182 = vmatpush1.msra.mxu0 0.0
      %3183 = vmatprep.subr.mxu0 0.0
      %3184 = vmatpush1.msra.mxu0 0.0
      %3185 = vmatprep.subr.mxu0 0.0
      %3186 = vmatpush1.msra.mxu0 0.0
      %3187 = vmatprep.subr.mxu0 0.0
      %3188 = vmatpush1.msra.mxu0 0.0
      %3189 = vmatprep.subr.mxu0 0.0
      %3190 = vmatpush1.msra.mxu0 0.0
      %3191 = vmatprep.subr.mxu0 0.0
      %3192 = vmatpush1.msra.mxu0 0.0
      %3193 = vmatprep.subr.mxu0 0.0
      %3194 = vmatpush1.msra.mxu0 0.0
      %3195 = vmatprep.subr.mxu0 0.0
      %3196 = vmatpush1.msra.mxu0 0.0
      %3197 = vmatprep.subr.mxu0 0.0
      %3198 = vmatpush1.msra.mxu0 0.0
      %3199 = vmatprep.subr.mxu0 0.0
      %3200 = vmatpush1.msra.mxu0 0.0
      %3201 = vmatprep.subr.mxu0 0.0
      %3202 = vmatpush1.msra.mxu0 0.0
      %3203 = vmatprep.subr.mxu0 0.0
      %3204 = vmatpush1.msra.mxu0 0.0
      %3205 = vmatprep.subr.mxu0 0.0
      %3206 = vmatpush1.msra.mxu0 0.0
      %3207 = vmatprep.subr.mxu0 0.0
      %3208 = vmatpush1.msra.mxu0 0.0
      %3209 = vmatprep.subr.mxu0 0.0
      %3210 = vmatpush1.msra.mxu0 0.0
      %3211 = vmatprep.subr.mxu0 0.0
      %3212 = vmatpush1.msra.mxu0 0.0
      %3213 = vmatprep.subr.mxu0 0.0
      %3214 = vmatpush1.msra.mxu0 0.0
      %3215 = vmatprep.subr.mxu0 0.0
      %3216 = vmatpush1.msra.mxu0 0.0
      %3217 = vmatprep.mubr.f32.mxu0 0.0
      %3218 = vmatmul.mubr.f32.gmra.mrb[0].mxu0 %v3148
      %v3219 = vpop.f32.mrb[0].mxu0
      %v3220 = vadd.f32 0.0, %v3219
      %v3221 = vpop.f32.mrb[0].mxu0
      %v3222 = vadd.f32 0.0, %v3221
      %3223 = vmatprep.mubr.f32.mxu0 0.0
      %3224 = vmatmul.mubr.f32.gmra.mrb[0].mxu0 %v3151
      %v3225 = vpop.f32.mrb[0].mxu0
      %v3226 = vadd.f32 0.0, %v3225
      %v3227 = vpop.f32.mrb[0].mxu0
      %v3228 = vadd.f32 0.0, %v3227
      %3229 = vdwg.mxu0
      %v3231 = vsel %vm3146, %v3141, 0
      %v3234 = vsel %vm3146, %v3142, 0
      %3236 = vmatprep.subr.mxu0 %v3019
      %3237 = vmatpush1.msra.mxu0 %v3017
      %3238 = vmatprep.subr.mxu0 %v3023
      %3239 = vmatpush1.msra.mxu0 %v3021
      %3240 = vmatprep.subr.mxu0 %v3029
      %3241 = vmatpush1.msra.mxu0 %v3027
      %3242 = vmatprep.subr.mxu0 %v3033
      %3243 = vmatpush1.msra.mxu0 %v3031
      %3244 = vmatprep.subr.mxu0 0.0
      %3245 = vmatpush1.msra.mxu0 0.0
      %3246 = vmatprep.subr.mxu0 0.0
      %3247 = vmatpush1.msra.mxu0 0.0
      %3248 = vmatprep.subr.mxu0 0.0
      %3249 = vmatpush1.msra.mxu0 0.0
      %3250 = vmatprep.subr.mxu0 0.0
      %3251 = vmatpush1.msra.mxu0 0.0
      %3252 = vmatprep.subr.mxu0 0.0
      %3253 = vmatpush1.msra.mxu0 0.0
      %3254 = vmatprep.subr.mxu0 0.0
      %3255 = vmatpush1.msra.mxu0 0.0
      %3256 = vmatprep.subr.mxu0 0.0
      %3257 = vmatpush1.msra.mxu0 0.0
      %3258 = vmatprep.subr.mxu0 0.0
      %3259 = vmatpush1.msra.mxu0 0.0
      %3260 = vmatprep.subr.mxu0 0.0
      %3261 = vmatpush1.msra.mxu0 0.0
      %3262 = vmatprep.subr.mxu0 0.0
      %3263 = vmatpush1.msra.mxu0 0.0
      %3264 = vmatprep.subr.mxu0 0.0
      %3265 = vmatpush1.msra.mxu0 0.0
      %3266 = vmatprep.subr.mxu0 0.0
      %3267 = vmatpush1.msra.mxu0 0.0
      %3268 = vmatprep.subr.mxu0 0.0
      %3269 = vmatpush1.msra.mxu0 0.0
      %3270 = vmatprep.subr.mxu0 0.0
      %3271 = vmatpush1.msra.mxu0 0.0
      %3272 = vmatprep.subr.mxu0 0.0
      %3273 = vmatpush1.msra.mxu0 0.0
      %3274 = vmatprep.subr.mxu0 0.0
      %3275 = vmatpush1.msra.mxu0 0.0
      %3276 = vmatprep.subr.mxu0 0.0
      %3277 = vmatpush1.msra.mxu0 0.0
      %3278 = vmatprep.subr.mxu0 0.0
      %3279 = vmatpush1.msra.mxu0 0.0
      %3280 = vmatprep.subr.mxu0 0.0
      %3281 = vmatpush1.msra.mxu0 0.0
      %3282 = vmatprep.subr.mxu0 0.0
      %3283 = vmatpush1.msra.mxu0 0.0
      %3284 = vmatprep.subr.mxu0 0.0
      %3285 = vmatpush1.msra.mxu0 0.0
      %3286 = vmatprep.subr.mxu0 0.0
      %3287 = vmatpush1.msra.mxu0 0.0
      %3288 = vmatprep.subr.mxu0 0.0
      %3289 = vmatpush1.msra.mxu0 0.0
      %3290 = vmatprep.subr.mxu0 0.0
      %3291 = vmatpush1.msra.mxu0 0.0
      %3292 = vmatprep.subr.mxu0 0.0
      %3293 = vmatpush1.msra.mxu0 0.0
      %3294 = vmatprep.subr.mxu0 0.0
      %3295 = vmatpush1.msra.mxu0 0.0
      %3296 = vmatprep.subr.mxu0 0.0
      %3297 = vmatpush1.msra.mxu0 0.0
      %3298 = vmatprep.subr.mxu0 0.0
      %3299 = vmatpush1.msra.mxu0 0.0
      %3300 = vmatprep.mubr.f32.mxu0 0.0
      %3301 = vmatmul.mubr.f32.gmra.mrb[0].mxu0 %v3231
      %v3302 = vpop.f32.mrb[0].mxu0
      %v3303 = vadd.f32 %v3220, %v3302
      %v3304 = vpop.f32.mrb[0].mxu0
      %v3305 = vadd.f32 %v3222, %v3304
      %3306 = vmatprep.mubr.f32.mxu0 0.0
      %3307 = vmatmul.mubr.f32.gmra.mrb[0].mxu0 %v3234
      %v3308 = vpop.f32.mrb[0].mxu0
      %v3309 = vadd.f32 %v3226, %v3308
      %v3310 = vpop.f32.mrb[0].mxu0
      %v3311 = vadd.f32 %v3228, %v3310
      %3312 = vdwg.mxu0
      %s3313 = scalar_lea.vmem %s11, 32
      %v3314 = vld [vmem:[%s3313] sm:$0xff]
      %v3315 = vld [vmem:[%s3313 + $0x8] sm:$0xff]
      %v3317 = vsel %vm3146, %v3314, 0
      %v3320 = vsel %vm3146, %v3315, 0
      %3322 = vmatprep.subr.mxu0 %v3125
      %3323 = vmatpush1.msra.mxu0 %v3123
      %3324 = vmatprep.subr.mxu0 %v3129
      %3325 = vmatpush1.msra.mxu0 %v3127
      %3326 = vmatprep.subr.mxu0 %v3135
      %3327 = vmatpush1.msra.mxu0 %v3133
      %3328 = vmatprep.subr.mxu0 %v3139
      %3329 = vmatpush1.msra.mxu0 %v3137
      %3330 = vmatprep.subr.mxu0 0.0
      %3331 = vmatpush1.msra.mxu0 0.0
      %3332 = vmatprep.subr.mxu0 0.0
      %3333 = vmatpush1.msra.mxu0 0.0
      %3334 = vmatprep.subr.mxu0 0.0
      %3335 = vmatpush1.msra.mxu0 0.0
      %3336 = vmatprep.subr.mxu0 0.0
      %3337 = vmatpush1.msra.mxu0 0.0
      %3338 = vmatprep.subr.mxu0 0.0
      %3339 = vmatpush1.msra.mxu0 0.0
      %3340 = vmatprep.subr.mxu0 0.0
      %3341 = vmatpush1.msra.mxu0 0.0
      %3342 = vmatprep.subr.mxu0 0.0
      %3343 = vmatpush1.msra.mxu0 0.0
      %3344 = vmatprep.subr.mxu0 0.0
      %3345 = vmatpush1.msra.mxu0 0.0
      %3346 = vmatprep.subr.mxu0 0.0
      %3347 = vmatpush1.msra.mxu0 0.0
      %3348 = vmatprep.subr.mxu0 0.0
      %3349 = vmatpush1.msra.mxu0 0.0
      %3350 = vmatprep.subr.mxu0 0.0
      %3351 = vmatpush1.msra.mxu0 0.0
      %3352 = vmatprep.subr.mxu0 0.0
      %3353 = vmatpush1.msra.mxu0 0.0
      %3354 = vmatprep.subr.mxu0 0.0
      %3355 = vmatpush1.msra.mxu0 0.0
      %3356 = vmatprep.subr.mxu0 0.0
      %3357 = vmatpush1.msra.mxu0 0.0
      %3358 = vmatprep.subr.mxu0 0.0
      %3359 = vmatpush1.msra.mxu0 0.0
      %3360 = vmatprep.subr.mxu0 0.0
      %3361 = vmatpush1.msra.mxu0 0.0
      %3362 = vmatprep.subr.mxu0 0.0
      %3363 = vmatpush1.msra.mxu0 0.0
      %3364 = vmatprep.subr.mxu0 0.0
      %3365 = vmatpush1.msra.mxu0 0.0
      %3366 = vmatprep.subr.mxu0 0.0
      %3367 = vmatpush1.msra.mxu0 0.0
      %3368 = vmatprep.subr.mxu0 0.0
      %3369 = vmatpush1.msra.mxu0 0.0
      %3370 = vmatprep.subr.mxu0 0.0
      %3371 = vmatpush1.msra.mxu0 0.0
      %3372 = vmatprep.subr.mxu0 0.0
      %3373 = vmatpush1.msra.mxu0 0.0
      %3374 = vmatprep.subr.mxu0 0.0
      %3375 = vmatpush1.msra.mxu0 0.0
      %3376 = vmatprep.subr.mxu0 0.0
      %3377 = vmatpush1.msra.mxu0 0.0
      %3378 = vmatprep.subr.mxu0 0.0
      %3379 = vmatpush1.msra.mxu0 0.0
      %3380 = vmatprep.subr.mxu0 0.0
      %3381 = vmatpush1.msra.mxu0 0.0
      %3382 = vmatprep.subr.mxu0 0.0
      %3383 = vmatpush1.msra.mxu0 0.0
      %3384 = vmatprep.subr.mxu0 0.0
      %3385 = vmatpush1.msra.mxu0 0.0
      %3386 = vmatprep.mubr.f32.mxu0 0.0
      %3387 = vmatmul.mubr.f32.gmra.mrb[0].mxu0 %v3317
      %v3388 = vpop.f32.mrb[0].mxu0
      %v3389 = vadd.f32 0.0, %v3388
      %v3390 = vpop.f32.mrb[0].mxu0
      %v3391 = vadd.f32 0.0, %v3390
      %3392 = vmatprep.mubr.f32.mxu0 0.0
      %3393 = vmatmul.mubr.f32.gmra.mrb[0].mxu0 %v3320
      %v3394 = vpop.f32.mrb[0].mxu0
      %v3395 = vadd.f32 0.0, %v3394
      %v3396 = vpop.f32.mrb[0].mxu0
      %v3397 = vadd.f32 0.0, %v3396
      %3398 = vdwg.mxu0
      %v3399 = vadd.f32 %v3303, %v3389
      %v3400 = vadd.f32 %v3305, %v3391
      %v3401 = vadd.f32 %v3309, %v3395
      %v3402 = vadd.f32 %v3311, %v3397
      %v3403 = vld [vmem:[%s15] sm:$0x3]
      %v3405 = vlaneseq
      %v3406 = vshrl.u32 %v3405, 7
      %v3407 = vsub.s32 0, %v3406
      %v3408 = vrot.slane %v3403, %v3407
      %v3409 = vlaneseq
      %v3410 = vshrl.u32 %v3409, 7
      %v3411 = vsub.s32 1, %v3410
      %v3412 = vrot.slane %v3403, %v3411
      %v3415 = vmul.f32 %v3399, %v3408
      %v3416 = vmul.f32 %v3400, %v3412
      %v3417 = vmul.f32 %v3401, %v3408
      %v3418 = vmul.f32 %v3402, %v3412
      %v3419 = vld [vmem:[%s17] sm:$0x3]
      %v3421 = vlaneseq
      %v3422 = vshrl.u32 %v3421, 7
      %v3423 = vsub.s32 0, %v3422
      %v3424 = vrot.slane %v3419, %v3423
      %v3425 = vlaneseq
      %v3426 = vshrl.u32 %v3425, 7
      %v3427 = vsub.s32 1, %v3426
      %v3428 = vrot.slane %v3419, %v3427
      %v3431 = vadd.f32 %v3415, %v3424
      %v3432 = vadd.f32 %v3416, %v3428
      %v3433 = vadd.f32 %v3417, %v3424
      %v3434 = vadd.f32 %v3418, %v3428
      %v3435 = vxor.u32 %v3431, 2147483648
      %v3436 = vxor.u32 %v3432, 2147483648
      %v3437 = vxor.u32 %v3433, 2147483648
      %v3438 = vxor.u32 %v3434, 2147483648
      %v3439 = vmul.f32 %v3435, 1.442695
      %v3440 = vpow.pop %v3439
      %v3441 = vmul.f32 %v3436, 1.442695
      %v3442 = vpow.pop %v3441
      %v3443 = vmul.f32 %v3437, 1.442695
      %v3444 = vpow.pop %v3443
      %v3445 = vmul.f32 %v3438, 1.442695
      %v3446 = vpow.pop %v3445
      %v3447 = vadd.f32 %v3440, 1.0
      %v3448 = vadd.f32 %v3442, 1.0
      %v3449 = vadd.f32 %v3444, 1.0
      %v3450 = vadd.f32 %v3446, 1.0
      %v3451 = vrcp.pop %v3447
      %v3452 = vmul.f32 1.0, %v3451
      %v3453 = vrcp.pop %v3448
      %v3454 = vmul.f32 1.0, %v3453
      %v3455 = vrcp.pop %v3449
      %v3456 = vmul.f32 1.0, %v3455
      %v3457 = vrcp.pop %v3450
      %v3458 = vmul.f32 1.0, %v3457
      %v3459 = vmul.f32 %v3431, %v3452
      %v3460 = vmul.f32 %v3432, %v3454
      %v3461 = vmul.f32 %v3433, %v3456
      %v3462 = vmul.f32 %v3434, %v3458
      %v3463 = vpack.c.bf16 %v3461, %v3459
      %v3464 = vpack.c.bf16 %v3462, %v3460
      %v3465 = vld [vmem:[%s21] sm:$0xff]
      %v3466 = vld [vmem:[%s21 + $0x8] sm:$0xf]
      %v3467 = vld [vmem:[%s21 + $0xc] sm:$0xff]
      %v3468 = vld [vmem:[%s21 + $0x14] sm:$0xf]
      %v3469 = vld [vmem:[%s21 + $0x18] sm:$0xff]
      %v3470 = vld [vmem:[%s21 + $0x20] sm:$0xf]
      %v3471 = vld [vmem:[%s21 + $0x24] sm:$0xff]
      %v3472 = vld [vmem:[%s21 + $0x2c] sm:$0xf]
      %v3473 = vld [vmem:[%s21 + $0x30] sm:$0xff]
      %v3474 = vld [vmem:[%s21 + $0x38] sm:$0xf]
      %v3475 = vld [vmem:[%s21 + $0x3c] sm:$0xff]
      %v3476 = vld [vmem:[%s21 + $0x44] sm:$0xf]
      %v3477 = vld [vmem:[%s21 + $0x48] sm:$0xff]
      %v3478 = vld [vmem:[%s21 + $0x50] sm:$0xf]
      %v3479 = vld [vmem:[%s21 + $0x54] sm:$0xff]
      %v3480 = vld [vmem:[%s21 + $0x5c] sm:$0xf]
      %v3481 = vld [vmem:[%s21 + $0x60] sm:$0xff]
      %v3482 = vld [vmem:[%s21 + $0x68] sm:$0xf]
      %v3483 = vld [vmem:[%s21 + $0x6c] sm:$0xff]
      %v3484 = vld [vmem:[%s21 + $0x74] sm:$0xf]
      %v3485 = vld [vmem:[%s21 + $0x78] sm:$0xff]
      %v3486 = vld [vmem:[%s21 + $0x80] sm:$0xf]
      %v3487 = vld [vmem:[%s21 + $0x84] sm:$0xff]
      %v3488 = vld [vmem:[%s21 + $0x8c] sm:$0xf]
      %v3489 = vld [vmem:[%s21 + $0x90] sm:$0xff]
      %v3490 = vld [vmem:[%s21 + $0x98] sm:$0xf]
      %v3491 = vld [vmem:[%s21 + $0x9c] sm:$0xff]
      %v3492 = vld [vmem:[%s21 + $0xa4] sm:$0xf]
      %v3493 = vld [vmem:[%s21 + $0xa8] sm:$0xff]
      %v3494 = vld [vmem:[%s21 + $0xb0] sm:$0xf]
      %v3495 = vld [vmem:[%s21 + $0xb4] sm:$0xff]
      %v3496 = vld [vmem:[%s21 + $0xbc] sm:$0xf]
      %v3497 = vld [vmem:[%s21 + $0xc0] sm:$0xff]
      %v3498 = vld [vmem:[%s21 + $0xc8] sm:$0xf]
      %v3499 = vld [vmem:[%s21 + $0xcc] sm:$0xff]
      %v3500 = vld [vmem:[%s21 + $0xd4] sm:$0xf]
      %v3501 = vld [vmem:[%s21 + $0xd8] sm:$0xff]
      %v3502 = vld [vmem:[%s21 + $0xe0] sm:$0xf]
      %v3503 = vld [vmem:[%s21 + $0xe4] sm:$0xff]
      %v3504 = vld [vmem:[%s21 + $0xec] sm:$0xf]
      %v3505 = vld [vmem:[%s21 + $0xf0] sm:$0xff]
      %v3506 = vld [vmem:[%s21 + $0xf8] sm:$0xf]
      %v3507 = vld [vmem:[%s21 + $0xfc] sm:$0xff]
      %v3508 = vld [vmem:[%s21 + $0x104] sm:$0xf]
      %v3509 = vld [vmem:[%s21 + $0x108] sm:$0xff]
      %v3510 = vld [vmem:[%s21 + $0x110] sm:$0xf]
      %v3511 = vld [vmem:[%s21 + $0x114] sm:$0xff]
      %v3512 = vld [vmem:[%s21 + $0x11c] sm:$0xf]
      %v3513 = vld [vmem:[%s21 + $0x120] sm:$0xff]
      %v3514 = vld [vmem:[%s21 + $0x128] sm:$0xf]
      %v3515 = vld [vmem:[%s21 + $0x12c] sm:$0xff]
      %v3516 = vld [vmem:[%s21 + $0x134] sm:$0xf]
      %v3517 = vld [vmem:[%s21 + $0x138] sm:$0xff]
      %v3518 = vld [vmem:[%s21 + $0x140] sm:$0xf]
      %v3519 = vld [vmem:[%s21 + $0x144] sm:$0xff]
      %v3520 = vld [vmem:[%s21 + $0x14c] sm:$0xf]
      %v3521 = vld [vmem:[%s21 + $0x150] sm:$0xff]
      %v3522 = vld [vmem:[%s21 + $0x158] sm:$0xf]
      %v3523 = vld [vmem:[%s21 + $0x15c] sm:$0xff]
      %v3524 = vld [vmem:[%s21 + $0x164] sm:$0xf]
      %v3525 = vld [vmem:[%s21 + $0x168] sm:$0xff]
      %v3526 = vld [vmem:[%s21 + $0x170] sm:$0xf]
      %v3527 = vld [vmem:[%s21 + $0x174] sm:$0xff]
      %v3528 = vld [vmem:[%s21 + $0x17c] sm:$0xf]
      %v3593 = vunpack.c.l.b16 %v3465
      %v3594 = vunpack.c.h.b16 %v3465
      %v3595 = vunpack.c.l.b16 %v3466
      %v3596 = vunpack.c.l.b16 %v3467
      %v3597 = vunpack.c.h.b16 %v3467
      %v3598 = vunpack.c.l.b16 %v3468
      %v3599 = vunpack.c.l.b16 %v3469
      %v3600 = vunpack.c.h.b16 %v3469
      %v3601 = vunpack.c.l.b16 %v3470
      %v3602 = vunpack.c.l.b16 %v3471
      %v3603 = vunpack.c.h.b16 %v3471
      %v3604 = vunpack.c.l.b16 %v3472
      %v3605 = vunpack.c.l.b16 %v3473
      %v3606 = vunpack.c.h.b16 %v3473
      %v3607 = vunpack.c.l.b16 %v3474
      %v3608 = vunpack.c.l.b16 %v3475
      %v3609 = vunpack.c.h.b16 %v3475
      %v3610 = vunpack.c.l.b16 %v3476
      %v3611 = vunpack.c.l.b16 %v3477
      %v3612 = vunpack.c.h.b16 %v3477
      %v3613 = vunpack.c.l.b16 %v3478
      %v3614 = vunpack.c.l.b16 %v3479
      %v3615 = vunpack.c.h.b16 %v3479
      %v3616 = vunpack.c.l.b16 %v3480
      %v3617 = vunpack.c.l.b16 %v3481
      %v3618 = vunpack.c.h.b16 %v3481
      %v3619 = vunpack.c.l.b16 %v3482
      %v3620 = vunpack.c.l.b16 %v3483
      %v3621 = vunpack.c.h.b16 %v3483
      %v3622 = vunpack.c.l.b16 %v3484
      %v3623 = vunpack.c.l.b16 %v3485
      %v3624 = vunpack.c.h.b16 %v3485
      %v3625 = vunpack.c.l.b16 %v3486
      %v3626 = vunpack.c.l.b16 %v3487
      %v3627 = vunpack.c.h.b16 %v3487
      %v3628 = vunpack.c.l.b16 %v3488
      %v3629 = vunpack.c.l.b16 %v3489
      %v3630 = vunpack.c.h.b16 %v3489
      %v3631 = vunpack.c.l.b16 %v3490
      %v3632 = vunpack.c.l.b16 %v3491
      %v3633 = vunpack.c.h.b16 %v3491
      %v3634 = vunpack.c.l.b16 %v3492
      %v3635 = vunpack.c.l.b16 %v3493
      %v3636 = vunpack.c.h.b16 %v3493
      %v3637 = vunpack.c.l.b16 %v3494
      %v3638 = vunpack.c.l.b16 %v3495
      %v3639 = vunpack.c.h.b16 %v3495
      %v3640 = vunpack.c.l.b16 %v3496
      %v3641 = vunpack.c.l.b16 %v3497
      %v3642 = vunpack.c.h.b16 %v3497
      %v3643 = vunpack.c.l.b16 %v3498
      %v3644 = vunpack.c.l.b16 %v3499
      %v3645 = vunpack.c.h.b16 %v3499
      %v3646 = vunpack.c.l.b16 %v3500
      %v3647 = vunpack.c.l.b16 %v3501
      %v3648 = vunpack.c.h.b16 %v3501
      %v3649 = vunpack.c.l.b16 %v3502
      %v3650 = vunpack.c.l.b16 %v3503
      %v3651 = vunpack.c.h.b16 %v3503
      %v3652 = vunpack.c.l.b16 %v3504
      %v3653 = vunpack.c.l.b16 %v3505
      %v3654 = vunpack.c.h.b16 %v3505
      %v3655 = vunpack.c.l.b16 %v3506
      %v3656 = vunpack.c.l.b16 %v3507
      %v3657 = vunpack.c.h.b16 %v3507
      %v3658 = vunpack.c.l.b16 %v3508
      %v3659 = vunpack.c.l.b16 %v3509
      %v3660 = vunpack.c.h.b16 %v3509
      %v3661 = vunpack.c.l.b16 %v3510
      %v3662 = vunpack.c.l.b16 %v3511
      %v3663 = vunpack.c.h.b16 %v3511
      %v3664 = vunpack.c.l.b16 %v3512
      %v3665 = vunpack.c.l.b16 %v3513
      %v3666 = vunpack.c.h.b16 %v3513
      %v3667 = vunpack.c.l.b16 %v3514
      %v3668 = vunpack.c.l.b16 %v3515
      %v3669 = vunpack.c.h.b16 %v3515
      %v3670 = vunpack.c.l.b16 %v3516
      %v3671 = vunpack.c.l.b16 %v3517
      %v3672 = vunpack.c.h.b16 %v3517
      %v3673 = vunpack.c.l.b16 %v3518
      %v3674 = vunpack.c.l.b16 %v3519
      %v3675 = vunpack.c.h.b16 %v3519
      %v3676 = vunpack.c.l.b16 %v3520
      %v3677 = vunpack.c.l.b16 %v3521
      %v3678 = vunpack.c.h.b16 %v3521
      %v3679 = vunpack.c.l.b16 %v3522
      %v3680 = vunpack.c.l.b16 %v3523
      %v3681 = vunpack.c.h.b16 %v3523
      %v3682 = vunpack.c.l.b16 %v3524
      %v3683 = vunpack.c.l.b16 %v3525
      %v3684 = vunpack.c.h.b16 %v3525
      %v3685 = vunpack.c.l.b16 %v3526
      %v3686 = vunpack.c.l.b16 %v3527
      %v3687 = vunpack.c.h.b16 %v3527
      %v3688 = vunpack.c.l.b16 %v3528
      %v3689 = vpack.c.b16 %v3596, %v3593
      %v3690 = vpack.c.b16 %v3597, %v3594
      %v3691 = vpack.c.b16 %v3598, %v3595
      %v3692 = vpack.c.b16 %v3602, %v3599
      %v3693 = vpack.c.b16 %v3603, %v3600
      %v3694 = vpack.c.b16 %v3604, %v3601
      %v3695 = vpack.c.b16 %v3608, %v3605
      %v3696 = vpack.c.b16 %v3609, %v3606
      %v3697 = vpack.c.b16 %v3610, %v3607
      %v3698 = vpack.c.b16 %v3614, %v3611
      %v3699 = vpack.c.b16 %v3615, %v3612
      %v3700 = vpack.c.b16 %v3616, %v3613
      %v3701 = vpack.c.b16 %v3620, %v3617
      %v3702 = vpack.c.b16 %v3621, %v3618
      %v3703 = vpack.c.b16 %v3622, %v3619
      %v3704 = vpack.c.b16 %v3626, %v3623
      %v3705 = vpack.c.b16 %v3627, %v3624
      %v3706 = vpack.c.b16 %v3628, %v3625
      %v3707 = vpack.c.b16 %v3632, %v3629
      %v3708 = vpack.c.b16 %v3633, %v3630
      %v3709 = vpack.c.b16 %v3634, %v3631
      %v3710 = vpack.c.b16 %v3638, %v3635
      %v3711 = vpack.c.b16 %v3639, %v3636
      %v3712 = vpack.c.b16 %v3640, %v3637
      %v3713 = vpack.c.b16 %v3644, %v3641
      %v3714 = vpack.c.b16 %v3645, %v3642
      %v3715 = vpack.c.b16 %v3646, %v3643
      %v3716 = vpack.c.b16 %v3650, %v3647
      %v3717 = vpack.c.b16 %v3651, %v3648
      %v3718 = vpack.c.b16 %v3652, %v3649
      %v3719 = vpack.c.b16 %v3656, %v3653
      %v3720 = vpack.c.b16 %v3657, %v3654
      %v3721 = vpack.c.b16 %v3658, %v3655
      %v3722 = vpack.c.b16 %v3662, %v3659
      %v3723 = vpack.c.b16 %v3663, %v3660
      %v3724 = vpack.c.b16 %v3664, %v3661
      %v3725 = vpack.c.b16 %v3668, %v3665
      %v3726 = vpack.c.b16 %v3669, %v3666
      %v3727 = vpack.c.b16 %v3670, %v3667
      %v3728 = vpack.c.b16 %v3674, %v3671
      %v3729 = vpack.c.b16 %v3675, %v3672
      %v3730 = vpack.c.b16 %v3676, %v3673
      %v3731 = vpack.c.b16 %v3680, %v3677
      %v3732 = vpack.c.b16 %v3681, %v3678
      %v3733 = vpack.c.b16 %v3682, %v3679
      %v3734 = vpack.c.b16 %v3686, %v3683
      %v3735 = vpack.c.b16 %v3687, %v3684
      %v3736 = vpack.c.b16 %v3688, %v3685
      %3785 = vmatprep.subr.bf16.mxu0 %v3690
      %3786 = vmatpush1.bf16.msra.mxu0 %v3689
      %3787 = vmatprep.subr.bf16.mxu0 %v3693
      %3788 = vmatpush1.bf16.msra.mxu0 %v3692
      %3789 = vmatprep.subr.bf16.mxu0 %v3696
      %3790 = vmatpush1.bf16.msra.mxu0 %v3695
      %3791 = vmatprep.subr.bf16.mxu0 %v3699
      %3792 = vmatpush1.bf16.msra.mxu0 %v3698
      %3793 = vmatprep.subr.bf16.mxu0 %v3702
      %3794 = vmatpush1.bf16.msra.mxu0 %v3701
      %3795 = vmatprep.subr.bf16.mxu0 %v3705
      %3796 = vmatpush1.bf16.msra.mxu0 %v3704
      %3797 = vmatprep.subr.bf16.mxu0 %v3708
      %3798 = vmatpush1.bf16.msra.mxu0 %v3707
      %3799 = vmatprep.subr.bf16.mxu0 %v3711
      %3800 = vmatpush1.bf16.msra.mxu0 %v3710
      %3801 = vmatprep.subr.bf16.mxu0 %v3714
      %3802 = vmatpush1.bf16.msra.mxu0 %v3713
      %3803 = vmatprep.subr.bf16.mxu0 %v3717
      %3804 = vmatpush1.bf16.msra.mxu0 %v3716
      %3805 = vmatprep.subr.bf16.mxu0 %v3720
      %3806 = vmatpush1.bf16.msra.mxu0 %v3719
      %3807 = vmatprep.subr.bf16.mxu0 %v3723
      %3808 = vmatpush1.bf16.msra.mxu0 %v3722
      %3809 = vmatprep.subr.bf16.mxu0 %v3726
      %3810 = vmatpush1.bf16.msra.mxu0 %v3725
      %3811 = vmatprep.subr.bf16.mxu0 %v3729
      %3812 = vmatpush1.bf16.msra.mxu0 %v3728
      %3813 = vmatprep.subr.bf16.mxu0 %v3732
      %3814 = vmatpush1.bf16.msra.mxu0 %v3731
      %3815 = vmatprep.subr.bf16.mxu0 %v3735
      %3816 = vmatpush1.bf16.msra.mxu0 %v3734
      %3817 = vmatprep.mubr.bf16.mxu0 %v3464
      %3818 = vmatmul.mubr.bf16.gmra.mrb[0].mxu0 %v3463
      %v3819 = vpop.f32.mrb[0].mxu0
      %v3820 = vadd.f32 0.0, %v3819
      %v3821 = vpop.f32.mrb[0].mxu0
      %v3822 = vadd.f32 0.0, %v3821
      %v3823 = vpop.f32.mrb[0].mxu0
      %v3824 = vadd.f32 0.0, %v3823
      %v3825 = vpop.f32.mrb[0].mxu0
      %v3826 = vadd.f32 0.0, %v3825
      %3827 = vdwg.mxu0
      %3828 = vmatprep.subr.bf16.mxu0 0
      %3829 = vmatpush1.bf16.msra.mxu0 %v3691
      %3830 = vmatprep.subr.bf16.mxu0 0
      %3831 = vmatpush1.bf16.msra.mxu0 %v3694
      %3832 = vmatprep.subr.bf16.mxu0 0
      %3833 = vmatpush1.bf16.msra.mxu0 %v3697
      %3834 = vmatprep.subr.bf16.mxu0 0
      %3835 = vmatpush1.bf16.msra.mxu0 %v3700
      %3836 = vmatprep.subr.bf16.mxu0 0
      %3837 = vmatpush1.bf16.msra.mxu0 %v3703
      %3838 = vmatprep.subr.bf16.mxu0 0
      %3839 = vmatpush1.bf16.msra.mxu0 %v3706
      %3840 = vmatprep.subr.bf16.mxu0 0
      %3841 = vmatpush1.bf16.msra.mxu0 %v3709
      %3842 = vmatprep.subr.bf16.mxu0 0
      %3843 = vmatpush1.bf16.msra.mxu0 %v3712
      %3844 = vmatprep.subr.bf16.mxu0 0
      %3845 = vmatpush1.bf16.msra.mxu0 %v3715
      %3846 = vmatprep.subr.bf16.mxu0 0
      %3847 = vmatpush1.bf16.msra.mxu0 %v3718
      %3848 = vmatprep.subr.bf16.mxu0 0
      %3849 = vmatpush1.bf16.msra.mxu0 %v3721
      %3850 = vmatprep.subr.bf16.mxu0 0
      %3851 = vmatpush1.bf16.msra.mxu0 %v3724
      %3852 = vmatprep.subr.bf16.mxu0 0
      %3853 = vmatpush1.bf16.msra.mxu0 %v3727
      %3854 = vmatprep.subr.bf16.mxu0 0
      %3855 = vmatpush1.bf16.msra.mxu0 %v3730
      %3856 = vmatprep.subr.bf16.mxu0 0
      %3857 = vmatpush1.bf16.msra.mxu0 %v3733
      %3858 = vmatprep.subr.bf16.mxu0 0
      %3859 = vmatpush1.bf16.msra.mxu0 %v3736
      %3860 = vmatprep.mubr.bf16.mxu0 %v3464
      %3861 = vmatmul.mubr.bf16.gmra.mrb[0].mxu0 %v3463
      %v3862 = vpop.f32.mrb[0].mxu0
      %v3863 = vadd.f32 0.0, %v3862
      %v3864 = vpop.f32.mrb[0].mxu0
      %v3865 = vpop.f32.mrb[0].mxu0
      %v3866 = vadd.f32 0.0, %v3865
      %v3867 = vpop.f32.mrb[0].mxu0
      %3868 = vdwg.mxu0
      %v3869 = vld [vmem:[%s19] sm:$0xff]
      %s3870 = scalar_lea.vmem %s19, 8
      %v3871 = vld [vmem:[%s3870] sm:$0xff]
      %vm3872 = vcmask 130048
      %v3874 = vsel %vm3872, %v3871, 0
      %3876 = vmatprep.subr.mxu0 0.0
      %3877 = vmatpush1.msra.mxu0 %v3822
      %3878 = vmatprep.subr.mxu0 0.0
      %3879 = vmatpush1.msra.mxu0 %v3826
      %3880 = vmatprep.subr.mxu0 0.0
      %3881 = vmatpush1.msra.mxu0 0.0
      %3882 = vmatprep.subr.mxu0 0.0
      %3883 = vmatpush1.msra.mxu0 0.0
      %3884 = vmatprep.subr.mxu0 0.0
      %3885 = vmatpush1.msra.mxu0 0.0
      %3886 = vmatprep.subr.mxu0 0.0
      %3887 = vmatpush1.msra.mxu0 0.0
      %3888 = vmatprep.subr.mxu0 0.0
      %3889 = vmatpush1.msra.mxu0 0.0
      %3890 = vmatprep.subr.mxu0 0.0
      %3891 = vmatpush1.msra.mxu0 0.0
      %3892 = vmatprep.subr.mxu0 0.0
      %3893 = vmatpush1.msra.mxu0 0.0
      %3894 = vmatprep.subr.mxu0 0.0
      %3895 = vmatpush1.msra.mxu0 0.0
      %3896 = vmatprep.subr.mxu0 0.0
      %3897 = vmatpush1.msra.mxu0 0.0
      %3898 = vmatprep.subr.mxu0 0.0
      %3899 = vmatpush1.msra.mxu0 0.0
      %3900 = vmatprep.subr.mxu0 0.0
      %3901 = vmatpush1.msra.mxu0 0.0
      %3902 = vmatprep.subr.mxu0 0.0
      %3903 = vmatpush1.msra.mxu0 0.0
      %3904 = vmatprep.subr.mxu0 0.0
      %3905 = vmatpush1.msra.mxu0 0.0
      %3906 = vmatprep.subr.mxu0 0.0
      %3907 = vmatpush1.msra.mxu0 0.0
      %3908 = vmatprep.subr.mxu0 0.0
      %3909 = vmatpush1.msra.mxu0 0.0
      %3910 = vmatprep.subr.mxu0 0.0
      %3911 = vmatpush1.msra.mxu0 0.0
      %3912 = vmatprep.subr.mxu0 0.0
      %3913 = vmatpush1.msra.mxu0 0.0
      %3914 = vmatprep.subr.mxu0 0.0
      %3915 = vmatpush1.msra.mxu0 0.0
      %3916 = vmatprep.subr.mxu0 0.0
      %3917 = vmatpush1.msra.mxu0 0.0
      %3918 = vmatprep.subr.mxu0 0.0
      %3919 = vmatpush1.msra.mxu0 0.0
      %3920 = vmatprep.subr.mxu0 0.0
      %3921 = vmatpush1.msra.mxu0 0.0
      %3922 = vmatprep.subr.mxu0 0.0
      %3923 = vmatpush1.msra.mxu0 0.0
      %3924 = vmatprep.subr.mxu0 0.0
      %3925 = vmatpush1.msra.mxu0 0.0
      %3926 = vmatprep.subr.mxu0 0.0
      %3927 = vmatpush1.msra.mxu0 0.0
      %3928 = vmatprep.subr.mxu0 0.0
      %3929 = vmatpush1.msra.mxu0 0.0
      %3930 = vmatprep.subr.mxu0 0.0
      %3931 = vmatpush1.msra.mxu0 0.0
      %3932 = vmatprep.subr.mxu0 0.0
      %3933 = vmatpush1.msra.mxu0 0.0
      %3934 = vmatprep.subr.mxu0 0.0
      %3935 = vmatpush1.msra.mxu0 0.0
      %3936 = vmatprep.subr.mxu0 0.0
      %3937 = vmatpush1.msra.mxu0 0.0
      %3938 = vmatprep.subr.mxu0 0.0
      %3939 = vmatpush1.msra.mxu0 0.0
      %3940 = vmatprep.mubr.f32.mxu0 0.0
      %3941 = vmatmul.mubr.f32.gmra.mrb[0].mxu0 %v3874
      %v3942 = vpop.f32.mrb[0].mxu0
      %v3943 = vadd.f32 0.0, %v3942
      %v3944 = vpop.f32.mrb[0].mxu0
      %3945 = vdwg.mxu0
      %v3947 = vsel %vm3872, %v3869, 0
      %3949 = vmatprep.subr.mxu0 0.0
      %3950 = vmatpush1.msra.mxu0 %v3820
      %3951 = vmatprep.subr.mxu0 0.0
      %3952 = vmatpush1.msra.mxu0 %v3824
      %3953 = vmatprep.subr.mxu0 0.0
      %3954 = vmatpush1.msra.mxu0 0.0
      %3955 = vmatprep.subr.mxu0 0.0
      %3956 = vmatpush1.msra.mxu0 0.0
      %3957 = vmatprep.subr.mxu0 0.0
      %3958 = vmatpush1.msra.mxu0 0.0
      %3959 = vmatprep.subr.mxu0 0.0
      %3960 = vmatpush1.msra.mxu0 0.0
      %3961 = vmatprep.subr.mxu0 0.0
      %3962 = vmatpush1.msra.mxu0 0.0
      %3963 = vmatprep.subr.mxu0 0.0
      %3964 = vmatpush1.msra.mxu0 0.0
      %3965 = vmatprep.subr.mxu0 0.0
      %3966 = vmatpush1.msra.mxu0 0.0
      %3967 = vmatprep.subr.mxu0 0.0
      %3968 = vmatpush1.msra.mxu0 0.0
      %3969 = vmatprep.subr.mxu0 0.0
      %3970 = vmatpush1.msra.mxu0 0.0
      %3971 = vmatprep.subr.mxu0 0.0
      %3972 = vmatpush1.msra.mxu0 0.0
      %3973 = vmatprep.subr.mxu0 0.0
      %3974 = vmatpush1.msra.mxu0 0.0
      %3975 = vmatprep.subr.mxu0 0.0
      %3976 = vmatpush1.msra.mxu0 0.0
      %3977 = vmatprep.subr.mxu0 0.0
      %3978 = vmatpush1.msra.mxu0 0.0
      %3979 = vmatprep.subr.mxu0 0.0
      %3980 = vmatpush1.msra.mxu0 0.0
      %3981 = vmatprep.subr.mxu0 0.0
      %3982 = vmatpush1.msra.mxu0 0.0
      %3983 = vmatprep.subr.mxu0 0.0
      %3984 = vmatpush1.msra.mxu0 0.0
      %3985 = vmatprep.subr.mxu0 0.0
      %3986 = vmatpush1.msra.mxu0 0.0
      %3987 = vmatprep.subr.mxu0 0.0
      %3988 = vmatpush1.msra.mxu0 0.0
      %3989 = vmatprep.subr.mxu0 0.0
      %3990 = vmatpush1.msra.mxu0 0.0
      %3991 = vmatprep.subr.mxu0 0.0
      %3992 = vmatpush1.msra.mxu0 0.0
      %3993 = vmatprep.subr.mxu0 0.0
      %3994 = vmatpush1.msra.mxu0 0.0
      %3995 = vmatprep.subr.mxu0 0.0
      %3996 = vmatpush1.msra.mxu0 0.0
      %3997 = vmatprep.subr.mxu0 0.0
      %3998 = vmatpush1.msra.mxu0 0.0
      %3999 = vmatprep.subr.mxu0 0.0
      %4000 = vmatpush1.msra.mxu0 0.0
      %4001 = vmatprep.subr.mxu0 0.0
      %4002 = vmatpush1.msra.mxu0 0.0
      %4003 = vmatprep.subr.mxu0 0.0
      %4004 = vmatpush1.msra.mxu0 0.0
      %4005 = vmatprep.subr.mxu0 0.0
      %4006 = vmatpush1.msra.mxu0 0.0
      %4007 = vmatprep.subr.mxu0 0.0
      %4008 = vmatpush1.msra.mxu0 0.0
      %4009 = vmatprep.subr.mxu0 0.0
      %4010 = vmatpush1.msra.mxu0 0.0
      %4011 = vmatprep.subr.mxu0 0.0
      %4012 = vmatpush1.msra.mxu0 0.0
      %4013 = vmatprep.mubr.f32.mxu0 0.0
      %4014 = vmatmul.mubr.f32.gmra.mrb[0].mxu0 %v3947
      %v4015 = vpop.f32.mrb[0].mxu0
      %v4016 = vadd.f32 %v3943, %v4015
      %v4017 = vpop.f32.mrb[0].mxu0
      %4018 = vdwg.mxu0
      %s4019 = scalar_lea.vmem %s19, 16
      %v4020 = vld [vmem:[%s4019] sm:$0xff]
      %v4022 = vsel %vm3872, %v4020, 0
      %4024 = vmatprep.subr.mxu0 0.0
      %4025 = vmatpush1.msra.mxu0 %v3863
      %4026 = vmatprep.subr.mxu0 0.0
      %4027 = vmatpush1.msra.mxu0 %v3866
      %4028 = vmatprep.subr.mxu0 0.0
      %4029 = vmatpush1.msra.mxu0 0.0
      %4030 = vmatprep.subr.mxu0 0.0
      %4031 = vmatpush1.msra.mxu0 0.0
      %4032 = vmatprep.subr.mxu0 0.0
      %4033 = vmatpush1.msra.mxu0 0.0
      %4034 = vmatprep.subr.mxu0 0.0
      %4035 = vmatpush1.msra.mxu0 0.0
      %4036 = vmatprep.subr.mxu0 0.0
      %4037 = vmatpush1.msra.mxu0 0.0
      %4038 = vmatprep.subr.mxu0 0.0
      %4039 = vmatpush1.msra.mxu0 0.0
      %4040 = vmatprep.subr.mxu0 0.0
      %4041 = vmatpush1.msra.mxu0 0.0
      %4042 = vmatprep.subr.mxu0 0.0
      %4043 = vmatpush1.msra.mxu0 0.0
      %4044 = vmatprep.subr.mxu0 0.0
      %4045 = vmatpush1.msra.mxu0 0.0
      %4046 = vmatprep.subr.mxu0 0.0
      %4047 = vmatpush1.msra.mxu0 0.0
      %4048 = vmatprep.subr.mxu0 0.0
      %4049 = vmatpush1.msra.mxu0 0.0
      %4050 = vmatprep.subr.mxu0 0.0
      %4051 = vmatpush1.msra.mxu0 0.0
      %4052 = vmatprep.subr.mxu0 0.0
      %4053 = vmatpush1.msra.mxu0 0.0
      %4054 = vmatprep.subr.mxu0 0.0
      %4055 = vmatpush1.msra.mxu0 0.0
      %4056 = vmatprep.subr.mxu0 0.0
      %4057 = vmatpush1.msra.mxu0 0.0
      %4058 = vmatprep.subr.mxu0 0.0
      %4059 = vmatpush1.msra.mxu0 0.0
      %4060 = vmatprep.subr.mxu0 0.0
      %4061 = vmatpush1.msra.mxu0 0.0
      %4062 = vmatprep.subr.mxu0 0.0
      %4063 = vmatpush1.msra.mxu0 0.0
      %4064 = vmatprep.subr.mxu0 0.0
      %4065 = vmatpush1.msra.mxu0 0.0
      %4066 = vmatprep.subr.mxu0 0.0
      %4067 = vmatpush1.msra.mxu0 0.0
      %4068 = vmatprep.subr.mxu0 0.0
      %4069 = vmatpush1.msra.mxu0 0.0
      %4070 = vmatprep.subr.mxu0 0.0
      %4071 = vmatpush1.msra.mxu0 0.0
      %4072 = vmatprep.subr.mxu0 0.0
      %4073 = vmatpush1.msra.mxu0 0.0
      %4074 = vmatprep.subr.mxu0 0.0
      %4075 = vmatpush1.msra.mxu0 0.0
      %4076 = vmatprep.subr.mxu0 0.0
      %4077 = vmatpush1.msra.mxu0 0.0
      %4078 = vmatprep.subr.mxu0 0.0
      %4079 = vmatpush1.msra.mxu0 0.0
      %4080 = vmatprep.subr.mxu0 0.0
      %4081 = vmatpush1.msra.mxu0 0.0
      %4082 = vmatprep.subr.mxu0 0.0
      %4083 = vmatpush1.msra.mxu0 0.0
      %4084 = vmatprep.subr.mxu0 0.0
      %4085 = vmatpush1.msra.mxu0 0.0
      %4086 = vmatprep.subr.mxu0 0.0
      %4087 = vmatpush1.msra.mxu0 0.0
      %4088 = vmatprep.mubr.f32.mxu0 0.0
      %4089 = vmatmul.mubr.f32.gmra.mrb[0].mxu0 %v4022
      %v4090 = vpop.f32.mrb[0].mxu0
      %v4091 = vadd.f32 0.0, %v4090
      %v4092 = vpop.f32.mrb[0].mxu0
      %4093 = vdwg.mxu0
      %v4094 = vadd.f32 %v4016, %v4091
      %v4095 = vld [vmem:[%s23] sm:$0x1]
      %v4097 = vlaneseq
      %v4098 = vshrl.u32 %v4097, 7
      %v4099 = vsub.s32 0, %v4098
      %v4100 = vrot.slane %v4095, %v4099
      %v4102 = vmul.f32 %v4094, %v4100
      %v4103 = vld [vmem:[%s25] sm:$0x1]
      %v4105 = vlaneseq
      %v4106 = vshrl.u32 %v4105, 7
      %v4107 = vsub.s32 0, %v4106
      %v4108 = vrot.slane %v4103, %v4107
      %v4110 = vadd.f32 %v4102, %v4108
      %v4111 = vxor.u32 %v4110, 2147483648
      %v4112 = vmul.f32 %v4111, 1.442695
      %v4113 = vpow.pop %v4112
      %v4114 = vadd.f32 %v4113, 1.0
      %v4115 = vrcp.pop %v4114
      %v4116 = vmul.f32 1.0, %v4115
      %v4117 = vmul.f32 %v4110, %v4116
      %v4118 = vpack.c.bf16 %v4117, %v4117
      %v4119 = vld [vmem:[%s29] sm:$0xff]
      %v4120 = vld [vmem:[%s29 + $0x8] sm:$0xf]
      %v4121 = vld [vmem:[%s29 + $0xc] sm:$0xff]
      %v4122 = vld [vmem:[%s29 + $0x14] sm:$0xf]
      %v4123 = vld [vmem:[%s29 + $0x18] sm:$0xff]
      %v4124 = vld [vmem:[%s29 + $0x20] sm:$0xf]
      %v4125 = vld [vmem:[%s29 + $0x24] sm:$0xff]
      %v4126 = vld [vmem:[%s29 + $0x2c] sm:$0xf]
      %v4127 = vld [vmem:[%s29 + $0x30] sm:$0xff]
      %v4128 = vld [vmem:[%s29 + $0x38] sm:$0xf]
      %v4129 = vld [vmem:[%s29 + $0x3c] sm:$0xff]
      %v4130 = vld [vmem:[%s29 + $0x44] sm:$0xf]
      %v4131 = vld [vmem:[%s29 + $0x48] sm:$0xff]
      %v4132 = vld [vmem:[%s29 + $0x50] sm:$0xf]
      %v4133 = vld [vmem:[%s29 + $0x54] sm:$0xff]
      %v4134 = vld [vmem:[%s29 + $0x5c] sm:$0xf]
      %v4135 = vld [vmem:[%s29 + $0x60] sm:$0xff]
      %v4136 = vld [vmem:[%s29 + $0x68] sm:$0xf]
      %v4137 = vld [vmem:[%s29 + $0x6c] sm:$0xff]
      %v4138 = vld [vmem:[%s29 + $0x74] sm:$0xf]
      %v4139 = vld [vmem:[%s29 + $0x78] sm:$0xff]
      %v4140 = vld [vmem:[%s29 + $0x80] sm:$0xf]
      %v4141 = vld [vmem:[%s29 + $0x84] sm:$0xff]
      %v4142 = vld [vmem:[%s29 + $0x8c] sm:$0xf]
      %v4143 = vld [vmem:[%s29 + $0x90] sm:$0xff]
      %v4144 = vld [vmem:[%s29 + $0x98] sm:$0xf]
      %v4145 = vld [vmem:[%s29 + $0x9c] sm:$0xff]
      %v4146 = vld [vmem:[%s29 + $0xa4] sm:$0xf]
      %v4147 = vld [vmem:[%s29 + $0xa8] sm:$0xff]
      %v4148 = vld [vmem:[%s29 + $0xb0] sm:$0xf]
      %v4149 = vld [vmem:[%s29 + $0xb4] sm:$0xff]
      %v4150 = vld [vmem:[%s29 + $0xbc] sm:$0xf]
      %v4183 = vunpack.c.l.b16 %v4119
      %v4184 = vunpack.c.h.b16 %v4119
      %v4185 = vunpack.c.l.b16 %v4120
      %v4186 = vunpack.c.l.b16 %v4121
      %v4187 = vunpack.c.h.b16 %v4121
      %v4188 = vunpack.c.l.b16 %v4122
      %v4189 = vunpack.c.l.b16 %v4123
      %v4190 = vunpack.c.h.b16 %v4123
      %v4191 = vunpack.c.l.b16 %v4124
      %v4192 = vunpack.c.l.b16 %v4125
      %v4193 = vunpack.c.h.b16 %v4125
      %v4194 = vunpack.c.l.b16 %v4126
      %v4195 = vunpack.c.l.b16 %v4127
      %v4196 = vunpack.c.h.b16 %v4127
      %v4197 = vunpack.c.l.b16 %v4128
      %v4198 = vunpack.c.l.b16 %v4129
      %v4199 = vunpack.c.h.b16 %v4129
      %v4200 = vunpack.c.l.b16 %v4130
      %v4201 = vunpack.c.l.b16 %v4131
      %v4202 = vunpack.c.h.b16 %v4131
      %v4203 = vunpack.c.l.b16 %v4132
      %v4204 = vunpack.c.l.b16 %v4133
      %v4205 = vunpack.c.h.b16 %v4133
      %v4206 = vunpack.c.l.b16 %v4134
      %v4207 = vunpack.c.l.b16 %v4135
      %v4208 = vunpack.c.h.b16 %v4135
      %v4209 = vunpack.c.l.b16 %v4136
      %v4210 = vunpack.c.l.b16 %v4137
      %v4211 = vunpack.c.h.b16 %v4137
      %v4212 = vunpack.c.l.b16 %v4138
      %v4213 = vunpack.c.l.b16 %v4139
      %v4214 = vunpack.c.h.b16 %v4139
      %v4215 = vunpack.c.l.b16 %v4140
      %v4216 = vunpack.c.l.b16 %v4141
      %v4217 = vunpack.c.h.b16 %v4141
      %v4218 = vunpack.c.l.b16 %v4142
      %v4219 = vunpack.c.l.b16 %v4143
      %v4220 = vunpack.c.h.b16 %v4143
      %v4221 = vunpack.c.l.b16 %v4144
      %v4222 = vunpack.c.l.b16 %v4145
      %v4223 = vunpack.c.h.b16 %v4145
      %v4224 = vunpack.c.l.b16 %v4146
      %v4225 = vunpack.c.l.b16 %v4147
      %v4226 = vunpack.c.h.b16 %v4147
      %v4227 = vunpack.c.l.b16 %v4148
      %v4228 = vunpack.c.l.b16 %v4149
      %v4229 = vunpack.c.h.b16 %v4149
      %v4230 = vunpack.c.l.b16 %v4150
      %v4231 = vpack.c.b16 %v4186, %v4183
      %v4232 = vpack.c.b16 %v4187, %v4184
      %v4233 = vpack.c.b16 %v4188, %v4185
      %v4234 = vpack.c.b16 %v4192, %v4189
      %v4235 = vpack.c.b16 %v4193, %v4190
      %v4236 = vpack.c.b16 %v4194, %v4191
      %v4237 = vpack.c.b16 %v4198, %v4195
      %v4238 = vpack.c.b16 %v4199, %v4196
      %v4239 = vpack.c.b16 %v4200, %v4197
      %v4240 = vpack.c.b16 %v4204, %v4201
      %v4241 = vpack.c.b16 %v4205, %v4202
      %v4242 = vpack.c.b16 %v4206, %v4203
      %v4243 = vpack.c.b16 %v4210, %v4207
      %v4244 = vpack.c.b16 %v4211, %v4208
      %v4245 = vpack.c.b16 %v4212, %v4209
      %v4246 = vpack.c.b16 %v4216, %v4213
      %v4247 = vpack.c.b16 %v4217, %v4214
      %v4248 = vpack.c.b16 %v4218, %v4215
      %v4249 = vpack.c.b16 %v4222, %v4219
      %v4250 = vpack.c.b16 %v4223, %v4220
      %v4251 = vpack.c.b16 %v4224, %v4221
      %v4252 = vpack.c.b16 %v4228, %v4225
      %v4253 = vpack.c.b16 %v4229, %v4226
      %v4254 = vpack.c.b16 %v4230, %v4227
      %4279 = vmatprep.subr.bf16.mxu0 %v4232
      %4280 = vmatpush1.bf16.msra.mxu0 %v4231
      %4281 = vmatprep.subr.bf16.mxu0 %v4235
      %4282 = vmatpush1.bf16.msra.mxu0 %v4234
      %4283 = vmatprep.subr.bf16.mxu0 %v4238
      %4284 = vmatpush1.bf16.msra.mxu0 %v4237
      %4285 = vmatprep.subr.bf16.mxu0 %v4241
      %4286 = vmatpush1.bf16.msra.mxu0 %v4240
      %4287 = vmatprep.subr.bf16.mxu0 %v4244
      %4288 = vmatpush1.bf16.msra.mxu0 %v4243
      %4289 = vmatprep.subr.bf16.mxu0 %v4247
      %4290 = vmatpush1.bf16.msra.mxu0 %v4246
      %4291 = vmatprep.subr.bf16.mxu0 %v4250
      %4292 = vmatpush1.bf16.msra.mxu0 %v4249
      %4293 = vmatprep.subr.bf16.mxu0 %v4253
      %4294 = vmatpush1.bf16.msra.mxu0 %v4252
      %4295 = vmatprep.subr.bf16.mxu0 0
      %4296 = vmatpush1.bf16.msra.mxu0 0
      %4297 = vmatprep.subr.bf16.mxu0 0
      %4298 = vmatpush1.bf16.msra.mxu0 0
      %4299 = vmatprep.subr.bf16.mxu0 0
      %4300 = vmatpush1.bf16.msra.mxu0 0
      %4301 = vmatprep.subr.bf16.mxu0 0
      %4302 = vmatpush1.bf16.msra.mxu0 0
      %4303 = vmatprep.subr.bf16.mxu0 0
      %4304 = vmatpush1.bf16.msra.mxu0 0
      %4305 = vmatprep.subr.bf16.mxu0 0
      %4306 = vmatpush1.bf16.msra.mxu0 0
      %4307 = vmatprep.subr.bf16.mxu0 0
      %4308 = vmatpush1.bf16.msra.mxu0 0
      %4309 = vmatprep.subr.bf16.mxu0 0
      %4310 = vmatpush1.bf16.msra.mxu0 0
      %4311 = vmatprep.mubr.bf16.mxu0 0
      %4312 = vmatmul.mubr.bf16.gmra.mrb[0].mxu0 %v4118
      %v4313 = vpop.f32.mrb[0].mxu0
      %v4314 = vadd.f32 0.0, %v4313
      %v4315 = vpop.f32.mrb[0].mxu0
      %v4316 = vadd.f32 0.0, %v4315
      %v4317 = vpop.f32.mrb[0].mxu0
      %v4318 = vpop.f32.mrb[0].mxu0
      %4319 = vdwg.mxu0
      %4320 = vmatprep.subr.bf16.mxu0 0
      %4321 = vmatpush1.bf16.msra.mxu0 %v4233
      %4322 = vmatprep.subr.bf16.mxu0 0
      %4323 = vmatpush1.bf16.msra.mxu0 %v4236
      %4324 = vmatprep.subr.bf16.mxu0 0
      %4325 = vmatpush1.bf16.msra.mxu0 %v4239
      %4326 = vmatprep.subr.bf16.mxu0 0
      %4327 = vmatpush1.bf16.msra.mxu0 %v4242
      %4328 = vmatprep.subr.bf16.mxu0 0
      %4329 = vmatpush1.bf16.msra.mxu0 %v4245
      %4330 = vmatprep.subr.bf16.mxu0 0
      %4331 = vmatpush1.bf16.msra.mxu0 %v4248
      %4332 = vmatprep.subr.bf16.mxu0 0
      %4333 = vmatpush1.bf16.msra.mxu0 %v4251
      %4334 = vmatprep.subr.bf16.mxu0 0
      %4335 = vmatpush1.bf16.msra.mxu0 %v4254
      %4336 = vmatprep.subr.bf16.mxu0 0
      %4337 = vmatpush1.bf16.msra.mxu0 0
      %4338 = vmatprep.subr.bf16.mxu0 0
      %4339 = vmatpush1.bf16.msra.mxu0 0
      %4340 = vmatprep.subr.bf16.mxu0 0
      %4341 = vmatpush1.bf16.msra.mxu0 0
      %4342 = vmatprep.subr.bf16.mxu0 0
      %4343 = vmatpush1.bf16.msra.mxu0 0
      %4344 = vmatprep.subr.bf16.mxu0 0
      %4345 = vmatpush1.bf16.msra.mxu0 0
      %4346 = vmatprep.subr.bf16.mxu0 0
      %4347 = vmatpush1.bf16.msra.mxu0 0
      %4348 = vmatprep.subr.bf16.mxu0 0
      %4349 = vmatpush1.bf16.msra.mxu0 0
      %4350 = vmatprep.subr.bf16.mxu0 0
      %4351 = vmatpush1.bf16.msra.mxu0 0
      %4352 = vmatprep.mubr.bf16.mxu0 0
      %4353 = vmatmul.mubr.bf16.gmra.mrb[0].mxu0 %v4118
      %v4354 = vpop.f32.mrb[0].mxu0
      %v4355 = vadd.f32 0.0, %v4354
      %v4356 = vpop.f32.mrb[0].mxu0
      %v4357 = vpop.f32.mrb[0].mxu0
      %v4358 = vpop.f32.mrb[0].mxu0
      %4359 = vdwg.mxu0
      %v4360 = vld [vmem:[%s27] sm:$0xf]
      %s4361 = scalar_lea.vmem %s27, 4
      %v4362 = vld [vmem:[%s4361] sm:$0xf]
      %vm4363 = vcmask 64512
      %v4365 = vsel %vm4363, %v4362, 0
      %4367 = vmatprep.subr.mxu0 0.0
      %4368 = vmatpush1.msra.mxu0 %v4316
      %4369 = vmatprep.subr.mxu0 0.0
      %4370 = vmatpush1.msra.mxu0 0.0
      %4371 = vmatprep.subr.mxu0 0.0
      %4372 = vmatpush1.msra.mxu0 0.0
      %4373 = vmatprep.subr.mxu0 0.0
      %4374 = vmatpush1.msra.mxu0 0.0
      %4375 = vmatprep.subr.mxu0 0.0
      %4376 = vmatpush1.msra.mxu0 0.0
      %4377 = vmatprep.subr.mxu0 0.0
      %4378 = vmatpush1.msra.mxu0 0.0
      %4379 = vmatprep.subr.mxu0 0.0
      %4380 = vmatpush1.msra.mxu0 0.0
      %4381 = vmatprep.subr.mxu0 0.0
      %4382 = vmatpush1.msra.mxu0 0.0
      %4383 = vmatprep.subr.mxu0 0.0
      %4384 = vmatpush1.msra.mxu0 0.0
      %4385 = vmatprep.subr.mxu0 0.0
      %4386 = vmatpush1.msra.mxu0 0.0
      %4387 = vmatprep.subr.mxu0 0.0
      %4388 = vmatpush1.msra.mxu0 0.0
      %4389 = vmatprep.subr.mxu0 0.0
      %4390 = vmatpush1.msra.mxu0 0.0
      %4391 = vmatprep.subr.mxu0 0.0
      %4392 = vmatpush1.msra.mxu0 0.0
      %4393 = vmatprep.subr.mxu0 0.0
      %4394 = vmatpush1.msra.mxu0 0.0
      %4395 = vmatprep.subr.mxu0 0.0
      %4396 = vmatpush1.msra.mxu0 0.0
      %4397 = vmatprep.subr.mxu0 0.0
      %4398 = vmatpush1.msra.mxu0 0.0
      %4399 = vmatprep.subr.mxu0 0.0
      %4400 = vmatpush1.msra.mxu0 0.0
      %4401 = vmatprep.subr.mxu0 0.0
      %4402 = vmatpush1.msra.mxu0 0.0
      %4403 = vmatprep.subr.mxu0 0.0
      %4404 = vmatpush1.msra.mxu0 0.0
      %4405 = vmatprep.subr.mxu0 0.0
      %4406 = vmatpush1.msra.mxu0 0.0
      %4407 = vmatprep.subr.mxu0 0.0
      %4408 = vmatpush1.msra.mxu0 0.0
      %4409 = vmatprep.subr.mxu0 0.0
      %4410 = vmatpush1.msra.mxu0 0.0
      %4411 = vmatprep.subr.mxu0 0.0
      %4412 = vmatpush1.msra.mxu0 0.0
      %4413 = vmatprep.subr.mxu0 0.0
      %4414 = vmatpush1.msra.mxu0 0.0
      %4415 = vmatprep.subr.mxu0 0.0
      %4416 = vmatpush1.msra.mxu0 0.0
      %4417 = vmatprep.subr.mxu0 0.0
      %4418 = vmatpush1.msra.mxu0 0.0
      %4419 = vmatprep.subr.mxu0 0.0
      %4420 = vmatpush1.msra.mxu0 0.0
      %4421 = vmatprep.subr.mxu0 0.0
      %4422 = vmatpush1.msra.mxu0 0.0
      %4423 = vmatprep.subr.mxu0 0.0
      %4424 = vmatpush1.msra.mxu0 0.0
      %4425 = vmatprep.subr.mxu0 0.0
      %4426 = vmatpush1.msra.mxu0 0.0
      %4427 = vmatprep.subr.mxu0 0.0
      %4428 = vmatpush1.msra.mxu0 0.0
      %4429 = vmatprep.subr.mxu0 0.0
      %4430 = vmatpush1.msra.mxu0 0.0
      %4431 = vmatprep.mubr.f32.mxu0 0.0
      %4432 = vmatmul.mubr.f32.gmra.mrb[0].mxu0 %v4365
      %v4433 = vpop.f32.mrb[0].mxu0
      %v4434 = vadd.f32 0.0, %v4433
      %v4435 = vpop.f32.mrb[0].mxu0
      %4436 = vdwg.mxu0
      %v4438 = vsel %vm4363, %v4360, 0
      %4440 = vmatprep.subr.mxu0 0.0
      %4441 = vmatpush1.msra.mxu0 %v4314
      %4442 = vmatprep.subr.mxu0 0.0
      %4443 = vmatpush1.msra.mxu0 0.0
      %4444 = vmatprep.subr.mxu0 0.0
      %4445 = vmatpush1.msra.mxu0 0.0
      %4446 = vmatprep.subr.mxu0 0.0
      %4447 = vmatpush1.msra.mxu0 0.0
      %4448 = vmatprep.subr.mxu0 0.0
      %4449 = vmatpush1.msra.mxu0 0.0
      %4450 = vmatprep.subr.mxu0 0.0
      %4451 = vmatpush1.msra.mxu0 0.0
      %4452 = vmatprep.subr.mxu0 0.0
      %4453 = vmatpush1.msra.mxu0 0.0
      %4454 = vmatprep.subr.mxu0 0.0
      %4455 = vmatpush1.msra.mxu0 0.0
      %4456 = vmatprep.subr.mxu0 0.0
      %4457 = vmatpush1.msra.mxu0 0.0
      %4458 = vmatprep.subr.mxu0 0.0
      %4459 = vmatpush1.msra.mxu0 0.0
      %4460 = vmatprep.subr.mxu0 0.0
      %4461 = vmatpush1.msra.mxu0 0.0
      %4462 = vmatprep.subr.mxu0 0.0
      %4463 = vmatpush1.msra.mxu0 0.0
      %4464 = vmatprep.subr.mxu0 0.0
      %4465 = vmatpush1.msra.mxu0 0.0
      %4466 = vmatprep.subr.mxu0 0.0
      %4467 = vmatpush1.msra.mxu0 0.0
      %4468 = vmatprep.subr.mxu0 0.0
      %4469 = vmatpush1.msra.mxu0 0.0
      %4470 = vmatprep.subr.mxu0 0.0
      %4471 = vmatpush1.msra.mxu0 0.0
      %4472 = vmatprep.subr.mxu0 0.0
      %4473 = vmatpush1.msra.mxu0 0.0
      %4474 = vmatprep.subr.mxu0 0.0
      %4475 = vmatpush1.msra.mxu0 0.0
      %4476 = vmatprep.subr.mxu0 0.0
      %4477 = vmatpush1.msra.mxu0 0.0
      %4478 = vmatprep.subr.mxu0 0.0
      %4479 = vmatpush1.msra.mxu0 0.0
      %4480 = vmatprep.subr.mxu0 0.0
      %4481 = vmatpush1.msra.mxu0 0.0
      %4482 = vmatprep.subr.mxu0 0.0
      %4483 = vmatpush1.msra.mxu0 0.0
      %4484 = vmatprep.subr.mxu0 0.0
      %4485 = vmatpush1.msra.mxu0 0.0
      %4486 = vmatprep.subr.mxu0 0.0
      %4487 = vmatpush1.msra.mxu0 0.0
      %4488 = vmatprep.subr.mxu0 0.0
      %4489 = vmatpush1.msra.mxu0 0.0
      %4490 = vmatprep.subr.mxu0 0.0
      %4491 = vmatpush1.msra.mxu0 0.0
      %4492 = vmatprep.subr.mxu0 0.0
      %4493 = vmatpush1.msra.mxu0 0.0
      %4494 = vmatprep.subr.mxu0 0.0
      %4495 = vmatpush1.msra.mxu0 0.0
      %4496 = vmatprep.subr.mxu0 0.0
      %4497 = vmatpush1.msra.mxu0 0.0
      %4498 = vmatprep.subr.mxu0 0.0
      %4499 = vmatpush1.msra.mxu0 0.0
      %4500 = vmatprep.subr.mxu0 0.0
      %4501 = vmatpush1.msra.mxu0 0.0
      %4502 = vmatprep.subr.mxu0 0.0
      %4503 = vmatpush1.msra.mxu0 0.0
      %4504 = vmatprep.mubr.f32.mxu0 0.0
      %4505 = vmatmul.mubr.f32.gmra.mrb[0].mxu0 %v4438
      %v4506 = vpop.f32.mrb[0].mxu0
      %v4507 = vadd.f32 %v4434, %v4506
      %v4508 = vpop.f32.mrb[0].mxu0
      %4509 = vdwg.mxu0
      %s4510 = scalar_lea.vmem %s27, 8
      %v4511 = vld [vmem:[%s4510] sm:$0xf]
      %v4513 = vsel %vm4363, %v4511, 0
      %4515 = vmatprep.subr.mxu0 0.0
      %4516 = vmatpush1.msra.mxu0 %v4355
      %4517 = vmatprep.subr.mxu0 0.0
      %4518 = vmatpush1.msra.mxu0 0.0
      %4519 = vmatprep.subr.mxu0 0.0
      %4520 = vmatpush1.msra.mxu0 0.0
      %4521 = vmatprep.subr.mxu0 0.0
      %4522 = vmatpush1.msra.mxu0 0.0
      %4523 = vmatprep.subr.mxu0 0.0
      %4524 = vmatpush1.msra.mxu0 0.0
      %4525 = vmatprep.subr.mxu0 0.0
      %4526 = vmatpush1.msra.mxu0 0.0
      %4527 = vmatprep.subr.mxu0 0.0
      %4528 = vmatpush1.msra.mxu0 0.0
      %4529 = vmatprep.subr.mxu0 0.0
      %4530 = vmatpush1.msra.mxu0 0.0
      %4531 = vmatprep.subr.mxu0 0.0
      %4532 = vmatpush1.msra.mxu0 0.0
      %4533 = vmatprep.subr.mxu0 0.0
      %4534 = vmatpush1.msra.mxu0 0.0
      %4535 = vmatprep.subr.mxu0 0.0
      %4536 = vmatpush1.msra.mxu0 0.0
      %4537 = vmatprep.subr.mxu0 0.0
      %4538 = vmatpush1.msra.mxu0 0.0
      %4539 = vmatprep.subr.mxu0 0.0
      %4540 = vmatpush1.msra.mxu0 0.0
      %4541 = vmatprep.subr.mxu0 0.0
      %4542 = vmatpush1.msra.mxu0 0.0
      %4543 = vmatprep.subr.mxu0 0.0
      %4544 = vmatpush1.msra.mxu0 0.0
      %4545 = vmatprep.subr.mxu0 0.0
      %4546 = vmatpush1.msra.mxu0 0.0
      %4547 = vmatprep.subr.mxu0 0.0
      %4548 = vmatpush1.msra.mxu0 0.0
      %4549 = vmatprep.subr.mxu0 0.0
      %4550 = vmatpush1.msra.mxu0 0.0
      %4551 = vmatprep.subr.mxu0 0.0
      %4552 = vmatpush1.msra.mxu0 0.0
      %4553 = vmatprep.subr.mxu0 0.0
      %4554 = vmatpush1.msra.mxu0 0.0
      %4555 = vmatprep.subr.mxu0 0.0
      %4556 = vmatpush1.msra.mxu0 0.0
      %4557 = vmatprep.subr.mxu0 0.0
      %4558 = vmatpush1.msra.mxu0 0.0
      %4559 = vmatprep.subr.mxu0 0.0
      %4560 = vmatpush1.msra.mxu0 0.0
      %4561 = vmatprep.subr.mxu0 0.0
      %4562 = vmatpush1.msra.mxu0 0.0
      %4563 = vmatprep.subr.mxu0 0.0
      %4564 = vmatpush1.msra.mxu0 0.0
      %4565 = vmatprep.subr.mxu0 0.0
      %4566 = vmatpush1.msra.mxu0 0.0
      %4567 = vmatprep.subr.mxu0 0.0
      %4568 = vmatpush1.msra.mxu0 0.0
      %4569 = vmatprep.subr.mxu0 0.0
      %4570 = vmatpush1.msra.mxu0 0.0
      %4571 = vmatprep.subr.mxu0 0.0
      %4572 = vmatpush1.msra.mxu0 0.0
      %4573 = vmatprep.subr.mxu0 0.0
      %4574 = vmatpush1.msra.mxu0 0.0
      %4575 = vmatprep.subr.mxu0 0.0
      %4576 = vmatpush1.msra.mxu0 0.0
      %4577 = vmatprep.subr.mxu0 0.0
      %4578 = vmatpush1.msra.mxu0 0.0
      %4579 = vmatprep.mubr.f32.mxu0 0.0
      %4580 = vmatmul.mubr.f32.gmra.mrb[0].mxu0 %v4513
      %v4581 = vpop.f32.mrb[0].mxu0
      %v4582 = vadd.f32 0.0, %v4581
      %v4583 = vpop.f32.mrb[0].mxu0
      %4584 = vdwg.mxu0
      %v4585 = vadd.f32 %v4507, %v4582
      %v4586 = vld [vmem:[%s31] sm:$0x1]
      %v4588 = vlaneseq
      %v4589 = vshrl.u32 %v4588, 7
      %v4590 = vsub.s32 0, %v4589
      %v4591 = vrot.slane %v4586, %v4590
      %v4593 = vmul.f32 %v4585, %v4591
      %v4594 = vld [vmem:[%s33] sm:$0x1]
      %v4596 = vlaneseq
      %v4597 = vshrl.u32 %v4596, 7
      %v4598 = vsub.s32 0, %v4597
      %v4599 = vrot.slane %v4594, %v4598
      %v4601 = vadd.f32 %v4593, %v4599
      %v4602 = vxor.u32 %v4601, 2147483648
      %v4603 = vmul.f32 %v4602, 1.442695
      %v4604 = vpow.pop %v4603
      %v4605 = vadd.f32 %v4604, 1.0
      %v4606 = vrcp.pop %v4605
      %v4607 = vmul.f32 1.0, %v4606
      %v4608 = vmul.f32 %v4601, %v4607
      %v4609 = vpack.c.bf16 %v4608, %v4608
      %v4610 = vld [vmem:[%s37] sm:$0xff]
      %v4611 = vld [vmem:[%s37 + $0x8] sm:$0xff]
      %v4612 = vld [vmem:[%s37 + $0x10] sm:$0xff]
      %v4613 = vld [vmem:[%s37 + $0x18] sm:$0xff]
      %v4614 = vld [vmem:[%s37 + $0x20] sm:$0xff]
      %v4615 = vld [vmem:[%s37 + $0x28] sm:$0xff]
      %v4616 = vld [vmem:[%s37 + $0x30] sm:$0xff]
      %v4617 = vld [vmem:[%s37 + $0x38] sm:$0xff]
      %v4618 = vld [vmem:[%s37 + $0x40] sm:$0xff]
      %v4619 = vld [vmem:[%s37 + $0x48] sm:$0xff]
      %v4620 = vld [vmem:[%s37 + $0x50] sm:$0xff]
      %v4621 = vld [vmem:[%s37 + $0x58] sm:$0xff]
      %v4622 = vld [vmem:[%s37 + $0x60] sm:$0xff]
      %v4623 = vld [vmem:[%s37 + $0x68] sm:$0xff]
      %v4624 = vld [vmem:[%s37 + $0x70] sm:$0xff]
      %v4625 = vld [vmem:[%s37 + $0x78] sm:$0xff]
      %v4642 = vunpack.c.l.b16 %v4610
      %v4643 = vunpack.c.h.b16 %v4610
      %v4644 = vunpack.c.l.b16 %v4611
      %v4645 = vunpack.c.h.b16 %v4611
      %v4646 = vunpack.c.l.b16 %v4612
      %v4647 = vunpack.c.h.b16 %v4612
      %v4648 = vunpack.c.l.b16 %v4613
      %v4649 = vunpack.c.h.b16 %v4613
      %v4650 = vunpack.c.l.b16 %v4614
      %v4651 = vunpack.c.h.b16 %v4614
      %v4652 = vunpack.c.l.b16 %v4615
      %v4653 = vunpack.c.h.b16 %v4615
      %v4654 = vunpack.c.l.b16 %v4616
      %v4655 = vunpack.c.h.b16 %v4616
      %v4656 = vunpack.c.l.b16 %v4617
      %v4657 = vunpack.c.h.b16 %v4617
      %v4658 = vunpack.c.l.b16 %v4618
      %v4659 = vunpack.c.h.b16 %v4618
      %v4660 = vunpack.c.l.b16 %v4619
      %v4661 = vunpack.c.h.b16 %v4619
      %v4662 = vunpack.c.l.b16 %v4620
      %v4663 = vunpack.c.h.b16 %v4620
      %v4664 = vunpack.c.l.b16 %v4621
      %v4665 = vunpack.c.h.b16 %v4621
      %v4666 = vunpack.c.l.b16 %v4622
      %v4667 = vunpack.c.h.b16 %v4622
      %v4668 = vunpack.c.l.b16 %v4623
      %v4669 = vunpack.c.h.b16 %v4623
      %v4670 = vunpack.c.l.b16 %v4624
      %v4671 = vunpack.c.h.b16 %v4624
      %v4672 = vunpack.c.l.b16 %v4625
      %v4673 = vunpack.c.h.b16 %v4625
      %v4674 = vpack.c.b16 %v4644, %v4642
      %v4675 = vpack.c.b16 %v4645, %v4643
      %v4676 = vpack.c.b16 %v4648, %v4646
      %v4677 = vpack.c.b16 %v4649, %v4647
      %v4678 = vpack.c.b16 %v4652, %v4650
      %v4679 = vpack.c.b16 %v4653, %v4651
      %v4680 = vpack.c.b16 %v4656, %v4654
      %v4681 = vpack.c.b16 %v4657, %v4655
      %v4682 = vpack.c.b16 %v4660, %v4658
      %v4683 = vpack.c.b16 %v4661, %v4659
      %v4684 = vpack.c.b16 %v4664, %v4662
      %v4685 = vpack.c.b16 %v4665, %v4663
      %v4686 = vpack.c.b16 %v4668, %v4666
      %v4687 = vpack.c.b16 %v4669, %v4667
      %v4688 = vpack.c.b16 %v4672, %v4670
      %v4689 = vpack.c.b16 %v4673, %v4671
      %4706 = vmatprep.subr.bf16.mxu0 %v4675
      %4707 = vmatpush1.bf16.msra.mxu0 %v4674
      %4708 = vmatprep.subr.bf16.mxu0 %v4677
      %4709 = vmatpush1.bf16.msra.mxu0 %v4676
      %4710 = vmatprep.subr.bf16.mxu0 %v4679
      %4711 = vmatpush1.bf16.msra.mxu0 %v4678
      %4712 = vmatprep.subr.bf16.mxu0 %v4681
      %4713 = vmatpush1.bf16.msra.mxu0 %v4680
      %4714 = vmatprep.subr.bf16.mxu0 %v4683
      %4715 = vmatpush1.bf16.msra.mxu0 %v4682
      %4716 = vmatprep.subr.bf16.mxu0 %v4685
      %4717 = vmatpush1.bf16.msra.mxu0 %v4684
      %4718 = vmatprep.subr.bf16.mxu0 %v4687
      %4719 = vmatpush1.bf16.msra.mxu0 %v4686
      %4720 = vmatprep.subr.bf16.mxu0 %v4689
      %4721 = vmatpush1.bf16.msra.mxu0 %v4688
      %4722 = vmatprep.subr.bf16.mxu0 0
      %4723 = vmatpush1.bf16.msra.mxu0 0
      %4724 = vmatprep.subr.bf16.mxu0 0
      %4725 = vmatpush1.bf16.msra.mxu0 0
      %4726 = vmatprep.subr.bf16.mxu0 0
      %4727 = vmatpush1.bf16.msra.mxu0 0
      %4728 = vmatprep.subr.bf16.mxu0 0
      %4729 = vmatpush1.bf16.msra.mxu0 0
      %4730 = vmatprep.subr.bf16.mxu0 0
      %4731 = vmatpush1.bf16.msra.mxu0 0
      %4732 = vmatprep.subr.bf16.mxu0 0
      %4733 = vmatpush1.bf16.msra.mxu0 0
      %4734 = vmatprep.subr.bf16.mxu0 0
      %4735 = vmatpush1.bf16.msra.mxu0 0
      %4736 = vmatprep.subr.bf16.mxu0 0
      %4737 = vmatpush1.bf16.msra.mxu0 0
      %4738 = vmatprep.mubr.bf16.mxu0 0
      %4739 = vmatmul.mubr.bf16.gmra.mrb[0].mxu0 %v4609
      %v4740 = vpop.f32.mrb[0].mxu0
      %v4741 = vadd.f32 0.0, %v4740
      %v4742 = vpop.f32.mrb[0].mxu0
      %v4743 = vadd.f32 0.0, %v4742
      %v4744 = vpop.f32.mrb[0].mxu0
      %v4745 = vpop.f32.mrb[0].mxu0
      %4746 = vdwg.mxu0
      %v4747 = vld [vmem:[%s35] sm:$0x3]
      %s4748 = scalar_lea.vmem %s35, 2
      %v4749 = vld [vmem:[%s4748] sm:$0x3]
      %4751 = vrot.lane.b32.xlu0 %v4741, 64
      %v4752 = vpop.permute.xlu0 %4751
      %vm4753 = vcmask 31744
      %v4755 = vsel %vm4753, %v4749, 0
      %vm4757 = vcmask 1043456
      %v4758 = vsel %vm4757, %v4752, 0
      %4760 = vmatprep.subr.mxu0 0.0
      %4761 = vmatpush1.msra.mxu0 %v4758
      %4762 = vmatprep.subr.mxu0 0.0
      %4763 = vmatpush1.msra.mxu0 0.0
      %4764 = vmatprep.subr.mxu0 0.0
      %4765 = vmatpush1.msra.mxu0 0.0
      %4766 = vmatprep.subr.mxu0 0.0
      %4767 = vmatpush1.msra.mxu0 0.0
      %4768 = vmatprep.subr.mxu0 0.0
      %4769 = vmatpush1.msra.mxu0 0.0
      %4770 = vmatprep.subr.mxu0 0.0
      %4771 = vmatpush1.msra.mxu0 0.0
      %4772 = vmatprep.subr.mxu0 0.0
      %4773 = vmatpush1.msra.mxu0 0.0
      %4774 = vmatprep.subr.mxu0 0.0
      %4775 = vmatpush1.msra.mxu0 0.0
      %4776 = vmatprep.subr.mxu0 0.0
      %4777 = vmatpush1.msra.mxu0 0.0
      %4778 = vmatprep.subr.mxu0 0.0
      %4779 = vmatpush1.msra.mxu0 0.0
      %4780 = vmatprep.subr.mxu0 0.0
      %4781 = vmatpush1.msra.mxu0 0.0
      %4782 = vmatprep.subr.mxu0 0.0
      %4783 = vmatpush1.msra.mxu0 0.0
      %4784 = vmatprep.subr.mxu0 0.0
      %4785 = vmatpush1.msra.mxu0 0.0
      %4786 = vmatprep.subr.mxu0 0.0
      %4787 = vmatpush1.msra.mxu0 0.0
      %4788 = vmatprep.subr.mxu0 0.0
      %4789 = vmatpush1.msra.mxu0 0.0
      %4790 = vmatprep.subr.mxu0 0.0
      %4791 = vmatpush1.msra.mxu0 0.0
      %4792 = vmatprep.subr.mxu0 0.0
      %4793 = vmatpush1.msra.mxu0 0.0
      %4794 = vmatprep.subr.mxu0 0.0
      %4795 = vmatpush1.msra.mxu0 0.0
      %4796 = vmatprep.subr.mxu0 0.0
      %4797 = vmatpush1.msra.mxu0 0.0
      %4798 = vmatprep.subr.mxu0 0.0
      %4799 = vmatpush1.msra.mxu0 0.0
      %4800 = vmatprep.subr.mxu0 0.0
      %4801 = vmatpush1.msra.mxu0 0.0
      %4802 = vmatprep.subr.mxu0 0.0
      %4803 = vmatpush1.msra.mxu0 0.0
      %4804 = vmatprep.subr.mxu0 0.0
      %4805 = vmatpush1.msra.mxu0 0.0
      %4806 = vmatprep.subr.mxu0 0.0
      %4807 = vmatpush1.msra.mxu0 0.0
      %4808 = vmatprep.subr.mxu0 0.0
      %4809 = vmatpush1.msra.mxu0 0.0
      %4810 = vmatprep.subr.mxu0 0.0
      %4811 = vmatpush1.msra.mxu0 0.0
      %4812 = vmatprep.subr.mxu0 0.0
      %4813 = vmatpush1.msra.mxu0 0.0
      %4814 = vmatprep.subr.mxu0 0.0
      %4815 = vmatpush1.msra.mxu0 0.0
      %4816 = vmatprep.subr.mxu0 0.0
      %4817 = vmatpush1.msra.mxu0 0.0
      %4818 = vmatprep.subr.mxu0 0.0
      %4819 = vmatpush1.msra.mxu0 0.0
      %4820 = vmatprep.subr.mxu0 0.0
      %4821 = vmatpush1.msra.mxu0 0.0
      %4822 = vmatprep.subr.mxu0 0.0
      %4823 = vmatpush1.msra.mxu0 0.0
      %4824 = vmatprep.mubr.f32.mxu0 0.0
      %4825 = vmatmul.mubr.f32.gmra.mrb[0].mxu0 %v4755
      %v4826 = vpop.f32.mrb[0].mxu0
      %v4827 = vadd.f32 0.0, %v4826
      %v4828 = vpop.f32.mrb[0].mxu0
      %4829 = vdwg.mxu0
      %v4831 = vsel %vm4753, %v4747, 0
      %v4833 = vsel %vm4757, %v4741, 0
      %4835 = vmatprep.subr.mxu0 0.0
      %4836 = vmatpush1.msra.mxu0 %v4833
      %4837 = vmatprep.subr.mxu0 0.0
      %4838 = vmatpush1.msra.mxu0 0.0
      %4839 = vmatprep.subr.mxu0 0.0
      %4840 = vmatpush1.msra.mxu0 0.0
      %4841 = vmatprep.subr.mxu0 0.0
      %4842 = vmatpush1.msra.mxu0 0.0
      %4843 = vmatprep.subr.mxu0 0.0
      %4844 = vmatpush1.msra.mxu0 0.0
      %4845 = vmatprep.subr.mxu0 0.0
      %4846 = vmatpush1.msra.mxu0 0.0
      %4847 = vmatprep.subr.mxu0 0.0
      %4848 = vmatpush1.msra.mxu0 0.0
      %4849 = vmatprep.subr.mxu0 0.0
      %4850 = vmatpush1.msra.mxu0 0.0
      %4851 = vmatprep.subr.mxu0 0.0
      %4852 = vmatpush1.msra.mxu0 0.0
      %4853 = vmatprep.subr.mxu0 0.0
      %4854 = vmatpush1.msra.mxu0 0.0
      %4855 = vmatprep.subr.mxu0 0.0
      %4856 = vmatpush1.msra.mxu0 0.0
      %4857 = vmatprep.subr.mxu0 0.0
      %4858 = vmatpush1.msra.mxu0 0.0
      %4859 = vmatprep.subr.mxu0 0.0
      %4860 = vmatpush1.msra.mxu0 0.0
      %4861 = vmatprep.subr.mxu0 0.0
      %4862 = vmatpush1.msra.mxu0 0.0
      %4863 = vmatprep.subr.mxu0 0.0
      %4864 = vmatpush1.msra.mxu0 0.0
      %4865 = vmatprep.subr.mxu0 0.0
      %4866 = vmatpush1.msra.mxu0 0.0
      %4867 = vmatprep.subr.mxu0 0.0
      %4868 = vmatpush1.msra.mxu0 0.0
      %4869 = vmatprep.subr.mxu0 0.0
      %4870 = vmatpush1.msra.mxu0 0.0
      %4871 = vmatprep.subr.mxu0 0.0
      %4872 = vmatpush1.msra.mxu0 0.0
      %4873 = vmatprep.subr.mxu0 0.0
      %4874 = vmatpush1.msra.mxu0 0.0
      %4875 = vmatprep.subr.mxu0 0.0
      %4876 = vmatpush1.msra.mxu0 0.0
      %4877 = vmatprep.subr.mxu0 0.0
      %4878 = vmatpush1.msra.mxu0 0.0
      %4879 = vmatprep.subr.mxu0 0.0
      %4880 = vmatpush1.msra.mxu0 0.0
      %4881 = vmatprep.subr.mxu0 0.0
      %4882 = vmatpush1.msra.mxu0 0.0
      %4883 = vmatprep.subr.mxu0 0.0
      %4884 = vmatpush1.msra.mxu0 0.0
      %4885 = vmatprep.subr.mxu0 0.0
      %4886 = vmatpush1.msra.mxu0 0.0
      %4887 = vmatprep.subr.mxu0 0.0
      %4888 = vmatpush1.msra.mxu0 0.0
      %4889 = vmatprep.subr.mxu0 0.0
      %4890 = vmatpush1.msra.mxu0 0.0
      %4891 = vmatprep.subr.mxu0 0.0
      %4892 = vmatpush1.msra.mxu0 0.0
      %4893 = vmatprep.subr.mxu0 0.0
      %4894 = vmatpush1.msra.mxu0 0.0
      %4895 = vmatprep.subr.mxu0 0.0
      %4896 = vmatpush1.msra.mxu0 0.0
      %4897 = vmatprep.subr.mxu0 0.0
      %4898 = vmatpush1.msra.mxu0 0.0
      %4899 = vmatprep.mubr.f32.mxu0 0.0
      %4900 = vmatmul.mubr.f32.gmra.mrb[0].mxu0 %v4831
      %v4901 = vpop.f32.mrb[0].mxu0
      %v4902 = vadd.f32 %v4827, %v4901
      %v4903 = vpop.f32.mrb[0].mxu0
      %4904 = vdwg.mxu0
      %s4905 = scalar_lea.vmem %s35, 4
      %v4906 = vld [vmem:[%s4905] sm:$0x3]
      %v4908 = vsel %vm4753, %v4906, 0
      %v4911 = vsel %vm4757, %v4743, 0
      %4913 = vmatprep.subr.mxu0 0.0
      %4914 = vmatpush1.msra.mxu0 %v4911
      %4915 = vmatprep.subr.mxu0 0.0
      %4916 = vmatpush1.msra.mxu0 0.0
      %4917 = vmatprep.subr.mxu0 0.0
      %4918 = vmatpush1.msra.mxu0 0.0
      %4919 = vmatprep.subr.mxu0 0.0
      %4920 = vmatpush1.msra.mxu0 0.0
      %4921 = vmatprep.subr.mxu0 0.0
      %4922 = vmatpush1.msra.mxu0 0.0
      %4923 = vmatprep.subr.mxu0 0.0
      %4924 = vmatpush1.msra.mxu0 0.0
      %4925 = vmatprep.subr.mxu0 0.0
      %4926 = vmatpush1.msra.mxu0 0.0
      %4927 = vmatprep.subr.mxu0 0.0
      %4928 = vmatpush1.msra.mxu0 0.0
      %4929 = vmatprep.subr.mxu0 0.0
      %4930 = vmatpush1.msra.mxu0 0.0
      %4931 = vmatprep.subr.mxu0 0.0
      %4932 = vmatpush1.msra.mxu0 0.0
      %4933 = vmatprep.subr.mxu0 0.0
      %4934 = vmatpush1.msra.mxu0 0.0
      %4935 = vmatprep.subr.mxu0 0.0
      %4936 = vmatpush1.msra.mxu0 0.0
      %4937 = vmatprep.subr.mxu0 0.0
      %4938 = vmatpush1.msra.mxu0 0.0
      %4939 = vmatprep.subr.mxu0 0.0
      %4940 = vmatpush1.msra.mxu0 0.0
      %4941 = vmatprep.subr.mxu0 0.0
      %4942 = vmatpush1.msra.mxu0 0.0
      %4943 = vmatprep.subr.mxu0 0.0
      %4944 = vmatpush1.msra.mxu0 0.0
      %4945 = vmatprep.subr.mxu0 0.0
      %4946 = vmatpush1.msra.mxu0 0.0
      %4947 = vmatprep.subr.mxu0 0.0
      %4948 = vmatpush1.msra.mxu0 0.0
      %4949 = vmatprep.subr.mxu0 0.0
      %4950 = vmatpush1.msra.mxu0 0.0
      %4951 = vmatprep.subr.mxu0 0.0
      %4952 = vmatpush1.msra.mxu0 0.0
      %4953 = vmatprep.subr.mxu0 0.0
      %4954 = vmatpush1.msra.mxu0 0.0
      %4955 = vmatprep.subr.mxu0 0.0
      %4956 = vmatpush1.msra.mxu0 0.0
      %4957 = vmatprep.subr.mxu0 0.0
      %4958 = vmatpush1.msra.mxu0 0.0
      %4959 = vmatprep.subr.mxu0 0.0
      %4960 = vmatpush1.msra.mxu0 0.0
      %4961 = vmatprep.subr.mxu0 0.0
      %4962 = vmatpush1.msra.mxu0 0.0
      %4963 = vmatprep.subr.mxu0 0.0
      %4964 = vmatpush1.msra.mxu0 0.0
      %4965 = vmatprep.subr.mxu0 0.0
      %4966 = vmatpush1.msra.mxu0 0.0
      %4967 = vmatprep.subr.mxu0 0.0
      %4968 = vmatpush1.msra.mxu0 0.0
      %4969 = vmatprep.subr.mxu0 0.0
      %4970 = vmatpush1.msra.mxu0 0.0
      %4971 = vmatprep.subr.mxu0 0.0
      %4972 = vmatpush1.msra.mxu0 0.0
      %4973 = vmatprep.subr.mxu0 0.0
      %4974 = vmatpush1.msra.mxu0 0.0
      %4975 = vmatprep.subr.mxu0 0.0
      %4976 = vmatpush1.msra.mxu0 0.0
      %4977 = vmatprep.mubr.f32.mxu0 0.0
      %4978 = vmatmul.mubr.f32.gmra.mrb[0].mxu0 %v4908
      %v4979 = vpop.f32.mrb[0].mxu0
      %v4980 = vadd.f32 0.0, %v4979
      %v4981 = vpop.f32.mrb[0].mxu0
      %4982 = vdwg.mxu0
      %v4983 = vadd.f32 %v4902, %v4980
      %v4984 = vld [vmem:[%s39] sm:$0x1]
      %v4986 = vlaneseq
      %v4987 = vshrl.u32 %v4986, 7
      %v4988 = vsub.s32 0, %v4987
      %v4989 = vrot.slane %v4984, %v4988
      %v4991 = vmul.f32 %v4983, %v4989
      %v4992 = vld [vmem:[%s41] sm:$0x1]
      %v4994 = vlaneseq
      %v4995 = vshrl.u32 %v4994, 7
      %v4996 = vsub.s32 0, %v4995
      %v4997 = vrot.slane %v4992, %v4996
      %v4999 = vadd.f32 %v4991, %v4997
      %v5000 = vxor.u32 %v4999, 2147483648
      %v5001 = vmul.f32 %v5000, 1.442695
      %v5002 = vpow.pop %v5001
      %v5003 = vadd.f32 %v5002, 1.0
      %v5004 = vrcp.pop %v5003
      %v5005 = vmul.f32 1.0, %v5004
      %v5006 = vmul.f32 %v4999, %v5005
      %v5007 = vld [vmem:[%s43] sm:$0xff]
      %v5008 = vld [vmem:[%s43 + $0x8] sm:$0xff]
      %v5009 = vld [vmem:[%s43 + $0x10] sm:$0xff]
      %v5010 = vld [vmem:[%s43 + $0x18] sm:$0xff]
      %v5011 = vld [vmem:[%s43 + $0x20] sm:$0xff]
      %v5012 = vld [vmem:[%s43 + $0x28] sm:$0xff]
      %v5013 = vld [vmem:[%s43 + $0x30] sm:$0xff]
      %v5014 = vld [vmem:[%s43 + $0x38] sm:$0xff]
      %v5015 = vld [vmem:[%s43 + $0x40] sm:$0xff]
      %v5016 = vld [vmem:[%s43 + $0x48] sm:$0xff]
      %v5017 = vld [vmem:[%s43 + $0x50] sm:$0xff]
      %v5018 = vld [vmem:[%s43 + $0x58] sm:$0xff]
      %v5019 = vld [vmem:[%s43 + $0x60] sm:$0xff]
      %v5020 = vld [vmem:[%s43 + $0x68] sm:$0xff]
      %v5021 = vld [vmem:[%s43 + $0x70] sm:$0xff]
      %v5022 = vld [vmem:[%s43 + $0x78] sm:$0xff]
      %v5023 = vld [vmem:[%s45] sm:$0x3]
      %v5025 = vlaneseq
      %v5026 = vshrl.u32 %v5025, 7
      %v5027 = vsub.s32 0, %v5026
      %v5028 = vrot.slane %v5023, %v5027
      %v5029 = vlaneseq
      %v5030 = vshrl.u32 %v5029, 7
      %v5031 = vsub.s32 1, %v5030
      %v5032 = vrot.slane %v5023, %v5031
      %v5051 = vunpack.c.l.b16 %v5007
      %v5052 = vunpack.c.h.b16 %v5007
      %v5053 = vunpack.c.l.b16 %v5008
      %v5054 = vunpack.c.h.b16 %v5008
      %v5055 = vunpack.c.l.b16 %v5009
      %v5056 = vunpack.c.h.b16 %v5009
      %v5057 = vunpack.c.l.b16 %v5010
      %v5058 = vunpack.c.h.b16 %v5010
      %v5059 = vunpack.c.l.b16 %v5011
      %v5060 = vunpack.c.h.b16 %v5011
      %v5061 = vunpack.c.l.b16 %v5012
      %v5062 = vunpack.c.h.b16 %v5012
      %v5063 = vunpack.c.l.b16 %v5013
      %v5064 = vunpack.c.h.b16 %v5013
      %v5065 = vunpack.c.l.b16 %v5014
      %v5066 = vunpack.c.h.b16 %v5014
      %v5067 = vunpack.c.l.b16 %v5015
      %v5068 = vunpack.c.h.b16 %v5015
      %v5069 = vunpack.c.l.b16 %v5016
      %v5070 = vunpack.c.h.b16 %v5016
      %v5071 = vunpack.c.l.b16 %v5017
      %v5072 = vunpack.c.h.b16 %v5017
      %v5073 = vunpack.c.l.b16 %v5018
      %v5074 = vunpack.c.h.b16 %v5018
      %v5075 = vunpack.c.l.b16 %v5019
      %v5076 = vunpack.c.h.b16 %v5019
      %v5077 = vunpack.c.l.b16 %v5020
      %v5078 = vunpack.c.h.b16 %v5020
      %v5079 = vunpack.c.l.b16 %v5021
      %v5080 = vunpack.c.h.b16 %v5021
      %v5081 = vunpack.c.l.b16 %v5022
      %v5082 = vunpack.c.h.b16 %v5022
      %v5083 = vpack.c.b16 %v5053, %v5051
      %v5084 = vpack.c.b16 %v5054, %v5052
      %v5085 = vpack.c.b16 %v5057, %v5055
      %v5086 = vpack.c.b16 %v5058, %v5056
      %v5087 = vpack.c.b16 %v5061, %v5059
      %v5088 = vpack.c.b16 %v5062, %v5060
      %v5089 = vpack.c.b16 %v5065, %v5063
      %v5090 = vpack.c.b16 %v5066, %v5064
      %v5091 = vpack.c.b16 %v5069, %v5067
      %v5092 = vpack.c.b16 %v5070, %v5068
      %v5093 = vpack.c.b16 %v5073, %v5071
      %v5094 = vpack.c.b16 %v5074, %v5072
      %v5095 = vpack.c.b16 %v5077, %v5075
      %v5096 = vpack.c.b16 %v5078, %v5076
      %v5097 = vpack.c.b16 %v5081, %v5079
      %v5098 = vpack.c.b16 %v5082, %v5080
      %5115 = vmatprep.subr.bf16.mxu0 %v5084
      %5116 = vmatpush1.bf16.msra.mxu0 %v5083
      %5117 = vmatprep.subr.bf16.mxu0 %v5086
      %5118 = vmatpush1.bf16.msra.mxu0 %v5085
      %5119 = vmatprep.subr.bf16.mxu0 %v5088
      %5120 = vmatpush1.bf16.msra.mxu0 %v5087
      %5121 = vmatprep.subr.bf16.mxu0 %v5090
      %5122 = vmatpush1.bf16.msra.mxu0 %v5089
      %5123 = vmatprep.subr.bf16.mxu0 %v5092
      %5124 = vmatpush1.bf16.msra.mxu0 %v5091
      %5125 = vmatprep.subr.bf16.mxu0 %v5094
      %5126 = vmatpush1.bf16.msra.mxu0 %v5093
      %5127 = vmatprep.subr.bf16.mxu0 %v5096
      %5128 = vmatpush1.bf16.msra.mxu0 %v5095
      %5129 = vmatprep.subr.bf16.mxu0 %v5098
      %5130 = vmatpush1.bf16.msra.mxu0 %v5097
      %5131 = vmatprep.subr.bf16.mxu0 0
      %5132 = vmatpush1.bf16.msra.mxu0 0
      %5133 = vmatprep.subr.bf16.mxu0 0
      %5134 = vmatpush1.bf16.msra.mxu0 0
      %5135 = vmatprep.subr.bf16.mxu0 0
      %5136 = vmatpush1.bf16.msra.mxu0 0
      %5137 = vmatprep.subr.bf16.mxu0 0
      %5138 = vmatpush1.bf16.msra.mxu0 0
      %5139 = vmatprep.subr.bf16.mxu0 0
      %5140 = vmatpush1.bf16.msra.mxu0 0
      %5141 = vmatprep.subr.bf16.mxu0 0
      %5142 = vmatpush1.bf16.msra.mxu0 0
      %5143 = vmatprep.subr.bf16.mxu0 0
      %5144 = vmatpush1.bf16.msra.mxu0 0
      %5145 = vmatprep.subr.bf16.mxu0 0
      %5146 = vmatpush1.bf16.msra.mxu0 0
      %5147 = vmatprep.mubr.bf16.mxu0 0
      %5148 = vmatmul.mubr.bf16.gmra.mrb[0].mxu0 %v4118
      %v5149 = vpop.f32.mrb[0].mxu0
      %v5150 = vadd.f32 %v5028, %v5149
      %v5151 = vpop.f32.mrb[0].mxu0
      %v5152 = vadd.f32 %v5032, %v5151
      %v5153 = vpop.f32.mrb[0].mxu0
      %v5154 = vpop.f32.mrb[0].mxu0
      %5155 = vdwg.mxu0
      %5156 = vst [vmem:[%s1270] sm:$0xff] %v5150
      %5157 = vst [vmem:[%s1270 + $0x8] sm:$0xff] %v5152
      %v5158 = vxor.u32 %v5150, 2147483648
      %v5159 = vxor.u32 %v5152, 2147483648
      %v5160 = vmul.f32 %v5158, 1.442695
      %v5161 = vpow.pop %v5160
      %v5162 = vmul.f32 %v5159, 1.442695
      %v5163 = vpow.pop %v5162
      %v5164 = vadd.f32 %v5161, 1.0
      %v5165 = vadd.f32 %v5163, 1.0
      %v5166 = vrcp.pop %v5164
      %v5167 = vmul.f32 1.0, %v5166
      %v5168 = vrcp.pop %v5165
      %v5169 = vmul.f32 1.0, %v5168
      %v5170 = vlaneseq
      %v5171 = vshrl.u32 %v5170, 7
      %v5172 = vcvt.s32.f32 %v5171
      %v5173 = vld [vmem:[%s49] sm:$0x3]
      %v5175 = vlaneseq
      %v5176 = vshrl.u32 %v5175, 7
      %v5177 = vsub.s32 0, %v5176
      %v5178 = vrot.slane %v5173, %v5177
      %v5179 = vlaneseq
      %v5180 = vshrl.u32 %v5179, 7
      %v5181 = vsub.s32 1, %v5180
      %v5182 = vrot.slane %v5173, %v5181
      %v5185 = vld [vmem:[%s47] sm:$0x3]
      %v5187 = vlaneseq
      %v5188 = vshrl.u32 %v5187, 7
      %v5189 = vsub.s32 0, %v5188
      %v5190 = vrot.slane %v5185, %v5189
      %v5191 = vlaneseq
      %v5192 = vshrl.u32 %v5191, 7
      %v5193 = vsub.s32 1, %v5192
      %v5194 = vrot.slane %v5185, %v5193
      %v5197 = vld [vmem:[%s51] sm:$0x3]
      %v5199 = vlaneseq
      %v5200 = vshrl.u32 %v5199, 7
      %v5201 = vsub.s32 0, %v5200
      %v5202 = vrot.slane %v5197, %v5201
      %v5203 = vlaneseq
      %v5204 = vshrl.u32 %v5203, 7
      %v5205 = vsub.s32 1, %v5204
      %v5206 = vrot.slane %v5197, %v5205
      %vm5209 = vcmp.eq.f32.partialorder %v5178, 0.0
      %vm5210 = vcmp.eq.f32.partialorder %v5182, 0.0
      %v5211 = vsel %vm5209, %v5190, %v5172
      %v5212 = vsel %vm5210, %v5194, %v5172
      %v5213 = vmul.f32 %v5167, 2.0
      %v5214 = vmul.f32 %v5169, 2.0
      %v5215 = vsub.f32 %v5213, 0.5
      %v5216 = vsub.f32 %v5214, 0.5
      %v5217 = vadd.f32 %v5215, %v5211
      %v5218 = vadd.f32 %v5216, %v5212
      %v5219 = vmul.f32 %v5217, 8.0
      %v5220 = vmul.f32 %v5218, 8.0
      %v5221 = vmul.f32 %v5213, %v5213
      %v5222 = vmul.f32 %v5214, %v5214
      %v5223 = vmul.f32 %v5221, %v5202
      %v5224 = vmul.f32 %v5222, %v5206
      %vm5225 = vcmp.lt.f32.partialorder %v5178, 2.0
      %vm5226 = vcmp.lt.f32.partialorder %v5182, 2.0
      %vm5227 = vcmp.lt.f32.partialorder %v5178, 4.0
      %vm5228 = vcmp.lt.f32.partialorder %v5182, 4.0
      %v5229 = vsel %vm5227, %v5223, %v5167
      %v5230 = vsel %vm5228, %v5224, %v5169
      %v5231 = vsel %vm5225, %v5219, %v5229
      %v5232 = vsel %vm5226, %v5220, %v5230
      %5233 = vst [vmem:[%s1275] sm:$0xff] %v5231
      %5234 = vst [vmem:[%s1275 + $0x8] sm:$0xff] %v5232
      %v5235 = vld [vmem:[%s53] sm:$0xf]
      %v5236 = vld [vmem:[%s53 + $0x4] sm:$0xf]
      %v5237 = vld [vmem:[%s53 + $0x8] sm:$0xf]
      %v5238 = vld [vmem:[%s53 + $0xc] sm:$0xf]
      %v5239 = vld [vmem:[%s53 + $0x10] sm:$0xf]
      %v5240 = vld [vmem:[%s53 + $0x14] sm:$0xf]
      %v5241 = vld [vmem:[%s53 + $0x18] sm:$0xf]
      %v5242 = vld [vmem:[%s53 + $0x1c] sm:$0xf]
      %v5243 = vld [vmem:[%s53 + $0x20] sm:$0xf]
      %v5244 = vld [vmem:[%s53 + $0x24] sm:$0xf]
      %v5245 = vld [vmem:[%s53 + $0x28] sm:$0xf]
      %v5246 = vld [vmem:[%s53 + $0x2c] sm:$0xf]
      %v5247 = vld [vmem:[%s53 + $0x30] sm:$0xf]
      %v5248 = vld [vmem:[%s53 + $0x34] sm:$0xf]
      %v5249 = vld [vmem:[%s53 + $0x38] sm:$0xf]
      %v5250 = vld [vmem:[%s53 + $0x3c] sm:$0xf]
      %v5251 = vld [vmem:[%s55] sm:$0x1]
      %v5253 = vlaneseq
      %v5254 = vshrl.u32 %v5253, 7
      %v5255 = vsub.s32 0, %v5254
      %v5256 = vrot.slane %v5251, %v5255
      %v5274 = vunpack.c.l.b16 %v5235
      %v5275 = vunpack.c.l.b16 %v5236
      %v5276 = vunpack.c.l.b16 %v5237
      %v5277 = vunpack.c.l.b16 %v5238
      %v5278 = vunpack.c.l.b16 %v5239
      %v5279 = vunpack.c.l.b16 %v5240
      %v5280 = vunpack.c.l.b16 %v5241
      %v5281 = vunpack.c.l.b16 %v5242
      %v5282 = vunpack.c.l.b16 %v5243
      %v5283 = vunpack.c.l.b16 %v5244
      %v5284 = vunpack.c.l.b16 %v5245
      %v5285 = vunpack.c.l.b16 %v5246
      %v5286 = vunpack.c.l.b16 %v5247
      %v5287 = vunpack.c.l.b16 %v5248
      %v5288 = vunpack.c.l.b16 %v5249
      %v5289 = vunpack.c.l.b16 %v5250
      %v5290 = vpack.c.b16 %v5275, %v5274
      %v5291 = vpack.c.b16 %v5277, %v5276
      %v5292 = vpack.c.b16 %v5279, %v5278
      %v5293 = vpack.c.b16 %v5281, %v5280
      %v5294 = vpack.c.b16 %v5283, %v5282
      %v5295 = vpack.c.b16 %v5285, %v5284
      %v5296 = vpack.c.b16 %v5287, %v5286
      %v5297 = vpack.c.b16 %v5289, %v5288
      %5306 = vmatprep.subr.bf16.mxu0 0
      %5307 = vmatpush1.bf16.msra.mxu0 %v5290
      %5308 = vmatprep.subr.bf16.mxu0 0
      %5309 = vmatpush1.bf16.msra.mxu0 %v5291
      %5310 = vmatprep.subr.bf16.mxu0 0
      %5311 = vmatpush1.bf16.msra.mxu0 %v5292
      %5312 = vmatprep.subr.bf16.mxu0 0
      %5313 = vmatpush1.bf16.msra.mxu0 %v5293
      %5314 = vmatprep.subr.bf16.mxu0 0
      %5315 = vmatpush1.bf16.msra.mxu0 %v5294
      %5316 = vmatprep.subr.bf16.mxu0 0
      %5317 = vmatpush1.bf16.msra.mxu0 %v5295
      %5318 = vmatprep.subr.bf16.mxu0 0
      %5319 = vmatpush1.bf16.msra.mxu0 %v5296
      %5320 = vmatprep.subr.bf16.mxu0 0
      %5321 = vmatpush1.bf16.msra.mxu0 %v5297
      %5322 = vmatprep.subr.bf16.mxu0 0
      %5323 = vmatpush1.bf16.msra.mxu0 0
      %5324 = vmatprep.subr.bf16.mxu0 0
      %5325 = vmatpush1.bf16.msra.mxu0 0
      %5326 = vmatprep.subr.bf16.mxu0 0
      %5327 = vmatpush1.bf16.msra.mxu0 0
      %5328 = vmatprep.subr.bf16.mxu0 0
      %5329 = vmatpush1.bf16.msra.mxu0 0
      %5330 = vmatprep.subr.bf16.mxu0 0
      %5331 = vmatpush1.bf16.msra.mxu0 0
      %5332 = vmatprep.subr.bf16.mxu0 0
      %5333 = vmatpush1.bf16.msra.mxu0 0
      %5334 = vmatprep.subr.bf16.mxu0 0
      %5335 = vmatpush1.bf16.msra.mxu0 0
      %5336 = vmatprep.subr.bf16.mxu0 0
      %5337 = vmatpush1.bf16.msra.mxu0 0
      %5338 = vmatprep.mubr.bf16.mxu0 0
      %5339 = vmatmul.mubr.bf16.gmra.mrb[0].mxu0 %v4609
      %v5340 = vpop.f32.mrb[0].mxu0
      %v5341 = vadd.f32 %v5256, %v5340
      %v5342 = vpop.f32.mrb[0].mxu0
      %v5343 = vpop.f32.mrb[0].mxu0
      %v5344 = vpop.f32.mrb[0].mxu0
      %5345 = vdwg.mxu0
      %5346 = vst [vmem:[%s1279] sm:$0xf] %v5341
      %v5347 = vxor.u32 %v5341, 2147483648
      %v5348 = vmul.f32 %v5347, 1.442695
      %v5349 = vpow.pop %v5348
      %v5350 = vadd.f32 %v5349, 1.0
      %v5351 = vrcp.pop %v5350
      %v5352 = vmul.f32 1.0, %v5351
      %v5353 = vld [vmem:[%s59] sm:$0x1]
      %v5355 = vlaneseq
      %v5356 = vshrl.u32 %v5355, 7
      %v5357 = vsub.s32 0, %v5356
      %v5358 = vrot.slane %v5353, %v5357
      %v5360 = vld [vmem:[%s57] sm:$0x1]
      %v5362 = vlaneseq
      %v5363 = vshrl.u32 %v5362, 7
      %v5364 = vsub.s32 0, %v5363
      %v5365 = vrot.slane %v5360, %v5364
      %v5367 = vld [vmem:[%s61] sm:$0x1]
      %v5369 = vlaneseq
      %v5370 = vshrl.u32 %v5369, 7
      %v5371 = vsub.s32 0, %v5370
      %v5372 = vrot.slane %v5367, %v5371
      %vm5374 = vcmp.eq.f32.partialorder %v5358, 0.0
      %v5375 = vsel %vm5374, %v5365, %v5172
      %v5376 = vmul.f32 %v5352, 2.0
      %v5377 = vsub.f32 %v5376, 0.5
      %v5378 = vadd.f32 %v5377, %v5375
      %v5379 = vmul.f32 %v5378, 16.0
      %v5380 = vmul.f32 %v5376, %v5376
      %v5381 = vmul.f32 %v5380, %v5372
      %vm5382 = vcmp.lt.f32.partialorder %v5358, 2.0
      %vm5383 = vcmp.lt.f32.partialorder %v5358, 4.0
      %v5384 = vsel %vm5383, %v5381, %v5352
      %v5385 = vsel %vm5382, %v5379, %v5384
      %5386 = vst [vmem:[%s1283] sm:$0xf] %v5385
      %v5387 = vpack.c.bf16 %v5006, %v5006
      %v5388 = vld [vmem:[%s63] sm:$0xf]
      %v5389 = vld [vmem:[%s63 + $0x4] sm:$0xf]
      %v5390 = vld [vmem:[%s63 + $0x8] sm:$0xf]
      %v5391 = vld [vmem:[%s63 + $0xc] sm:$0xf]
      %v5392 = vld [vmem:[%s63 + $0x10] sm:$0xf]
      %v5393 = vld [vmem:[%s63 + $0x14] sm:$0xf]
      %v5394 = vld [vmem:[%s63 + $0x18] sm:$0xf]
      %v5395 = vld [vmem:[%s63 + $0x1c] sm:$0xf]
      %v5396 = vld [vmem:[%s65] sm:$0x1]
      %v5398 = vlaneseq
      %v5399 = vshrl.u32 %v5398, 7
      %v5400 = vsub.s32 0, %v5399
      %v5401 = vrot.slane %v5396, %v5400
      %v5411 = vunpack.c.l.b16 %v5388
      %v5412 = vunpack.c.l.b16 %v5389
      %v5413 = vunpack.c.l.b16 %v5390
      %v5414 = vunpack.c.l.b16 %v5391
      %v5415 = vunpack.c.l.b16 %v5392
      %v5416 = vunpack.c.l.b16 %v5393
      %v5417 = vunpack.c.l.b16 %v5394
      %v5418 = vunpack.c.l.b16 %v5395
      %v5419 = vpack.c.b16 %v5412, %v5411
      %v5420 = vpack.c.b16 %v5414, %v5413
      %v5421 = vpack.c.b16 %v5416, %v5415
      %v5422 = vpack.c.b16 %v5418, %v5417
      %v5428 = vsel %vm1749, %v5387, 0
      %5430 = vmatprep.subr.bf16.mxu0 0
      %5431 = vmatpush1.bf16.msra.mxu0 %v5419
      %5432 = vmatprep.subr.bf16.mxu0 0
      %5433 = vmatpush1.bf16.msra.mxu0 %v5420
      %5434 = vmatprep.subr.bf16.mxu0 0
      %5435 = vmatpush1.bf16.msra.mxu0 %v5421
      %5436 = vmatprep.subr.bf16.mxu0 0
      %5437 = vmatpush1.bf16.msra.mxu0 %v5422
      %5438 = vmatprep.subr.bf16.mxu0 0
      %5439 = vmatpush1.bf16.msra.mxu0 0
      %5440 = vmatprep.subr.bf16.mxu0 0
      %5441 = vmatpush1.bf16.msra.mxu0 0
      %5442 = vmatprep.subr.bf16.mxu0 0
      %5443 = vmatpush1.bf16.msra.mxu0 0
      %5444 = vmatprep.subr.bf16.mxu0 0
      %5445 = vmatpush1.bf16.msra.mxu0 0
      %5446 = vmatprep.subr.bf16.mxu0 0
      %5447 = vmatpush1.bf16.msra.mxu0 0
      %5448 = vmatprep.subr.bf16.mxu0 0
      %5449 = vmatpush1.bf16.msra.mxu0 0
      %5450 = vmatprep.subr.bf16.mxu0 0
      %5451 = vmatpush1.bf16.msra.mxu0 0
      %5452 = vmatprep.subr.bf16.mxu0 0
      %5453 = vmatpush1.bf16.msra.mxu0 0
      %5454 = vmatprep.subr.bf16.mxu0 0
      %5455 = vmatpush1.bf16.msra.mxu0 0
      %5456 = vmatprep.subr.bf16.mxu0 0
      %5457 = vmatpush1.bf16.msra.mxu0 0
      %5458 = vmatprep.subr.bf16.mxu0 0
      %5459 = vmatpush1.bf16.msra.mxu0 0
      %5460 = vmatprep.subr.bf16.mxu0 0
      %5461 = vmatpush1.bf16.msra.mxu0 0
      %5462 = vmatprep.mubr.bf16.mxu0 0
      %5463 = vmatmul.mubr.bf16.gmra.mrb[0].mxu0 %v5428
      %v5464 = vpop.f32.mrb[0].mxu0
      %v5465 = vadd.f32 %v5401, %v5464
      %v5466 = vpop.f32.mrb[0].mxu0
      %v5467 = vpop.f32.mrb[0].mxu0
      %v5468 = vpop.f32.mrb[0].mxu0
      %5469 = vdwg.mxu0
      %5470 = vst [vmem:[%s1287] sm:$0x3] %v5465
      %v5471 = vxor.u32 %v5465, 2147483648
      %v5472 = vmul.f32 %v5471, 1.442695
      %v5473 = vpow.pop %v5472
      %v5474 = vadd.f32 %v5473, 1.0
      %v5475 = vrcp.pop %v5474
      %v5476 = vmul.f32 1.0, %v5475
      %v5477 = vld [vmem:[%s69] sm:$0x1]
      %v5479 = vlaneseq
      %v5480 = vshrl.u32 %v5479, 7
      %v5481 = vsub.s32 0, %v5480
      %v5482 = vrot.slane %v5477, %v5481
      %v5484 = vld [vmem:[%s67] sm:$0x1]
      %v5486 = vlaneseq
      %v5487 = vshrl.u32 %v5486, 7
      %v5488 = vsub.s32 0, %v5487
      %v5489 = vrot.slane %v5484, %v5488
      %v5491 = vld [vmem:[%s71] sm:$0x1]
      %v5493 = vlaneseq
      %v5494 = vshrl.u32 %v5493, 7
      %v5495 = vsub.s32 0, %v5494
      %v5496 = vrot.slane %v5491, %v5495
      %vm5498 = vcmp.eq.f32.partialorder %v5482, 0.0
      %v5499 = vsel %vm5498, %v5489, %v5172
      %v5500 = vmul.f32 %v5476, 2.0
      %v5501 = vsub.f32 %v5500, 0.5
      %v5502 = vadd.f32 %v5501, %v5499
      %v5503 = vmul.f32 %v5502, 32.0
      %v5504 = vmul.f32 %v5500, %v5500
      %v5505 = vmul.f32 %v5504, %v5496
      %vm5506 = vcmp.lt.f32.partialorder %v5482, 2.0
      %vm5507 = vcmp.lt.f32.partialorder %v5482, 4.0
      %v5508 = vsel %vm5507, %v5505, %v5476
      %v5509 = vsel %vm5506, %v5503, %v5508
      %5510 = vst [vmem:[%s1291] sm:$0x3] %v5509
      %p5511 = scmp.lt.s32.totalorder %s95, 1
      %s5512 = scalar_select %p5511, %s95, 1
      %s5513 = smul.addr %s5512, 2
      %s5514 = smul.addr %s5513, 8
      %s5515 = scalar_lea.vmem %s73, %s5514
      %p5516 = scmp.lt.s32.totalorder %s95, 1
      %s5517 = scalar_select %p5516, %s95, 1
      %s5518 = smul.addr %s5517, 2
      %s5519 = smul.addr %s5518, 8
      %s5520 = scalar_lea.vmem %s75, %s5519
      %p5521 = scmp.lt.s32.totalorder %s95, 1
      %s5522 = scalar_select %p5521, %s95, 1
      %s5523 = smul.addr %s5522, 4
      %s5524 = scalar_lea.vmem %s77, %s5523
      %p5525 = scmp.lt.s32.totalorder %s95, 1
      %s5526 = scalar_select %p5525, %s95, 1
      %s5527 = smul.addr %s5526, 4
      %s5528 = scalar_lea.vmem %s79, %s5527
      %p5529 = scmp.lt.s32.totalorder %s95, 1
      %s5530 = scalar_select %p5529, %s95, 1
      %s5531 = smul.addr %s5530, 2
      %s5532 = scalar_lea.vmem %s81, %s5531
      %p5533 = scmp.lt.s32.totalorder %s95, 1
      %s5534 = scalar_select %p5533, %s95, 1
      %s5535 = smul.addr %s5534, 2
      %s5536 = scalar_lea.vmem %s83, %s5535
      // Predicated region
      $region165: #{_lambda_.1} parent=163 // pred_check
        %p5537 = pneg %p874
      $region166: #{_lambda_.1} parent=163 // pred_check_branch
        %5539 = sbr.rel (%p5537) target = $region168
      $region167: #{_lambda_.1} parent=163 // pred_region
        _
      $region168: #{_lambda_.1} parent=163 // pred_fallthru
        _
      // Predicated region
      $region169: #{_lambda_.1} parent=163 // pred_check
        %p5540 = pneg %p900
      $region170: #{_lambda_.1} parent=163 // pred_check_branch
        %5542 = sbr.rel (%p5540) target = $region172
      $region171: #{_lambda_.1} parent=163 // pred_region
        _
      $region172: #{_lambda_.1} parent=163 // pred_fallthru
        _
      // Predicated region
      $region173: #{_lambda_.1} parent=163 // pred_check
        %p5543 = pneg %p926
      $region174: #{_lambda_.1} parent=163 // pred_check_branch
        %5545 = sbr.rel (%p5543) target = $region176
      $region175: #{_lambda_.1} parent=163 // pred_region
        _
      $region176: #{_lambda_.1} parent=163 // pred_fallthru
        _
      // Predicated region
      $region177: #{_lambda_.1} parent=163 // pred_check
        %p5546 = pneg %p952
      $region178: #{_lambda_.1} parent=163 // pred_check_branch
        %5548 = sbr.rel (%p5546) target = $region180
      $region179: #{_lambda_.1} parent=163 // pred_region
        _
      $region180: #{_lambda_.1} parent=163 // pred_fallthru
        _
      // Predicated region
      $region181: #{_lambda_.1} parent=163 // pred_check
        %p5549 = pneg %p978
      $region182: #{_lambda_.1} parent=163 // pred_check_branch
        %5551 = sbr.rel (%p5549) target = $region184
      $region183: #{_lambda_.1} parent=163 // pred_region
        _
      $region184: #{_lambda_.1} parent=163 // pred_fallthru
        _
      // Predicated region
      $region185: #{_lambda_.1} parent=163 // pred_check
        %p5552 = pneg %p1004
      $region186: #{_lambda_.1} parent=163 // pred_check_branch
        %5554 = sbr.rel (%p5552) target = $region188
      $region187: #{_lambda_.1} parent=163 // pred_region
        _
      $region188: #{_lambda_.1} parent=163 // pred_fallthru
        _
    $region164: #{_lambda_.1} parent=5 // pred_fallthru
      _
    %p5555 = scmp.le.s32.totalorder 2, %s90
    // Predicated region
    $region189: #{_lambda_.1} parent=5 // pred_check
      %p5556 = pneg %p5555
    $region190: #{_lambda_.1} parent=5 // pred_check_branch
      %5558 = sbr.rel (%p5556) target = $region192
    $region191: #{_lambda_.1} parent=5 // pred_region
      %s5559 = ssub.s32 %s90, 2
      // Predicated region
      $region193: #{_lambda_.1} parent=191 // pred_check
        %p5560 = pneg %p880
      $region194: #{_lambda_.1} parent=191 // pred_check_branch
        %5562 = sbr.rel (%p5560) target = $region196
      $region195: #{_lambda_.1} parent=191 // pred_region
        %p5563 = scmp.lt.s32.totalorder %s96, 1
        %s5564 = scalar_select %p5563, %s96, 1
        %s5565 = smul.addr %s5564, 2
        %s5566 = smul.addr %s5565, 8
        %s5567 = scalar_lea.vmem %s73, %s5566
      $region196: #{_lambda_.1} parent=191 // pred_fallthru
        _
      // Predicated region
      $region197: #{_lambda_.1} parent=191 // pred_check
        %p5568 = pneg %p906
      $region198: #{_lambda_.1} parent=191 // pred_check_branch
        %5570 = sbr.rel (%p5568) target = $region200
      $region199: #{_lambda_.1} parent=191 // pred_region
        %p5571 = scmp.lt.s32.totalorder %s96, 1
        %s5572 = scalar_select %p5571, %s96, 1
        %s5573 = smul.addr %s5572, 2
        %s5574 = smul.addr %s5573, 8
        %s5575 = scalar_lea.vmem %s75, %s5574
      $region200: #{_lambda_.1} parent=191 // pred_fallthru
        _
      // Predicated region
      $region201: #{_lambda_.1} parent=191 // pred_check
        %p5576 = pneg %p932
      $region202: #{_lambda_.1} parent=191 // pred_check_branch
        %5578 = sbr.rel (%p5576) target = $region204
      $region203: #{_lambda_.1} parent=191 // pred_region
        %p5579 = scmp.lt.s32.totalorder %s96, 1
        %s5580 = scalar_select %p5579, %s96, 1
        %s5581 = smul.addr %s5580, 4
        %s5582 = scalar_lea.vmem %s77, %s5581
      $region204: #{_lambda_.1} parent=191 // pred_fallthru
        _
      // Predicated region
      $region205: #{_lambda_.1} parent=191 // pred_check
        %p5583 = pneg %p958
      $region206: #{_lambda_.1} parent=191 // pred_check_branch
        %5585 = sbr.rel (%p5583) target = $region208
      $region207: #{_lambda_.1} parent=191 // pred_region
        %p5586 = scmp.lt.s32.totalorder %s96, 1
        %s5587 = scalar_select %p5586, %s96, 1
        %s5588 = smul.addr %s5587, 4
        %s5589 = scalar_lea.vmem %s79, %s5588
      $region208: #{_lambda_.1} parent=191 // pred_fallthru
        _
      // Predicated region
      $region209: #{_lambda_.1} parent=191 // pred_check
        %p5590 = pneg %p984
      $region210: #{_lambda_.1} parent=191 // pred_check_branch
        %5592 = sbr.rel (%p5590) target = $region212
      $region211: #{_lambda_.1} parent=191 // pred_region
        %p5593 = scmp.lt.s32.totalorder %s96, 1
        %s5594 = scalar_select %p5593, %s96, 1
        %s5595 = smul.addr %s5594, 2
        %s5596 = scalar_lea.vmem %s81, %s5595
      $region212: #{_lambda_.1} parent=191 // pred_fallthru
        _
      // Predicated region
      $region213: #{_lambda_.1} parent=191 // pred_check
        %p5597 = pneg %p1010
      $region214: #{_lambda_.1} parent=191 // pred_check_branch
        %5599 = sbr.rel (%p5597) target = $region216
      $region215: #{_lambda_.1} parent=191 // pred_region
        %p5600 = scmp.lt.s32.totalorder %s96, 1
        %s5601 = scalar_select %p5600, %s96, 1
        %s5602 = smul.addr %s5601, 2
        %s5603 = scalar_lea.vmem %s83, %s5602
      $region216: #{_lambda_.1} parent=191 // pred_fallthru
        _
    $region192: #{_lambda_.1} parent=5 // pred_fallthru
      _
  $region6: #{_lambda_.1} parent=0 // loop_footer
    %s94 = sadd.s32 1, %s90
  $region7: #{_lambda_.1} parent=0 // loop_footer_branch
    %89 = sbr.rel target = $region3
  $region8: #{_lambda_.1} parent=0 // loop_exit
    _

</llo_original>
